<compile_context>
chip_gen: v7x
topology: tpu7x:2x2x1
jax: 0.10.0
libtpu: 0.0.40
codegen_flags: <defaults>
</compile_context>

<pallas_src>
import jax
import jax.numpy as jnp
import numpy as np
from jax.experimental import pallas as pl
from jax.experimental.pallas import tpu as pltpu


# ----------------------------------------------------------------------------
# Fused kernel: full bidirectional multi-layer LSTM + heads, single invocation.
# ----------------------------------------------------------------------------
def _make_fused_kernel(n_layers, T, B, D, H):
    def kernel(*refs):
        x_ref = refs[0]
        idx = 1
        lstm_refs = refs[idx: idx + 6 * n_layers]
        idx += 6 * n_layers
        wa_ref, ba_ref, w1_ref, b1_ref, w2_ref, b2_ref = refs[idx: idx + 6]
        idx += 6
        feat_ref, hint_ref, pred_ref = refs[idx: idx + 3]
        idx += 3
        hf_sc, hb_sc = refs[idx: idx + 2]

        def lstm_cell(gates_x_row, h, c, wh):
            # gates_x_row: (B, 4H) precomputed x@Wi + bias; PyTorch gate order i,f,g,o
            g = gates_x_row + jnp.dot(h, wh, preferred_element_type=jnp.float32)
            sg = jax.nn.sigmoid(g)                 # full 128-lane tile
            tg = jnp.tanh(g[:, 2 * H:3 * H])
            i = sg[:, 0:H]
            f = sg[:, H:2 * H]
            o = sg[:, 3 * H:4 * H]
            c_new = f * c + i * tg
            h_new = o * jnp.tanh(c_new)
            return h_new, c_new

        # layer-0 input: (T*B, D) slab
        acts = x_ref[...].reshape(T * B, D)

        h_f_last = None
        h_b_first = None
        for layer in range(n_layers):
            wi_f, wh_f, b_f, wi_b, wh_b, b_b = lstm_refs[6 * layer: 6 * layer + 6]

            # Hoisted input projection (bias folded in): one big matmul per direction.
            gx_f = (jnp.dot(acts, wi_f[...], preferred_element_type=jnp.float32)
                    + b_f[...])                    # (T*B, 4H)
            gx_b = (jnp.dot(acts, wi_b[...], preferred_element_type=jnp.float32)
                    + b_b[...])                    # (T*B, 4H)
            wh_f_v = wh_f[...]
            wh_b_v = wh_b[...]

            zeros = jnp.zeros((B, H), jnp.float32)
            h_f, c_f = zeros, zeros
            h_b, c_b = zeros, zeros
            last_layer = (layer == n_layers - 1)

            # Static, fully-unrolled time loop; fwd processes t=s, bwd t=T-1-s.
            for s in range(T):
                tb = T - 1 - s
                h_f, c_f = lstm_cell(gx_f[s * B:(s + 1) * B, :], h_f, c_f, wh_f_v)
                h_b, c_b = lstm_cell(gx_b[tb * B:(tb + 1) * B, :], h_b, c_b, wh_b_v)

                if not last_layer:
                    hf_sc[s] = h_f
                    hb_sc[tb] = h_b
                elif s == 0:
                    h_b_first = h_b      # bwd hidden at output position T-1

            if not last_layer:
                # next layer input: (T, B, 2H) -> (T*B, 2H)
                acts = jnp.concatenate([hf_sc[...], hb_sc[...]],
                                       axis=-1).reshape(T * B, 2 * H)
            else:
                h_f_last = h_f           # fwd hidden at output position T-1

        # features = encoder_outputs[:, -1] = concat(h_fwd[T-1], h_bwd[T-1])
        features = jnp.concatenate([h_f_last, h_b_first], axis=-1)   # (B, 2H)
        feat_ref[...] = features

        # adapter head
        hint_ref[...] = (jnp.dot(features, wa_ref[...],
                                 preferred_element_type=jnp.float32) + ba_ref[...])

        # regressor head: Linear -> ReLU -> (Dropout = identity) -> Linear
        hmid = jnp.maximum(
            jnp.dot(features, w1_ref[...], preferred_element_type=jnp.float32)
            + b1_ref[...], 0.0)
        pred_ref[...] = (jnp.dot(hmid, w2_ref[...],
                                 preferred_element_type=jnp.float32) + b2_ref[...])

    return kernel


# ----------------------------------------------------------------------------
# Forward pass (mirrors LSTM_RUL_Student_simple.forward, eval mode).
# ----------------------------------------------------------------------------
def forward(params, src):
    # src: (B, T, input_dim), batch_first — same as the PyTorch module.
    x = jnp.transpose(src, (1, 0, 2)).astype(jnp.float32)   # (T, B, D) time-major
    T, B, D = x.shape
    n_layers = len(params["lstm"])
    H = params["lstm"][0]["fwd"][1].shape[0]

    lstm_flat = []
    for layer_p in params["lstm"]:
        lstm_flat.extend(layer_p["fwd"])
        lstm_flat.extend(layer_p["bwd"])
    wa, ba = params["adapter"]
    w1, b1 = params["reg1"]
    w2, b2 = params["reg2"]

    vmem = pl.BlockSpec(memory_space=pltpu.MemorySpace.VMEM)
    n_in = 1 + 6 * n_layers + 6

    feat, hint, pred = pl.pallas_call(
        _make_fused_kernel(n_layers, T, B, D, H),
        out_shape=(jax.ShapeDtypeStruct((B, 2 * H), jnp.float32),
                   jax.ShapeDtypeStruct((B, 64), jnp.float32),
                   jax.ShapeDtypeStruct((B, 1), jnp.float32)),
        in_specs=[vmem] * n_in,
        out_specs=(vmem, vmem, vmem),
        scratch_shapes=[pltpu.VMEM((T, B, H), jnp.float32),
                        pltpu.VMEM((T, B, H), jnp.float32)],
    )(x, *lstm_flat, wa, ba, w1, b1, w2, b2)

    predictions = pred[:, 0]   # .squeeze() -> (B,)
    return predictions, feat, hint


# ----------------------------------------------------------------------------
# Parameter init (deterministic, PyTorch-like uniform(-1/sqrt(H), 1/sqrt(H))).
# Weights stored pre-transposed for x @ W layout; bias = b_ih + b_hh.
# ----------------------------------------------------------------------------
def init_params(key, input_dim, hidden_dim, n_layers):
    H = hidden_dim
    k = 1.0 / np.sqrt(H)

    def unif(key, shape):
        return jax.random.uniform(key, shape, jnp.float32, minval=-k, maxval=k)

    params = {"lstm": []}
    for layer in range(n_layers):
        d_in = input_dim if layer == 0 else 2 * H
        layer_p = {}
        for direction in ("fwd", "bwd"):
            key, k1, k2, k3, k4 = jax.random.split(key, 5)
            wi_t = unif(k1, (d_in, 4 * H))       # = W_ih.T
            wh_t = unif(k2, (H, 4 * H))          # = W_hh.T
            bias = unif(k3, (1, 4 * H)) + unif(k4, (1, 4 * H))  # b_ih + b_hh
            layer_p[direction] = (wi_t, wh_t, bias)
        params["lstm"].append(layer_p)

    key, k1, k2, k3, k4, k5, k6 = jax.random.split(key, 7)
    params["adapter"] = (unif(k1, (2 * H, 64)), unif(k2, (1, 64)))
    params["reg1"] = (unif(k3, (2 * H, H)), unif(k4, (1, H)))
    params["reg2"] = (unif(k5, (H, 1)), unif(k6, (1, 1)))
    return params


# ----------------------------------------------------------------------------
# Pure-JAX reference for validation.
# ----------------------------------------------------------------------------
def _lstm_layer_ref(x_tbd, wi_t, wh_t, bias):
    T, B, _ = x_tbd.shape
    H = wh_t.shape[0]

    def step(carry, x_t):
        h, c = carry
        gates = x_t @ wi_t + h @ wh_t + bias
        i = jax.nn.sigmoid(gates[:, 0 * H:1 * H])
        f = jax.nn.sigmoid(gates[:, 1 * H:2 * H])
        g = jnp.tanh(gates[:, 2 * H:3 * H])
        o = jax.nn.sigmoid(gates[:, 3 * H:4 * H])
        c = f * c + i * g
        h = o * jnp.tanh(c)
        return (h, c), h

    init = (jnp.zeros((B, H), jnp.float32), jnp.zeros((B, H), jnp.float32))
    _, ys = jax.lax.scan(step, init, x_tbd)
    return ys


def forward_ref(params, src):
    x = jnp.transpose(src, (1, 0, 2)).astype(jnp.float32)
    for layer_p in params["lstm"]:
        fwd = _lstm_layer_ref(x, *layer_p["fwd"])
        bwd = _lstm_layer_ref(x[::-1], *layer_p["bwd"])[::-1]
        x = jnp.concatenate([fwd, bwd], axis=-1)
    features = x[-1]
    wa_t, ba = params["adapter"]
    w1_t, b1 = params["reg1"]
    w2_t, b2 = params["reg2"]
    hint = features @ wa_t + ba
    h = jnp.maximum(features @ w1_t + b1, 0.0)
    pred = (h @ w2_t + b2)[:, 0]
    return pred, features, hint


if __name__ == "__main__":
    B, T = 2, 8
    input_dim, hidden_dim, n_layers = 16, 32, 2

    key = jax.random.PRNGKey(0)
    key, pkey, xkey = jax.random.split(key, 3)
    params = init_params(pkey, input_dim, hidden_dim, n_layers)
    src = jax.random.normal(xkey, (B, T, input_dim), dtype=jnp.float32)

    fwd_jit = jax.jit(forward)
    pred, feat, hint = jax.block_until_ready(fwd_jit(params, src))

    pred_r, feat_r, hint_r = forward_ref(params, src)
    np.testing.assert_allclose(np.asarray(feat), np.asarray(feat_r), atol=3e-4, rtol=3e-4)
    np.testing.assert_allclose(np.asarray(hint), np.asarray(hint_r), atol=3e-4, rtol=3e-4)
    np.testing.assert_allclose(np.asarray(pred), np.asarray(pred_r), atol=3e-4, rtol=3e-4)

    assert pred.shape == (B,) and feat.shape == (B, 2 * hidden_dim) and hint.shape == (B, 64)
    # TODO(synk): on v7x, fwd/bwd recurrences could be split across the 2 TensorCores
    # via pl.core_map; skipped here since dispatch overhead dominates at this size.
    print("KERNEL_OK")
</pallas_src>

<mosaic_0001>
module attributes {stable_mosaic.version = 11 : i64} {
  func.func @kernel(%arg0: memref<8x2x16xf32, #tpu.memory_space<vmem>>, %arg1: memref<16x128xf32, #tpu.memory_space<vmem>>, %arg2: memref<32x128xf32, #tpu.memory_space<vmem>>, %arg3: memref<1x128xf32, #tpu.memory_space<vmem>>, %arg4: memref<16x128xf32, #tpu.memory_space<vmem>>, %arg5: memref<32x128xf32, #tpu.memory_space<vmem>>, %arg6: memref<1x128xf32, #tpu.memory_space<vmem>>, %arg7: memref<64x128xf32, #tpu.memory_space<vmem>>, %arg8: memref<32x128xf32, #tpu.memory_space<vmem>>, %arg9: memref<1x128xf32, #tpu.memory_space<vmem>>, %arg10: memref<64x128xf32, #tpu.memory_space<vmem>>, %arg11: memref<32x128xf32, #tpu.memory_space<vmem>>, %arg12: memref<1x128xf32, #tpu.memory_space<vmem>>, %arg13: memref<64x64xf32, #tpu.memory_space<vmem>>, %arg14: memref<1x64xf32, #tpu.memory_space<vmem>>, %arg15: memref<64x32xf32, #tpu.memory_space<vmem>>, %arg16: memref<1x32xf32, #tpu.memory_space<vmem>>, %arg17: memref<32x1xf32, #tpu.memory_space<vmem>>, %arg18: memref<1x1xf32, #tpu.memory_space<vmem>>, %arg19: memref<2x64xf32, #tpu.memory_space<vmem>>, %arg20: memref<2x64xf32, #tpu.memory_space<vmem>>, %arg21: memref<2x1xf32, #tpu.memory_space<vmem>>, %arg22: memref<8x2x32xf32, #tpu.memory_space<vmem>>, %arg23: memref<8x2x32xf32, #tpu.memory_space<vmem>>) attributes {dimension_semantics = [], scalar_prefetch = 0 : i64, scratch_operands = 2 : i64, tpu.core_type = #tpu.core_type<tc>} {
    %c0 = arith.constant 0 : index
    %c0_0 = arith.constant 0 : index
    %c0_1 = arith.constant 0 : index
    %0 = vector.load %arg0[%c0, %c0_0, %c0_1] : memref<8x2x16xf32, #tpu.memory_space<vmem>>, vector<8x2x16xf32>
    %1 = vector.shape_cast %0 : vector<8x2x16xf32> to vector<16x16xf32>
    %c0_2 = arith.constant 0 : index
    %c0_3 = arith.constant 0 : index
    %2 = vector.load %arg1[%c0_2, %c0_3] : memref<16x128xf32, #tpu.memory_space<vmem>>, vector<16x128xf32>
    %cst = arith.constant dense<0.000000e+00> : vector<16x128xf32>
    %3 = tpu.matmul %1, %2, %cst {dimension_numbers = #tpu.dot_dimension_numbers<[1], [0], [0], [1], [0, 0, 1, 1], [], []>} : vector<16x16xf32>, vector<16x128xf32>, vector<16x128xf32> -> vector<16x128xf32>
    %c0_4 = arith.constant 0 : index
    %c0_5 = arith.constant 0 : index
    %4 = vector.load %arg3[%c0_4, %c0_5] : memref<1x128xf32, #tpu.memory_space<vmem>>, vector<1x128xf32>
    %5 = vector.broadcast %4 : vector<1x128xf32> to vector<16x128xf32>
    %6 = arith.addf %3, %5 : vector<16x128xf32>
    %c0_6 = arith.constant 0 : index
    %c0_7 = arith.constant 0 : index
    %7 = vector.load %arg4[%c0_6, %c0_7] : memref<16x128xf32, #tpu.memory_space<vmem>>, vector<16x128xf32>
    %cst_8 = arith.constant dense<0.000000e+00> : vector<16x128xf32>
    %8 = tpu.matmul %1, %7, %cst_8 {dimension_numbers = #tpu.dot_dimension_numbers<[1], [0], [0], [1], [0, 0, 1, 1], [], []>} : vector<16x16xf32>, vector<16x128xf32>, vector<16x128xf32> -> vector<16x128xf32>
    %c0_9 = arith.constant 0 : index
    %c0_10 = arith.constant 0 : index
    %9 = vector.load %arg6[%c0_9, %c0_10] : memref<1x128xf32, #tpu.memory_space<vmem>>, vector<1x128xf32>
    %10 = vector.broadcast %9 : vector<1x128xf32> to vector<16x128xf32>
    %11 = arith.addf %8, %10 : vector<16x128xf32>
    %c0_11 = arith.constant 0 : index
    %c0_12 = arith.constant 0 : index
    %12 = vector.load %arg2[%c0_11, %c0_12] : memref<32x128xf32, #tpu.memory_space<vmem>>, vector<32x128xf32>
    %c0_13 = arith.constant 0 : index
    %c0_14 = arith.constant 0 : index
    %13 = vector.load %arg5[%c0_13, %c0_14] : memref<32x128xf32, #tpu.memory_space<vmem>>, vector<32x128xf32>
    %cst_15 = arith.constant 0.000000e+00 : f32
    %14 = vector.broadcast %cst_15 : f32 to vector<2x32xf32>
    %15 = vector.extract_strided_slice %6 {offsets = [0, 0], sizes = [2, 128], strides = [1, 1]} : vector<16x128xf32> to vector<2x128xf32>
    %cst_16 = arith.constant dense<0.000000e+00> : vector<2x128xf32>
    %16 = tpu.matmul %14, %12, %cst_16 {dimension_numbers = #tpu.dot_dimension_numbers<[1], [0], [0], [1], [0, 0, 1, 1], [], []>} : vector<2x32xf32>, vector<32x128xf32>, vector<2x128xf32> -> vector<2x128xf32>
    %17 = arith.addf %15, %16 : vector<2x128xf32>
    %18 = arith.negf %17 : vector<2x128xf32>
    %19 = math.exp %18 : vector<2x128xf32>
    %cst_17 = arith.constant 1.000000e+00 : f32
    %20 = vector.broadcast %cst_17 : f32 to vector<2x128xf32>
    %21 = arith.addf %20, %19 : vector<2x128xf32>
    %22 = arith.divf %20, %21 : vector<2x128xf32>
    %23 = vector.extract_strided_slice %17 {offsets = [0, 64], sizes = [2, 32], strides = [1, 1]} : vector<2x128xf32> to vector<2x32xf32>
    %24 = math.tanh %23 : vector<2x32xf32>
    %25 = vector.extract_strided_slice %22 {offsets = [0, 0], sizes = [2, 32], strides = [1, 1]} : vector<2x128xf32> to vector<2x32xf32>
    %26 = vector.extract_strided_slice %22 {offsets = [0, 32], sizes = [2, 32], strides = [1, 1]} : vector<2x128xf32> to vector<2x32xf32>
    %27 = vector.extract_strided_slice %22 {offsets = [0, 96], sizes = [2, 32], strides = [1, 1]} : vector<2x128xf32> to vector<2x32xf32>
    %28 = arith.mulf %26, %14 : vector<2x32xf32>
    %29 = arith.mulf %25, %24 : vector<2x32xf32>
    %30 = arith.addf %28, %29 : vector<2x32xf32>
    %31 = math.tanh %30 : vector<2x32xf32>
    %32 = arith.mulf %27, %31 : vector<2x32xf32>
    %33 = vector.extract_strided_slice %11 {offsets = [14, 0], sizes = [2, 128], strides = [1, 1]} : vector<16x128xf32> to vector<2x128xf32>
    %cst_18 = arith.constant dense<0.000000e+00> : vector<2x128xf32>
    %34 = tpu.matmul %14, %13, %cst_18 {dimension_numbers = #tpu.dot_dimension_numbers<[1], [0], [0], [1], [0, 0, 1, 1], [], []>} : vector<2x32xf32>, vector<32x128xf32>, vector<2x128xf32> -> vector<2x128xf32>
    %35 = arith.addf %33, %34 : vector<2x128xf32>
    %36 = arith.negf %35 : vector<2x128xf32>
    %37 = math.exp %36 : vector<2x128xf32>
    %cst_19 = arith.constant 1.000000e+00 : f32
    %38 = vector.broadcast %cst_19 : f32 to vector<2x128xf32>
    %39 = arith.addf %38, %37 : vector<2x128xf32>
    %40 = arith.divf %38, %39 : vector<2x128xf32>
    %41 = vector.extract_strided_slice %35 {offsets = [0, 64], sizes = [2, 32], strides = [1, 1]} : vector<2x128xf32> to vector<2x32xf32>
    %42 = math.tanh %41 : vector<2x32xf32>
    %43 = vector.extract_strided_slice %40 {offsets = [0, 0], sizes = [2, 32], strides = [1, 1]} : vector<2x128xf32> to vector<2x32xf32>
    %44 = vector.extract_strided_slice %40 {offsets = [0, 32], sizes = [2, 32], strides = [1, 1]} : vector<2x128xf32> to vector<2x32xf32>
    %45 = vector.extract_strided_slice %40 {offsets = [0, 96], sizes = [2, 32], strides = [1, 1]} : vector<2x128xf32> to vector<2x32xf32>
    %46 = arith.mulf %44, %14 : vector<2x32xf32>
    %47 = arith.mulf %43, %42 : vector<2x32xf32>
    %48 = arith.addf %46, %47 : vector<2x32xf32>
    %49 = math.tanh %48 : vector<2x32xf32>
    %50 = arith.mulf %45, %49 : vector<2x32xf32>
    %c0_20 = arith.constant 0 : index
    %c0_21 = arith.constant 0 : index
    %c0_22 = arith.constant 0 : index
    %51 = vector.load %arg22[%c0_20, %c0_21, %c0_22] : memref<8x2x32xf32, #tpu.memory_space<vmem>>, vector<1x2x32xf32>
    %52 = vector.shape_cast %51 : vector<1x2x32xf32> to vector<2x32xf32>
    %53 = vector.shape_cast %32 : vector<2x32xf32> to vector<1x2x32xf32>
    tpu.vector_store %arg22[%c0_20, %c0_21, %c0_22], %53 {strides = array<i32>} : memref<8x2x32xf32, #tpu.memory_space<vmem>>, vector<1x2x32xf32>,
    %c7 = arith.constant 7 : index
    %c0_23 = arith.constant 0 : index
    %c0_24 = arith.constant 0 : index
    %54 = vector.load %arg23[%c7, %c0_23, %c0_24] : memref<8x2x32xf32, #tpu.memory_space<vmem>>, vector<1x2x32xf32>
    %55 = vector.shape_cast %54 : vector<1x2x32xf32> to vector<2x32xf32>
    %56 = vector.shape_cast %50 : vector<2x32xf32> to vector<1x2x32xf32>
    tpu.vector_store %arg23[%c7, %c0_23, %c0_24], %56 {strides = array<i32>} : memref<8x2x32xf32, #tpu.memory_space<vmem>>, vector<1x2x32xf32>,
    %57 = vector.extract_strided_slice %6 {offsets = [2, 0], sizes = [2, 128], strides = [1, 1]} : vector<16x128xf32> to vector<2x128xf32>
    %cst_25 = arith.constant dense<0.000000e+00> : vector<2x128xf32>
    %58 = tpu.matmul %32, %12, %cst_25 {dimension_numbers = #tpu.dot_dimension_numbers<[1], [0], [0], [1], [0, 0, 1, 1], [], []>} : vector<2x32xf32>, vector<32x128xf32>, vector<2x128xf32> -> vector<2x128xf32>
    %59 = arith.addf %57, %58 : vector<2x128xf32>
    %60 = arith.negf %59 : vector<2x128xf32>
    %61 = math.exp %60 : vector<2x128xf32>
    %cst_26 = arith.constant 1.000000e+00 : f32
    %62 = vector.broadcast %cst_26 : f32 to vector<2x128xf32>
    %63 = arith.addf %62, %61 : vector<2x128xf32>
    %64 = arith.divf %62, %63 : vector<2x128xf32>
    %65 = vector.extract_strided_slice %59 {offsets = [0, 64], sizes = [2, 32], strides = [1, 1]} : vector<2x128xf32> to vector<2x32xf32>
    %66 = math.tanh %65 : vector<2x32xf32>
    %67 = vector.extract_strided_slice %64 {offsets = [0, 0], sizes = [2, 32], strides = [1, 1]} : vector<2x128xf32> to vector<2x32xf32>
    %68 = vector.extract_strided_slice %64 {offsets = [0, 32], sizes = [2, 32], strides = [1, 1]} : vector<2x128xf32> to vector<2x32xf32>
    %69 = vector.extract_strided_slice %64 {offsets = [0, 96], sizes = [2, 32], strides = [1, 1]} : vector<2x128xf32> to vector<2x32xf32>
    %70 = arith.mulf %68, %30 : vector<2x32xf32>
    %71 = arith.mulf %67, %66 : vector<2x32xf32>
    %72 = arith.addf %70, %71 : vector<2x32xf32>
    %73 = math.tanh %72 : vector<2x32xf32>
    %74 = arith.mulf %69, %73 : vector<2x32xf32>
    %75 = vector.extract_strided_slice %11 {offsets = [12, 0], sizes = [2, 128], strides = [1, 1]} : vector<16x128xf32> to vector<2x128xf32>
    %cst_27 = arith.constant dense<0.000000e+00> : vector<2x128xf32>
    %76 = tpu.matmul %50, %13, %cst_27 {dimension_numbers = #tpu.dot_dimension_numbers<[1], [0], [0], [1], [0, 0, 1, 1], [], []>} : vector<2x32xf32>, vector<32x128xf32>, vector<2x128xf32> -> vector<2x128xf32>
    %77 = arith.addf %75, %76 : vector<2x128xf32>
    %78 = arith.negf %77 : vector<2x128xf32>
    %79 = math.exp %78 : vector<2x128xf32>
    %cst_28 = arith.constant 1.000000e+00 : f32
    %80 = vector.broadcast %cst_28 : f32 to vector<2x128xf32>
    %81 = arith.addf %80, %79 : vector<2x128xf32>
    %82 = arith.divf %80, %81 : vector<2x128xf32>
    %83 = vector.extract_strided_slice %77 {offsets = [0, 64], sizes = [2, 32], strides = [1, 1]} : vector<2x128xf32> to vector<2x32xf32>
    %84 = math.tanh %83 : vector<2x32xf32>
    %85 = vector.extract_strided_slice %82 {offsets = [0, 0], sizes = [2, 32], strides = [1, 1]} : vector<2x128xf32> to vector<2x32xf32>
    %86 = vector.extract_strided_slice %82 {offsets = [0, 32], sizes = [2, 32], strides = [1, 1]} : vector<2x128xf32> to vector<2x32xf32>
    %87 = vector.extract_strided_slice %82 {offsets = [0, 96], sizes = [2, 32], strides = [1, 1]} : vector<2x128xf32> to vector<2x32xf32>
    %88 = arith.mulf %86, %48 : vector<2x32xf32>
    %89 = arith.mulf %85, %84 : vector<2x32xf32>
    %90 = arith.addf %88, %89 : vector<2x32xf32>
    %91 = math.tanh %90 : vector<2x32xf32>
    %92 = arith.mulf %87, %91 : vector<2x32xf32>
    %c1 = arith.constant 1 : index
    %c0_29 = arith.constant 0 : index
    %c0_30 = arith.constant 0 : index
    %93 = vector.load %arg22[%c1, %c0_29, %c0_30] : memref<8x2x32xf32, #tpu.memory_space<vmem>>, vector<1x2x32xf32>
    %94 = vector.shape_cast %93 : vector<1x2x32xf32> to vector<2x32xf32>
    %95 = vector.shape_cast %74 : vector<2x32xf32> to vector<1x2x32xf32>
    tpu.vector_store %arg22[%c1, %c0_29, %c0_30], %95 {strides = array<i32>} : memref<8x2x32xf32, #tpu.memory_space<vmem>>, vector<1x2x32xf32>,
    %c6 = arith.constant 6 : index
    %c0_31 = arith.constant 0 : index
    %c0_32 = arith.constant 0 : index
    %96 = vector.load %arg23[%c6, %c0_31, %c0_32] : memref<8x2x32xf32, #tpu.memory_space<vmem>>, vector<1x2x32xf32>
    %97 = vector.shape_cast %96 : vector<1x2x32xf32> to vector<2x32xf32>
    %98 = vector.shape_cast %92 : vector<2x32xf32> to vector<1x2x32xf32>
    tpu.vector_store %arg23[%c6, %c0_31, %c0_32], %98 {strides = array<i32>} : memref<8x2x32xf32, #tpu.memory_space<vmem>>, vector<1x2x32xf32>,
    %99 = vector.extract_strided_slice %6 {offsets = [4, 0], sizes = [2, 128], strides = [1, 1]} : vector<16x128xf32> to vector<2x128xf32>
    %cst_33 = arith.constant dense<0.000000e+00> : vector<2x128xf32>
    %100 = tpu.matmul %74, %12, %cst_33 {dimension_numbers = #tpu.dot_dimension_numbers<[1], [0], [0], [1], [0, 0, 1, 1], [], []>} : vector<2x32xf32>, vector<32x128xf32>, vector<2x128xf32> -> vector<2x128xf32>
    %101 = arith.addf %99, %100 : vector<2x128xf32>
    %102 = arith.negf %101 : vector<2x128xf32>
    %103 = math.exp %102 : vector<2x128xf32>
    %cst_34 = arith.constant 1.000000e+00 : f32
    %104 = vector.broadcast %cst_34 : f32 to vector<2x128xf32>
    %105 = arith.addf %104, %103 : vector<2x128xf32>
    %106 = arith.divf %104, %105 : vector<2x128xf32>
    %107 = vector.extract_strided_slice %101 {offsets = [0, 64], sizes = [2, 32], strides = [1, 1]} : vector<2x128xf32> to vector<2x32xf32>
    %108 = math.tanh %107 : vector<2x32xf32>
    %109 = vector.extract_strided_slice %106 {offsets = [0, 0], sizes = [2, 32], strides = [1, 1]} : vector<2x128xf32> to vector<2x32xf32>
    %110 = vector.extract_strided_slice %106 {offsets = [0, 32], sizes = [2, 32], strides = [1, 1]} : vector<2x128xf32> to vector<2x32xf32>
    %111 = vector.extract_strided_slice %106 {offsets = [0, 96], sizes = [2, 32], strides = [1, 1]} : vector<2x128xf32> to vector<2x32xf32>
    %112 = arith.mulf %110, %72 : vector<2x32xf32>
    %113 = arith.mulf %109, %108 : vector<2x32xf32>
    %114 = arith.addf %112, %113 : vector<2x32xf32>
    %115 = math.tanh %114 : vector<2x32xf32>
    %116 = arith.mulf %111, %115 : vector<2x32xf32>
    %117 = vector.extract_strided_slice %11 {offsets = [10, 0], sizes = [2, 128], strides = [1, 1]} : vector<16x128xf32> to vector<2x128xf32>
    %cst_35 = arith.constant dense<0.000000e+00> : vector<2x128xf32>
    %118 = tpu.matmul %92, %13, %cst_35 {dimension_numbers = #tpu.dot_dimension_numbers<[1], [0], [0], [1], [0, 0, 1, 1], [], []>} : vector<2x32xf32>, vector<32x128xf32>, vector<2x128xf32> -> vector<2x128xf32>
    %119 = arith.addf %117, %118 : vector<2x128xf32>
    %120 = arith.negf %119 : vector<2x128xf32>
    %121 = math.exp %120 : vector<2x128xf32>
    %cst_36 = arith.constant 1.000000e+00 : f32
    %122 = vector.broadcast %cst_36 : f32 to vector<2x128xf32>
    %123 = arith.addf %122, %121 : vector<2x128xf32>
    %124 = arith.divf %122, %123 : vector<2x128xf32>
    %125 = vector.extract_strided_slice %119 {offsets = [0, 64], sizes = [2, 32], strides = [1, 1]} : vector<2x128xf32> to vector<2x32xf32>
    %126 = math.tanh %125 : vector<2x32xf32>
    %127 = vector.extract_strided_slice %124 {offsets = [0, 0], sizes = [2, 32], strides = [1, 1]} : vector<2x128xf32> to vector<2x32xf32>
    %128 = vector.extract_strided_slice %124 {offsets = [0, 32], sizes = [2, 32], strides = [1, 1]} : vector<2x128xf32> to vector<2x32xf32>
    %129 = vector.extract_strided_slice %124 {offsets = [0, 96], sizes = [2, 32], strides = [1, 1]} : vector<2x128xf32> to vector<2x32xf32>
    %130 = arith.mulf %128, %90 : vector<2x32xf32>
    %131 = arith.mulf %127, %126 : vector<2x32xf32>
    %132 = arith.addf %130, %131 : vector<2x32xf32>
    %133 = math.tanh %132 : vector<2x32xf32>
    %134 = arith.mulf %129, %133 : vector<2x32xf32>
    %c2 = arith.constant 2 : index
    %c0_37 = arith.constant 0 : index
    %c0_38 = arith.constant 0 : index
    %135 = vector.load %arg22[%c2, %c0_37, %c0_38] : memref<8x2x32xf32, #tpu.memory_space<vmem>>, vector<1x2x32xf32>
    %136 = vector.shape_cast %135 : vector<1x2x32xf32> to vector<2x32xf32>
    %137 = vector.shape_cast %116 : vector<2x32xf32> to vector<1x2x32xf32>
    tpu.vector_store %arg22[%c2, %c0_37, %c0_38], %137 {strides = array<i32>} : memref<8x2x32xf32, #tpu.memory_space<vmem>>, vector<1x2x32xf32>,
    %c5 = arith.constant 5 : index
    %c0_39 = arith.constant 0 : index
    %c0_40 = arith.constant 0 : index
    %138 = vector.load %arg23[%c5, %c0_39, %c0_40] : memref<8x2x32xf32, #tpu.memory_space<vmem>>, vector<1x2x32xf32>
    %139 = vector.shape_cast %138 : vector<1x2x32xf32> to vector<2x32xf32>
    %140 = vector.shape_cast %134 : vector<2x32xf32> to vector<1x2x32xf32>
    tpu.vector_store %arg23[%c5, %c0_39, %c0_40], %140 {strides = array<i32>} : memref<8x2x32xf32, #tpu.memory_space<vmem>>, vector<1x2x32xf32>,
    %141 = vector.extract_strided_slice %6 {offsets = [6, 0], sizes = [2, 128], strides = [1, 1]} : vector<16x128xf32> to vector<2x128xf32>
    %cst_41 = arith.constant dense<0.000000e+00> : vector<2x128xf32>
    %142 = tpu.matmul %116, %12, %cst_41 {dimension_numbers = #tpu.dot_dimension_numbers<[1], [0], [0], [1], [0, 0, 1, 1], [], []>} : vector<2x32xf32>, vector<32x128xf32>, vector<2x128xf32> -> vector<2x128xf32>
    %143 = arith.addf %141, %142 : vector<2x128xf32>
    %144 = arith.negf %143 : vector<2x128xf32>
    %145 = math.exp %144 : vector<2x128xf32>
    %cst_42 = arith.constant 1.000000e+00 : f32
    %146 = vector.broadcast %cst_42 : f32 to vector<2x128xf32>
    %147 = arith.addf %146, %145 : vector<2x128xf32>
    %148 = arith.divf %146, %147 : vector<2x128xf32>
    %149 = vector.extract_strided_slice %143 {offsets = [0, 64], sizes = [2, 32], strides = [1, 1]} : vector<2x128xf32> to vector<2x32xf32>
    %150 = math.tanh %149 : vector<2x32xf32>
    %151 = vector.extract_strided_slice %148 {offsets = [0, 0], sizes = [2, 32], strides = [1, 1]} : vector<2x128xf32> to vector<2x32xf32>
    %152 = vector.extract_strided_slice %148 {offsets = [0, 32], sizes = [2, 32], strides = [1, 1]} : vector<2x128xf32> to vector<2x32xf32>
    %153 = vector.extract_strided_slice %148 {offsets = [0, 96], sizes = [2, 32], strides = [1, 1]} : vector<2x128xf32> to vector<2x32xf32>
    %154 = arith.mulf %152, %114 : vector<2x32xf32>
    %155 = arith.mulf %151, %150 : vector<2x32xf32>
    %156 = arith.addf %154, %155 : vector<2x32xf32>
    %157 = math.tanh %156 : vector<2x32xf32>
    %158 = arith.mulf %153, %157 : vector<2x32xf32>
    %159 = vector.extract_strided_slice %11 {offsets = [8, 0], sizes = [2, 128], strides = [1, 1]} : vector<16x128xf32> to vector<2x128xf32>
    %cst_43 = arith.constant dense<0.000000e+00> : vector<2x128xf32>
    %160 = tpu.matmul %134, %13, %cst_43 {dimension_numbers = #tpu.dot_dimension_numbers<[1], [0], [0], [1], [0, 0, 1, 1], [], []>} : vector<2x32xf32>, vector<32x128xf32>, vector<2x128xf32> -> vector<2x128xf32>
    %161 = arith.addf %159, %160 : vector<2x128xf32>
    %162 = arith.negf %161 : vector<2x128xf32>
    %163 = math.exp %162 : vector<2x128xf32>
    %cst_44 = arith.constant 1.000000e+00 : f32
    %164 = vector.broadcast %cst_44 : f32 to vector<2x128xf32>
    %165 = arith.addf %164, %163 : vector<2x128xf32>
    %166 = arith.divf %164, %165 : vector<2x128xf32>
    %167 = vector.extract_strided_slice %161 {offsets = [0, 64], sizes = [2, 32], strides = [1, 1]} : vector<2x128xf32> to vector<2x32xf32>
    %168 = math.tanh %167 : vector<2x32xf32>
    %169 = vector.extract_strided_slice %166 {offsets = [0, 0], sizes = [2, 32], strides = [1, 1]} : vector<2x128xf32> to vector<2x32xf32>
    %170 = vector.extract_strided_slice %166 {offsets = [0, 32], sizes = [2, 32], strides = [1, 1]} : vector<2x128xf32> to vector<2x32xf32>
    %171 = vector.extract_strided_slice %166 {offsets = [0, 96], sizes = [2, 32], strides = [1, 1]} : vector<2x128xf32> to vector<2x32xf32>
    %172 = arith.mulf %170, %132 : vector<2x32xf32>
    %173 = arith.mulf %169, %168 : vector<2x32xf32>
    %174 = arith.addf %172, %173 : vector<2x32xf32>
    %175 = math.tanh %174 : vector<2x32xf32>
    %176 = arith.mulf %171, %175 : vector<2x32xf32>
    %c3 = arith.constant 3 : index
    %c0_45 = arith.constant 0 : index
    %c0_46 = arith.constant 0 : index
    %177 = vector.load %arg22[%c3, %c0_45, %c0_46] : memref<8x2x32xf32, #tpu.memory_space<vmem>>, vector<1x2x32xf32>
    %178 = vector.shape_cast %177 : vector<1x2x32xf32> to vector<2x32xf32>
    %179 = vector.shape_cast %158 : vector<2x32xf32> to vector<1x2x32xf32>
    tpu.vector_store %arg22[%c3, %c0_45, %c0_46], %179 {strides = array<i32>} : memref<8x2x32xf32, #tpu.memory_space<vmem>>, vector<1x2x32xf32>,
    %c4 = arith.constant 4 : index
    %c0_47 = arith.constant 0 : index
    %c0_48 = arith.constant 0 : index
    %180 = vector.load %arg23[%c4, %c0_47, %c0_48] : memref<8x2x32xf32, #tpu.memory_space<vmem>>, vector<1x2x32xf32>
    %181 = vector.shape_cast %180 : vector<1x2x32xf32> to vector<2x32xf32>
    %182 = vector.shape_cast %176 : vector<2x32xf32> to vector<1x2x32xf32>
    tpu.vector_store %arg23[%c4, %c0_47, %c0_48], %182 {strides = array<i32>} : memref<8x2x32xf32, #tpu.memory_space<vmem>>, vector<1x2x32xf32>,
    %183 = vector.extract_strided_slice %6 {offsets = [8, 0], sizes = [2, 128], strides = [1, 1]} : vector<16x128xf32> to vector<2x128xf32>
    %cst_49 = arith.constant dense<0.000000e+00> : vector<2x128xf32>
    %184 = tpu.matmul %158, %12, %cst_49 {dimension_numbers = #tpu.dot_dimension_numbers<[1], [0], [0], [1], [0, 0, 1, 1], [], []>} : vector<2x32xf32>, vector<32x128xf32>, vector<2x128xf32> -> vector<2x128xf32>
    %185 = arith.addf %183, %184 : vector<2x128xf32>
    %186 = arith.negf %185 : vector<2x128xf32>
    %187 = math.exp %186 : vector<2x128xf32>
    %cst_50 = arith.constant 1.000000e+00 : f32
    %188 = vector.broadcast %cst_50 : f32 to vector<2x128xf32>
    %189 = arith.addf %188, %187 : vector<2x128xf32>
    %190 = arith.divf %188, %189 : vector<2x128xf32>
    %191 = vector.extract_strided_slice %185 {offsets = [0, 64], sizes = [2, 32], strides = [1, 1]} : vector<2x128xf32> to vector<2x32xf32>
    %192 = math.tanh %191 : vector<2x32xf32>
    %193 = vector.extract_strided_slice %190 {offsets = [0, 0], sizes = [2, 32], strides = [1, 1]} : vector<2x128xf32> to vector<2x32xf32>
    %194 = vector.extract_strided_slice %190 {offsets = [0, 32], sizes = [2, 32], strides = [1, 1]} : vector<2x128xf32> to vector<2x32xf32>
    %195 = vector.extract_strided_slice %190 {offsets = [0, 96], sizes = [2, 32], strides = [1, 1]} : vector<2x128xf32> to vector<2x32xf32>
    %196 = arith.mulf %194, %156 : vector<2x32xf32>
    %197 = arith.mulf %193, %192 : vector<2x32xf32>
    %198 = arith.addf %196, %197 : vector<2x32xf32>
    %199 = math.tanh %198 : vector<2x32xf32>
    %200 = arith.mulf %195, %199 : vector<2x32xf32>
    %201 = vector.extract_strided_slice %11 {offsets = [6, 0], sizes = [2, 128], strides = [1, 1]} : vector<16x128xf32> to vector<2x128xf32>
    %cst_51 = arith.constant dense<0.000000e+00> : vector<2x128xf32>
    %202 = tpu.matmul %176, %13, %cst_51 {dimension_numbers = #tpu.dot_dimension_numbers<[1], [0], [0], [1], [0, 0, 1, 1], [], []>} : vector<2x32xf32>, vector<32x128xf32>, vector<2x128xf32> -> vector<2x128xf32>
    %203 = arith.addf %201, %202 : vector<2x128xf32>
    %204 = arith.negf %203 : vector<2x128xf32>
    %205 = math.exp %204 : vector<2x128xf32>
    %cst_52 = arith.constant 1.000000e+00 : f32
    %206 = vector.broadcast %cst_52 : f32 to vector<2x128xf32>
    %207 = arith.addf %206, %205 : vector<2x128xf32>
    %208 = arith.divf %206, %207 : vector<2x128xf32>
    %209 = vector.extract_strided_slice %203 {offsets = [0, 64], sizes = [2, 32], strides = [1, 1]} : vector<2x128xf32> to vector<2x32xf32>
    %210 = math.tanh %209 : vector<2x32xf32>
    %211 = vector.extract_strided_slice %208 {offsets = [0, 0], sizes = [2, 32], strides = [1, 1]} : vector<2x128xf32> to vector<2x32xf32>
    %212 = vector.extract_strided_slice %208 {offsets = [0, 32], sizes = [2, 32], strides = [1, 1]} : vector<2x128xf32> to vector<2x32xf32>
    %213 = vector.extract_strided_slice %208 {offsets = [0, 96], sizes = [2, 32], strides = [1, 1]} : vector<2x128xf32> to vector<2x32xf32>
    %214 = arith.mulf %212, %174 : vector<2x32xf32>
    %215 = arith.mulf %211, %210 : vector<2x32xf32>
    %216 = arith.addf %214, %215 : vector<2x32xf32>
    %217 = math.tanh %216 : vector<2x32xf32>
    %218 = arith.mulf %213, %217 : vector<2x32xf32>
    %c4_53 = arith.constant 4 : index
    %c0_54 = arith.constant 0 : index
    %c0_55 = arith.constant 0 : index
    %219 = vector.load %arg22[%c4_53, %c0_54, %c0_55] : memref<8x2x32xf32, #tpu.memory_space<vmem>>, vector<1x2x32xf32>
    %220 = vector.shape_cast %219 : vector<1x2x32xf32> to vector<2x32xf32>
    %221 = vector.shape_cast %200 : vector<2x32xf32> to vector<1x2x32xf32>
    tpu.vector_store %arg22[%c4_53, %c0_54, %c0_55], %221 {strides = array<i32>} : memref<8x2x32xf32, #tpu.memory_space<vmem>>, vector<1x2x32xf32>,
    %c3_56 = arith.constant 3 : index
    %c0_57 = arith.constant 0 : index
    %c0_58 = arith.constant 0 : index
    %222 = vector.load %arg23[%c3_56, %c0_57, %c0_58] : memref<8x2x32xf32, #tpu.memory_space<vmem>>, vector<1x2x32xf32>
    %223 = vector.shape_cast %222 : vector<1x2x32xf32> to vector<2x32xf32>
    %224 = vector.shape_cast %218 : vector<2x32xf32> to vector<1x2x32xf32>
    tpu.vector_store %arg23[%c3_56, %c0_57, %c0_58], %224 {strides = array<i32>} : memref<8x2x32xf32, #tpu.memory_space<vmem>>, vector<1x2x32xf32>,
    %225 = vector.extract_strided_slice %6 {offsets = [10, 0], sizes = [2, 128], strides = [1, 1]} : vector<16x128xf32> to vector<2x128xf32>
    %cst_59 = arith.constant dense<0.000000e+00> : vector<2x128xf32>
    %226 = tpu.matmul %200, %12, %cst_59 {dimension_numbers = #tpu.dot_dimension_numbers<[1], [0], [0], [1], [0, 0, 1, 1], [], []>} : vector<2x32xf32>, vector<32x128xf32>, vector<2x128xf32> -> vector<2x128xf32>
    %227 = arith.addf %225, %226 : vector<2x128xf32>
    %228 = arith.negf %227 : vector<2x128xf32>
    %229 = math.exp %228 : vector<2x128xf32>
    %cst_60 = arith.constant 1.000000e+00 : f32
    %230 = vector.broadcast %cst_60 : f32 to vector<2x128xf32>
    %231 = arith.addf %230, %229 : vector<2x128xf32>
    %232 = arith.divf %230, %231 : vector<2x128xf32>
    %233 = vector.extract_strided_slice %227 {offsets = [0, 64], sizes = [2, 32], strides = [1, 1]} : vector<2x128xf32> to vector<2x32xf32>
    %234 = math.tanh %233 : vector<2x32xf32>
    %235 = vector.extract_strided_slice %232 {offsets = [0, 0], sizes = [2, 32], strides = [1, 1]} : vector<2x128xf32> to vector<2x32xf32>
    %236 = vector.extract_strided_slice %232 {offsets = [0, 32], sizes = [2, 32], strides = [1, 1]} : vector<2x128xf32> to vector<2x32xf32>
    %237 = vector.extract_strided_slice %232 {offsets = [0, 96], sizes = [2, 32], strides = [1, 1]} : vector<2x128xf32> to vector<2x32xf32>
    %238 = arith.mulf %236, %198 : vector<2x32xf32>
    %239 = arith.mulf %235, %234 : vector<2x32xf32>
    %240 = arith.addf %238, %239 : vector<2x32xf32>
    %241 = math.tanh %240 : vector<2x32xf32>
    %242 = arith.mulf %237, %241 : vector<2x32xf32>
    %243 = vector.extract_strided_slice %11 {offsets = [4, 0], sizes = [2, 128], strides = [1, 1]} : vector<16x128xf32> to vector<2x128xf32>
    %cst_61 = arith.constant dense<0.000000e+00> : vector<2x128xf32>
    %244 = tpu.matmul %218, %13, %cst_61 {dimension_numbers = #tpu.dot_dimension_numbers<[1], [0], [0], [1], [0, 0, 1, 1], [], []>} : vector<2x32xf32>, vector<32x128xf32>, vector<2x128xf32> -> vector<2x128xf32>
    %245 = arith.addf %243, %244 : vector<2x128xf32>
    %246 = arith.negf %245 : vector<2x128xf32>
    %247 = math.exp %246 : vector<2x128xf32>
    %cst_62 = arith.constant 1.000000e+00 : f32
    %248 = vector.broadcast %cst_62 : f32 to vector<2x128xf32>
    %249 = arith.addf %248, %247 : vector<2x128xf32>
    %250 = arith.divf %248, %249 : vector<2x128xf32>
    %251 = vector.extract_strided_slice %245 {offsets = [0, 64], sizes = [2, 32], strides = [1, 1]} : vector<2x128xf32> to vector<2x32xf32>
    %252 = math.tanh %251 : vector<2x32xf32>
    %253 = vector.extract_strided_slice %250 {offsets = [0, 0], sizes = [2, 32], strides = [1, 1]} : vector<2x128xf32> to vector<2x32xf32>
    %254 = vector.extract_strided_slice %250 {offsets = [0, 32], sizes = [2, 32], strides = [1, 1]} : vector<2x128xf32> to vector<2x32xf32>
    %255 = vector.extract_strided_slice %250 {offsets = [0, 96], sizes = [2, 32], strides = [1, 1]} : vector<2x128xf32> to vector<2x32xf32>
    %256 = arith.mulf %254, %216 : vector<2x32xf32>
    %257 = arith.mulf %253, %252 : vector<2x32xf32>
    %258 = arith.addf %256, %257 : vector<2x32xf32>
    %259 = math.tanh %258 : vector<2x32xf32>
    %260 = arith.mulf %255, %259 : vector<2x32xf32>
    %c5_63 = arith.constant 5 : index
    %c0_64 = arith.constant 0 : index
    %c0_65 = arith.constant 0 : index
    %261 = vector.load %arg22[%c5_63, %c0_64, %c0_65] : memref<8x2x32xf32, #tpu.memory_space<vmem>>, vector<1x2x32xf32>
    %262 = vector.shape_cast %261 : vector<1x2x32xf32> to vector<2x32xf32>
    %263 = vector.shape_cast %242 : vector<2x32xf32> to vector<1x2x32xf32>
    tpu.vector_store %arg22[%c5_63, %c0_64, %c0_65], %263 {strides = array<i32>} : memref<8x2x32xf32, #tpu.memory_space<vmem>>, vector<1x2x32xf32>,
    %c2_66 = arith.constant 2 : index
    %c0_67 = arith.constant 0 : index
    %c0_68 = arith.constant 0 : index
    %264 = vector.load %arg23[%c2_66, %c0_67, %c0_68] : memref<8x2x32xf32, #tpu.memory_space<vmem>>, vector<1x2x32xf32>
    %265 = vector.shape_cast %264 : vector<1x2x32xf32> to vector<2x32xf32>
    %266 = vector.shape_cast %260 : vector<2x32xf32> to vector<1x2x32xf32>
    tpu.vector_store %arg23[%c2_66, %c0_67, %c0_68], %266 {strides = array<i32>} : memref<8x2x32xf32, #tpu.memory_space<vmem>>, vector<1x2x32xf32>,
    %267 = vector.extract_strided_slice %6 {offsets = [12, 0], sizes = [2, 128], strides = [1, 1]} : vector<16x128xf32> to vector<2x128xf32>
    %cst_69 = arith.constant dense<0.000000e+00> : vector<2x128xf32>
    %268 = tpu.matmul %242, %12, %cst_69 {dimension_numbers = #tpu.dot_dimension_numbers<[1], [0], [0], [1], [0, 0, 1, 1], [], []>} : vector<2x32xf32>, vector<32x128xf32>, vector<2x128xf32> -> vector<2x128xf32>
    %269 = arith.addf %267, %268 : vector<2x128xf32>
    %270 = arith.negf %269 : vector<2x128xf32>
    %271 = math.exp %270 : vector<2x128xf32>
    %cst_70 = arith.constant 1.000000e+00 : f32
    %272 = vector.broadcast %cst_70 : f32 to vector<2x128xf32>
    %273 = arith.addf %272, %271 : vector<2x128xf32>
    %274 = arith.divf %272, %273 : vector<2x128xf32>
    %275 = vector.extract_strided_slice %269 {offsets = [0, 64], sizes = [2, 32], strides = [1, 1]} : vector<2x128xf32> to vector<2x32xf32>
    %276 = math.tanh %275 : vector<2x32xf32>
    %277 = vector.extract_strided_slice %274 {offsets = [0, 0], sizes = [2, 32], strides = [1, 1]} : vector<2x128xf32> to vector<2x32xf32>
    %278 = vector.extract_strided_slice %274 {offsets = [0, 32], sizes = [2, 32], strides = [1, 1]} : vector<2x128xf32> to vector<2x32xf32>
    %279 = vector.extract_strided_slice %274 {offsets = [0, 96], sizes = [2, 32], strides = [1, 1]} : vector<2x128xf32> to vector<2x32xf32>
    %280 = arith.mulf %278, %240 : vector<2x32xf32>
    %281 = arith.mulf %277, %276 : vector<2x32xf32>
    %282 = arith.addf %280, %281 : vector<2x32xf32>
    %283 = math.tanh %282 : vector<2x32xf32>
    %284 = arith.mulf %279, %283 : vector<2x32xf32>
    %285 = vector.extract_strided_slice %11 {offsets = [2, 0], sizes = [2, 128], strides = [1, 1]} : vector<16x128xf32> to vector<2x128xf32>
    %cst_71 = arith.constant dense<0.000000e+00> : vector<2x128xf32>
    %286 = tpu.matmul %260, %13, %cst_71 {dimension_numbers = #tpu.dot_dimension_numbers<[1], [0], [0], [1], [0, 0, 1, 1], [], []>} : vector<2x32xf32>, vector<32x128xf32>, vector<2x128xf32> -> vector<2x128xf32>
    %287 = arith.addf %285, %286 : vector<2x128xf32>
    %288 = arith.negf %287 : vector<2x128xf32>
    %289 = math.exp %288 : vector<2x128xf32>
    %cst_72 = arith.constant 1.000000e+00 : f32
    %290 = vector.broadcast %cst_72 : f32 to vector<2x128xf32>
    %291 = arith.addf %290, %289 : vector<2x128xf32>
    %292 = arith.divf %290, %291 : vector<2x128xf32>
    %293 = vector.extract_strided_slice %287 {offsets = [0, 64], sizes = [2, 32], strides = [1, 1]} : vector<2x128xf32> to vector<2x32xf32>
    %294 = math.tanh %293 : vector<2x32xf32>
    %295 = vector.extract_strided_slice %292 {offsets = [0, 0], sizes = [2, 32], strides = [1, 1]} : vector<2x128xf32> to vector<2x32xf32>
    %296 = vector.extract_strided_slice %292 {offsets = [0, 32], sizes = [2, 32], strides = [1, 1]} : vector<2x128xf32> to vector<2x32xf32>
    %297 = vector.extract_strided_slice %292 {offsets = [0, 96], sizes = [2, 32], strides = [1, 1]} : vector<2x128xf32> to vector<2x32xf32>
    %298 = arith.mulf %296, %258 : vector<2x32xf32>
    %299 = arith.mulf %295, %294 : vector<2x32xf32>
    %300 = arith.addf %298, %299 : vector<2x32xf32>
    %301 = math.tanh %300 : vector<2x32xf32>
    %302 = arith.mulf %297, %301 : vector<2x32xf32>
    %c6_73 = arith.constant 6 : index
    %c0_74 = arith.constant 0 : index
    %c0_75 = arith.constant 0 : index
    %303 = vector.load %arg22[%c6_73, %c0_74, %c0_75] : memref<8x2x32xf32, #tpu.memory_space<vmem>>, vector<1x2x32xf32>
    %304 = vector.shape_cast %303 : vector<1x2x32xf32> to vector<2x32xf32>
    %305 = vector.shape_cast %284 : vector<2x32xf32> to vector<1x2x32xf32>
    tpu.vector_store %arg22[%c6_73, %c0_74, %c0_75], %305 {strides = array<i32>} : memref<8x2x32xf32, #tpu.memory_space<vmem>>, vector<1x2x32xf32>,
    %c1_76 = arith.constant 1 : index
    %c0_77 = arith.constant 0 : index
    %c0_78 = arith.constant 0 : index
    %306 = vector.load %arg23[%c1_76, %c0_77, %c0_78] : memref<8x2x32xf32, #tpu.memory_space<vmem>>, vector<1x2x32xf32>
    %307 = vector.shape_cast %306 : vector<1x2x32xf32> to vector<2x32xf32>
    %308 = vector.shape_cast %302 : vector<2x32xf32> to vector<1x2x32xf32>
    tpu.vector_store %arg23[%c1_76, %c0_77, %c0_78], %308 {strides = array<i32>} : memref<8x2x32xf32, #tpu.memory_space<vmem>>, vector<1x2x32xf32>,
    %309 = vector.extract_strided_slice %6 {offsets = [14, 0], sizes = [2, 128], strides = [1, 1]} : vector<16x128xf32> to vector<2x128xf32>
    %cst_79 = arith.constant dense<0.000000e+00> : vector<2x128xf32>
    %310 = tpu.matmul %284, %12, %cst_79 {dimension_numbers = #tpu.dot_dimension_numbers<[1], [0], [0], [1], [0, 0, 1, 1], [], []>} : vector<2x32xf32>, vector<32x128xf32>, vector<2x128xf32> -> vector<2x128xf32>
    %311 = arith.addf %309, %310 : vector<2x128xf32>
    %312 = arith.negf %311 : vector<2x128xf32>
    %313 = math.exp %312 : vector<2x128xf32>
    %cst_80 = arith.constant 1.000000e+00 : f32
    %314 = vector.broadcast %cst_80 : f32 to vector<2x128xf32>
    %315 = arith.addf %314, %313 : vector<2x128xf32>
    %316 = arith.divf %314, %315 : vector<2x128xf32>
    %317 = vector.extract_strided_slice %311 {offsets = [0, 64], sizes = [2, 32], strides = [1, 1]} : vector<2x128xf32> to vector<2x32xf32>
    %318 = math.tanh %317 : vector<2x32xf32>
    %319 = vector.extract_strided_slice %316 {offsets = [0, 0], sizes = [2, 32], strides = [1, 1]} : vector<2x128xf32> to vector<2x32xf32>
    %320 = vector.extract_strided_slice %316 {offsets = [0, 32], sizes = [2, 32], strides = [1, 1]} : vector<2x128xf32> to vector<2x32xf32>
    %321 = vector.extract_strided_slice %316 {offsets = [0, 96], sizes = [2, 32], strides = [1, 1]} : vector<2x128xf32> to vector<2x32xf32>
    %322 = arith.mulf %320, %282 : vector<2x32xf32>
    %323 = arith.mulf %319, %318 : vector<2x32xf32>
    %324 = arith.addf %322, %323 : vector<2x32xf32>
    %325 = math.tanh %324 : vector<2x32xf32>
    %326 = arith.mulf %321, %325 : vector<2x32xf32>
    %327 = vector.extract_strided_slice %11 {offsets = [0, 0], sizes = [2, 128], strides = [1, 1]} : vector<16x128xf32> to vector<2x128xf32>
    %cst_81 = arith.constant dense<0.000000e+00> : vector<2x128xf32>
    %328 = tpu.matmul %302, %13, %cst_81 {dimension_numbers = #tpu.dot_dimension_numbers<[1], [0], [0], [1], [0, 0, 1, 1], [], []>} : vector<2x32xf32>, vector<32x128xf32>, vector<2x128xf32> -> vector<2x128xf32>
    %329 = arith.addf %327, %328 : vector<2x128xf32>
    %330 = arith.negf %329 : vector<2x128xf32>
    %331 = math.exp %330 : vector<2x128xf32>
    %cst_82 = arith.constant 1.000000e+00 : f32
    %332 = vector.broadcast %cst_82 : f32 to vector<2x128xf32>
    %333 = arith.addf %332, %331 : vector<2x128xf32>
    %334 = arith.divf %332, %333 : vector<2x128xf32>
    %335 = vector.extract_strided_slice %329 {offsets = [0, 64], sizes = [2, 32], strides = [1, 1]} : vector<2x128xf32> to vector<2x32xf32>
    %336 = math.tanh %335 : vector<2x32xf32>
    %337 = vector.extract_strided_slice %334 {offsets = [0, 0], sizes = [2, 32], strides = [1, 1]} : vector<2x128xf32> to vector<2x32xf32>
    %338 = vector.extract_strided_slice %334 {offsets = [0, 32], sizes = [2, 32], strides = [1, 1]} : vector<2x128xf32> to vector<2x32xf32>
    %339 = vector.extract_strided_slice %334 {offsets = [0, 96], sizes = [2, 32], strides = [1, 1]} : vector<2x128xf32> to vector<2x32xf32>
    %340 = arith.mulf %338, %300 : vector<2x32xf32>
    %341 = arith.mulf %337, %336 : vector<2x32xf32>
    %342 = arith.addf %340, %341 : vector<2x32xf32>
    %343 = math.tanh %342 : vector<2x32xf32>
    %344 = arith.mulf %339, %343 : vector<2x32xf32>
    %c7_83 = arith.constant 7 : index
    %c0_84 = arith.constant 0 : index
    %c0_85 = arith.constant 0 : index
    %345 = vector.load %arg22[%c7_83, %c0_84, %c0_85] : memref<8x2x32xf32, #tpu.memory_space<vmem>>, vector<1x2x32xf32>
    %346 = vector.shape_cast %345 : vector<1x2x32xf32> to vector<2x32xf32>
    %347 = vector.shape_cast %326 : vector<2x32xf32> to vector<1x2x32xf32>
    tpu.vector_store %arg22[%c7_83, %c0_84, %c0_85], %347 {strides = array<i32>} : memref<8x2x32xf32, #tpu.memory_space<vmem>>, vector<1x2x32xf32>,
    %c0_86 = arith.constant 0 : index
    %c0_87 = arith.constant 0 : index
    %c0_88 = arith.constant 0 : index
    %348 = vector.load %arg23[%c0_86, %c0_87, %c0_88] : memref<8x2x32xf32, #tpu.memory_space<vmem>>, vector<1x2x32xf32>
    %349 = vector.shape_cast %348 : vector<1x2x32xf32> to vector<2x32xf32>
    %350 = vector.shape_cast %344 : vector<2x32xf32> to vector<1x2x32xf32>
    tpu.vector_store %arg23[%c0_86, %c0_87, %c0_88], %350 {strides = array<i32>} : memref<8x2x32xf32, #tpu.memory_space<vmem>>, vector<1x2x32xf32>,
    %c0_89 = arith.constant 0 : index
    %c0_90 = arith.constant 0 : index
    %c0_91 = arith.constant 0 : index
    %351 = vector.load %arg22[%c0_89, %c0_90, %c0_91] : memref<8x2x32xf32, #tpu.memory_space<vmem>>, vector<8x2x32xf32>
    %c0_92 = arith.constant 0 : index
    %c0_93 = arith.constant 0 : index
    %c0_94 = arith.constant 0 : index
    %352 = vector.load %arg23[%c0_92, %c0_93, %c0_94] : memref<8x2x32xf32, #tpu.memory_space<vmem>>, vector<8x2x32xf32>
    %353 = tpu.concatenate %351, %352 in 2 : vector<8x2x32xf32>, vector<8x2x32xf32> -> vector<8x2x64xf32>
    %354 = vector.shape_cast %353 : vector<8x2x64xf32> to vector<16x64xf32>
    %c0_95 = arith.constant 0 : index
    %c0_96 = arith.constant 0 : index
    %355 = vector.load %arg7[%c0_95, %c0_96] : memref<64x128xf32, #tpu.memory_space<vmem>>, vector<64x128xf32>
    %cst_97 = arith.constant dense<0.000000e+00> : vector<16x128xf32>
    %356 = tpu.matmul %354, %355, %cst_97 {dimension_numbers = #tpu.dot_dimension_numbers<[1], [0], [0], [1], [0, 0, 1, 1], [], []>} : vector<16x64xf32>, vector<64x128xf32>, vector<16x128xf32> -> vector<16x128xf32>
    %c0_98 = arith.constant 0 : index
    %c0_99 = arith.constant 0 : index
    %357 = vector.load %arg9[%c0_98, %c0_99] : memref<1x128xf32, #tpu.memory_space<vmem>>, vector<1x128xf32>
    %358 = vector.broadcast %357 : vector<1x128xf32> to vector<16x128xf32>
    %359 = arith.addf %356, %358 : vector<16x128xf32>
    %c0_100 = arith.constant 0 : index
    %c0_101 = arith.constant 0 : index
    %360 = vector.load %arg10[%c0_100, %c0_101] : memref<64x128xf32, #tpu.memory_space<vmem>>, vector<64x128xf32>
    %cst_102 = arith.constant dense<0.000000e+00> : vector<16x128xf32>
    %361 = tpu.matmul %354, %360, %cst_102 {dimension_numbers = #tpu.dot_dimension_numbers<[1], [0], [0], [1], [0, 0, 1, 1], [], []>} : vector<16x64xf32>, vector<64x128xf32>, vector<16x128xf32> -> vector<16x128xf32>
    %c0_103 = arith.constant 0 : index
    %c0_104 = arith.constant 0 : index
    %362 = vector.load %arg12[%c0_103, %c0_104] : memref<1x128xf32, #tpu.memory_space<vmem>>, vector<1x128xf32>
    %363 = vector.broadcast %362 : vector<1x128xf32> to vector<16x128xf32>
    %364 = arith.addf %361, %363 : vector<16x128xf32>
    %c0_105 = arith.constant 0 : index
    %c0_106 = arith.constant 0 : index
    %365 = vector.load %arg8[%c0_105, %c0_106] : memref<32x128xf32, #tpu.memory_space<vmem>>, vector<32x128xf32>
    %c0_107 = arith.constant 0 : index
    %c0_108 = arith.constant 0 : index
    %366 = vector.load %arg11[%c0_107, %c0_108] : memref<32x128xf32, #tpu.memory_space<vmem>>, vector<32x128xf32>
    %cst_109 = arith.constant 0.000000e+00 : f32
    %367 = vector.broadcast %cst_109 : f32 to vector<2x32xf32>
    %368 = vector.extract_strided_slice %359 {offsets = [0, 0], sizes = [2, 128], strides = [1, 1]} : vector<16x128xf32> to vector<2x128xf32>
    %cst_110 = arith.constant dense<0.000000e+00> : vector<2x128xf32>
    %369 = tpu.matmul %367, %365, %cst_110 {dimension_numbers = #tpu.dot_dimension_numbers<[1], [0], [0], [1], [0, 0, 1, 1], [], []>} : vector<2x32xf32>, vector<32x128xf32>, vector<2x128xf32> -> vector<2x128xf32>
    %370 = arith.addf %368, %369 : vector<2x128xf32>
    %371 = arith.negf %370 : vector<2x128xf32>
    %372 = math.exp %371 : vector<2x128xf32>
    %cst_111 = arith.constant 1.000000e+00 : f32
    %373 = vector.broadcast %cst_111 : f32 to vector<2x128xf32>
    %374 = arith.addf %373, %372 : vector<2x128xf32>
    %375 = arith.divf %373, %374 : vector<2x128xf32>
    %376 = vector.extract_strided_slice %370 {offsets = [0, 64], sizes = [2, 32], strides = [1, 1]} : vector<2x128xf32> to vector<2x32xf32>
    %377 = math.tanh %376 : vector<2x32xf32>
    %378 = vector.extract_strided_slice %375 {offsets = [0, 0], sizes = [2, 32], strides = [1, 1]} : vector<2x128xf32> to vector<2x32xf32>
    %379 = vector.extract_strided_slice %375 {offsets = [0, 32], sizes = [2, 32], strides = [1, 1]} : vector<2x128xf32> to vector<2x32xf32>
    %380 = vector.extract_strided_slice %375 {offsets = [0, 96], sizes = [2, 32], strides = [1, 1]} : vector<2x128xf32> to vector<2x32xf32>
    %381 = arith.mulf %379, %367 : vector<2x32xf32>
    %382 = arith.mulf %378, %377 : vector<2x32xf32>
    %383 = arith.addf %381, %382 : vector<2x32xf32>
    %384 = math.tanh %383 : vector<2x32xf32>
    %385 = arith.mulf %380, %384 : vector<2x32xf32>
    %386 = vector.extract_strided_slice %364 {offsets = [14, 0], sizes = [2, 128], strides = [1, 1]} : vector<16x128xf32> to vector<2x128xf32>
    %cst_112 = arith.constant dense<0.000000e+00> : vector<2x128xf32>
    %387 = tpu.matmul %367, %366, %cst_112 {dimension_numbers = #tpu.dot_dimension_numbers<[1], [0], [0], [1], [0, 0, 1, 1], [], []>} : vector<2x32xf32>, vector<32x128xf32>, vector<2x128xf32> -> vector<2x128xf32>
    %388 = arith.addf %386, %387 : vector<2x128xf32>
    %389 = arith.negf %388 : vector<2x128xf32>
    %390 = math.exp %389 : vector<2x128xf32>
    %cst_113 = arith.constant 1.000000e+00 : f32
    %391 = vector.broadcast %cst_113 : f32 to vector<2x128xf32>
    %392 = arith.addf %391, %390 : vector<2x128xf32>
    %393 = arith.divf %391, %392 : vector<2x128xf32>
    %394 = vector.extract_strided_slice %388 {offsets = [0, 64], sizes = [2, 32], strides = [1, 1]} : vector<2x128xf32> to vector<2x32xf32>
    %395 = math.tanh %394 : vector<2x32xf32>
    %396 = vector.extract_strided_slice %393 {offsets = [0, 0], sizes = [2, 32], strides = [1, 1]} : vector<2x128xf32> to vector<2x32xf32>
    %397 = vector.extract_strided_slice %393 {offsets = [0, 32], sizes = [2, 32], strides = [1, 1]} : vector<2x128xf32> to vector<2x32xf32>
    %398 = vector.extract_strided_slice %393 {offsets = [0, 96], sizes = [2, 32], strides = [1, 1]} : vector<2x128xf32> to vector<2x32xf32>
    %399 = arith.mulf %397, %367 : vector<2x32xf32>
    %400 = arith.mulf %396, %395 : vector<2x32xf32>
    %401 = arith.addf %399, %400 : vector<2x32xf32>
    %402 = math.tanh %401 : vector<2x32xf32>
    %403 = arith.mulf %398, %402 : vector<2x32xf32>
    %404 = vector.extract_strided_slice %359 {offsets = [2, 0], sizes = [2, 128], strides = [1, 1]} : vector<16x128xf32> to vector<2x128xf32>
    %cst_114 = arith.constant dense<0.000000e+00> : vector<2x128xf32>
    %405 = tpu.matmul %385, %365, %cst_114 {dimension_numbers = #tpu.dot_dimension_numbers<[1], [0], [0], [1], [0, 0, 1, 1], [], []>} : vector<2x32xf32>, vector<32x128xf32>, vector<2x128xf32> -> vector<2x128xf32>
    %406 = arith.addf %404, %405 : vector<2x128xf32>
    %407 = arith.negf %406 : vector<2x128xf32>
    %408 = math.exp %407 : vector<2x128xf32>
    %cst_115 = arith.constant 1.000000e+00 : f32
    %409 = vector.broadcast %cst_115 : f32 to vector<2x128xf32>
    %410 = arith.addf %409, %408 : vector<2x128xf32>
    %411 = arith.divf %409, %410 : vector<2x128xf32>
    %412 = vector.extract_strided_slice %406 {offsets = [0, 64], sizes = [2, 32], strides = [1, 1]} : vector<2x128xf32> to vector<2x32xf32>
    %413 = math.tanh %412 : vector<2x32xf32>
    %414 = vector.extract_strided_slice %411 {offsets = [0, 0], sizes = [2, 32], strides = [1, 1]} : vector<2x128xf32> to vector<2x32xf32>
    %415 = vector.extract_strided_slice %411 {offsets = [0, 32], sizes = [2, 32], strides = [1, 1]} : vector<2x128xf32> to vector<2x32xf32>
    %416 = vector.extract_strided_slice %411 {offsets = [0, 96], sizes = [2, 32], strides = [1, 1]} : vector<2x128xf32> to vector<2x32xf32>
    %417 = arith.mulf %415, %383 : vector<2x32xf32>
    %418 = arith.mulf %414, %413 : vector<2x32xf32>
    %419 = arith.addf %417, %418 : vector<2x32xf32>
    %420 = math.tanh %419 : vector<2x32xf32>
    %421 = arith.mulf %416, %420 : vector<2x32xf32>
    %422 = vector.extract_strided_slice %359 {offsets = [4, 0], sizes = [2, 128], strides = [1, 1]} : vector<16x128xf32> to vector<2x128xf32>
    %cst_116 = arith.constant dense<0.000000e+00> : vector<2x128xf32>
    %423 = tpu.matmul %421, %365, %cst_116 {dimension_numbers = #tpu.dot_dimension_numbers<[1], [0], [0], [1], [0, 0, 1, 1], [], []>} : vector<2x32xf32>, vector<32x128xf32>, vector<2x128xf32> -> vector<2x128xf32>
    %424 = arith.addf %422, %423 : vector<2x128xf32>
    %425 = arith.negf %424 : vector<2x128xf32>
    %426 = math.exp %425 : vector<2x128xf32>
    %cst_117 = arith.constant 1.000000e+00 : f32
    %427 = vector.broadcast %cst_117 : f32 to vector<2x128xf32>
    %428 = arith.addf %427, %426 : vector<2x128xf32>
    %429 = arith.divf %427, %428 : vector<2x128xf32>
    %430 = vector.extract_strided_slice %424 {offsets = [0, 64], sizes = [2, 32], strides = [1, 1]} : vector<2x128xf32> to vector<2x32xf32>
    %431 = math.tanh %430 : vector<2x32xf32>
    %432 = vector.extract_strided_slice %429 {offsets = [0, 0], sizes = [2, 32], strides = [1, 1]} : vector<2x128xf32> to vector<2x32xf32>
    %433 = vector.extract_strided_slice %429 {offsets = [0, 32], sizes = [2, 32], strides = [1, 1]} : vector<2x128xf32> to vector<2x32xf32>
    %434 = vector.extract_strided_slice %429 {offsets = [0, 96], sizes = [2, 32], strides = [1, 1]} : vector<2x128xf32> to vector<2x32xf32>
    %435 = arith.mulf %433, %419 : vector<2x32xf32>
    %436 = arith.mulf %432, %431 : vector<2x32xf32>
    %437 = arith.addf %435, %436 : vector<2x32xf32>
    %438 = math.tanh %437 : vector<2x32xf32>
    %439 = arith.mulf %434, %438 : vector<2x32xf32>
    %440 = vector.extract_strided_slice %359 {offsets = [6, 0], sizes = [2, 128], strides = [1, 1]} : vector<16x128xf32> to vector<2x128xf32>
    %cst_118 = arith.constant dense<0.000000e+00> : vector<2x128xf32>
    %441 = tpu.matmul %439, %365, %cst_118 {dimension_numbers = #tpu.dot_dimension_numbers<[1], [0], [0], [1], [0, 0, 1, 1], [], []>} : vector<2x32xf32>, vector<32x128xf32>, vector<2x128xf32> -> vector<2x128xf32>
    %442 = arith.addf %440, %441 : vector<2x128xf32>
    %443 = arith.negf %442 : vector<2x128xf32>
    %444 = math.exp %443 : vector<2x128xf32>
    %cst_119 = arith.constant 1.000000e+00 : f32
    %445 = vector.broadcast %cst_119 : f32 to vector<2x128xf32>
    %446 = arith.addf %445, %444 : vector<2x128xf32>
    %447 = arith.divf %445, %446 : vector<2x128xf32>
    %448 = vector.extract_strided_slice %442 {offsets = [0, 64], sizes = [2, 32], strides = [1, 1]} : vector<2x128xf32> to vector<2x32xf32>
    %449 = math.tanh %448 : vector<2x32xf32>
    %450 = vector.extract_strided_slice %447 {offsets = [0, 0], sizes = [2, 32], strides = [1, 1]} : vector<2x128xf32> to vector<2x32xf32>
    %451 = vector.extract_strided_slice %447 {offsets = [0, 32], sizes = [2, 32], strides = [1, 1]} : vector<2x128xf32> to vector<2x32xf32>
    %452 = vector.extract_strided_slice %447 {offsets = [0, 96], sizes = [2, 32], strides = [1, 1]} : vector<2x128xf32> to vector<2x32xf32>
    %453 = arith.mulf %451, %437 : vector<2x32xf32>
    %454 = arith.mulf %450, %449 : vector<2x32xf32>
    %455 = arith.addf %453, %454 : vector<2x32xf32>
    %456 = math.tanh %455 : vector<2x32xf32>
    %457 = arith.mulf %452, %456 : vector<2x32xf32>
    %458 = vector.extract_strided_slice %359 {offsets = [8, 0], sizes = [2, 128], strides = [1, 1]} : vector<16x128xf32> to vector<2x128xf32>
    %cst_120 = arith.constant dense<0.000000e+00> : vector<2x128xf32>
    %459 = tpu.matmul %457, %365, %cst_120 {dimension_numbers = #tpu.dot_dimension_numbers<[1], [0], [0], [1], [0, 0, 1, 1], [], []>} : vector<2x32xf32>, vector<32x128xf32>, vector<2x128xf32> -> vector<2x128xf32>
    %460 = arith.addf %458, %459 : vector<2x128xf32>
    %461 = arith.negf %460 : vector<2x128xf32>
    %462 = math.exp %461 : vector<2x128xf32>
    %cst_121 = arith.constant 1.000000e+00 : f32
    %463 = vector.broadcast %cst_121 : f32 to vector<2x128xf32>
    %464 = arith.addf %463, %462 : vector<2x128xf32>
    %465 = arith.divf %463, %464 : vector<2x128xf32>
    %466 = vector.extract_strided_slice %460 {offsets = [0, 64], sizes = [2, 32], strides = [1, 1]} : vector<2x128xf32> to vector<2x32xf32>
    %467 = math.tanh %466 : vector<2x32xf32>
    %468 = vector.extract_strided_slice %465 {offsets = [0, 0], sizes = [2, 32], strides = [1, 1]} : vector<2x128xf32> to vector<2x32xf32>
    %469 = vector.extract_strided_slice %465 {offsets = [0, 32], sizes = [2, 32], strides = [1, 1]} : vector<2x128xf32> to vector<2x32xf32>
    %470 = vector.extract_strided_slice %465 {offsets = [0, 96], sizes = [2, 32], strides = [1, 1]} : vector<2x128xf32> to vector<2x32xf32>
    %471 = arith.mulf %469, %455 : vector<2x32xf32>
    %472 = arith.mulf %468, %467 : vector<2x32xf32>
    %473 = arith.addf %471, %472 : vector<2x32xf32>
    %474 = math.tanh %473 : vector<2x32xf32>
    %475 = arith.mulf %470, %474 : vector<2x32xf32>
    %476 = vector.extract_strided_slice %359 {offsets = [10, 0], sizes = [2, 128], strides = [1, 1]} : vector<16x128xf32> to vector<2x128xf32>
    %cst_122 = arith.constant dense<0.000000e+00> : vector<2x128xf32>
    %477 = tpu.matmul %475, %365, %cst_122 {dimension_numbers = #tpu.dot_dimension_numbers<[1], [0], [0], [1], [0, 0, 1, 1], [], []>} : vector<2x32xf32>, vector<32x128xf32>, vector<2x128xf32> -> vector<2x128xf32>
    %478 = arith.addf %476, %477 : vector<2x128xf32>
    %479 = arith.negf %478 : vector<2x128xf32>
    %480 = math.exp %479 : vector<2x128xf32>
    %cst_123 = arith.constant 1.000000e+00 : f32
    %481 = vector.broadcast %cst_123 : f32 to vector<2x128xf32>
    %482 = arith.addf %481, %480 : vector<2x128xf32>
    %483 = arith.divf %481, %482 : vector<2x128xf32>
    %484 = vector.extract_strided_slice %478 {offsets = [0, 64], sizes = [2, 32], strides = [1, 1]} : vector<2x128xf32> to vector<2x32xf32>
    %485 = math.tanh %484 : vector<2x32xf32>
    %486 = vector.extract_strided_slice %483 {offsets = [0, 0], sizes = [2, 32], strides = [1, 1]} : vector<2x128xf32> to vector<2x32xf32>
    %487 = vector.extract_strided_slice %483 {offsets = [0, 32], sizes = [2, 32], strides = [1, 1]} : vector<2x128xf32> to vector<2x32xf32>
    %488 = vector.extract_strided_slice %483 {offsets = [0, 96], sizes = [2, 32], strides = [1, 1]} : vector<2x128xf32> to vector<2x32xf32>
    %489 = arith.mulf %487, %473 : vector<2x32xf32>
    %490 = arith.mulf %486, %485 : vector<2x32xf32>
    %491 = arith.addf %489, %490 : vector<2x32xf32>
    %492 = math.tanh %491 : vector<2x32xf32>
    %493 = arith.mulf %488, %492 : vector<2x32xf32>
    %494 = vector.extract_strided_slice %359 {offsets = [12, 0], sizes = [2, 128], strides = [1, 1]} : vector<16x128xf32> to vector<2x128xf32>
    %cst_124 = arith.constant dense<0.000000e+00> : vector<2x128xf32>
    %495 = tpu.matmul %493, %365, %cst_124 {dimension_numbers = #tpu.dot_dimension_numbers<[1], [0], [0], [1], [0, 0, 1, 1], [], []>} : vector<2x32xf32>, vector<32x128xf32>, vector<2x128xf32> -> vector<2x128xf32>
    %496 = arith.addf %494, %495 : vector<2x128xf32>
    %497 = arith.negf %496 : vector<2x128xf32>
    %498 = math.exp %497 : vector<2x128xf32>
    %cst_125 = arith.constant 1.000000e+00 : f32
    %499 = vector.broadcast %cst_125 : f32 to vector<2x128xf32>
    %500 = arith.addf %499, %498 : vector<2x128xf32>
    %501 = arith.divf %499, %500 : vector<2x128xf32>
    %502 = vector.extract_strided_slice %496 {offsets = [0, 64], sizes = [2, 32], strides = [1, 1]} : vector<2x128xf32> to vector<2x32xf32>
    %503 = math.tanh %502 : vector<2x32xf32>
    %504 = vector.extract_strided_slice %501 {offsets = [0, 0], sizes = [2, 32], strides = [1, 1]} : vector<2x128xf32> to vector<2x32xf32>
    %505 = vector.extract_strided_slice %501 {offsets = [0, 32], sizes = [2, 32], strides = [1, 1]} : vector<2x128xf32> to vector<2x32xf32>
    %506 = vector.extract_strided_slice %501 {offsets = [0, 96], sizes = [2, 32], strides = [1, 1]} : vector<2x128xf32> to vector<2x32xf32>
    %507 = arith.mulf %505, %491 : vector<2x32xf32>
    %508 = arith.mulf %504, %503 : vector<2x32xf32>
    %509 = arith.addf %507, %508 : vector<2x32xf32>
    %510 = math.tanh %509 : vector<2x32xf32>
    %511 = arith.mulf %506, %510 : vector<2x32xf32>
    %512 = vector.extract_strided_slice %359 {offsets = [14, 0], sizes = [2, 128], strides = [1, 1]} : vector<16x128xf32> to vector<2x128xf32>
    %cst_126 = arith.constant dense<0.000000e+00> : vector<2x128xf32>
    %513 = tpu.matmul %511, %365, %cst_126 {dimension_numbers = #tpu.dot_dimension_numbers<[1], [0], [0], [1], [0, 0, 1, 1], [], []>} : vector<2x32xf32>, vector<32x128xf32>, vector<2x128xf32> -> vector<2x128xf32>
    %514 = arith.addf %512, %513 : vector<2x128xf32>
    %515 = arith.negf %514 : vector<2x128xf32>
    %516 = math.exp %515 : vector<2x128xf32>
    %cst_127 = arith.constant 1.000000e+00 : f32
    %517 = vector.broadcast %cst_127 : f32 to vector<2x128xf32>
    %518 = arith.addf %517, %516 : vector<2x128xf32>
    %519 = arith.divf %517, %518 : vector<2x128xf32>
    %520 = vector.extract_strided_slice %514 {offsets = [0, 64], sizes = [2, 32], strides = [1, 1]} : vector<2x128xf32> to vector<2x32xf32>
    %521 = math.tanh %520 : vector<2x32xf32>
    %522 = vector.extract_strided_slice %519 {offsets = [0, 0], sizes = [2, 32], strides = [1, 1]} : vector<2x128xf32> to vector<2x32xf32>
    %523 = vector.extract_strided_slice %519 {offsets = [0, 32], sizes = [2, 32], strides = [1, 1]} : vector<2x128xf32> to vector<2x32xf32>
    %524 = vector.extract_strided_slice %519 {offsets = [0, 96], sizes = [2, 32], strides = [1, 1]} : vector<2x128xf32> to vector<2x32xf32>
    %525 = arith.mulf %523, %509 : vector<2x32xf32>
    %526 = arith.mulf %522, %521 : vector<2x32xf32>
    %527 = arith.addf %525, %526 : vector<2x32xf32>
    %528 = math.tanh %527 : vector<2x32xf32>
    %529 = arith.mulf %524, %528 : vector<2x32xf32>
    %530 = tpu.concatenate %529, %403 in 1 : vector<2x32xf32>, vector<2x32xf32> -> vector<2x64xf32>
    %c0_128 = arith.constant 0 : index
    %c0_129 = arith.constant 0 : index
    %531 = vector.load %arg19[%c0_128, %c0_129] : memref<2x64xf32, #tpu.memory_space<vmem>>, vector<2x64xf32>
    tpu.vector_store %arg19[%c0_128, %c0_129], %530 {strides = array<i32>} : memref<2x64xf32, #tpu.memory_space<vmem>>, vector<2x64xf32>,
    %c0_130 = arith.constant 0 : index
    %c0_131 = arith.constant 0 : index
    %532 = vector.load %arg13[%c0_130, %c0_131] : memref<64x64xf32, #tpu.memory_space<vmem>>, vector<64x64xf32>
    %cst_132 = arith.constant dense<0.000000e+00> : vector<2x64xf32>
    %533 = tpu.matmul %530, %532, %cst_132 {dimension_numbers = #tpu.dot_dimension_numbers<[1], [0], [0], [1], [0, 0, 1, 1], [], []>} : vector<2x64xf32>, vector<64x64xf32>, vector<2x64xf32> -> vector<2x64xf32>
    %c0_133 = arith.constant 0 : index
    %c0_134 = arith.constant 0 : index
    %534 = vector.load %arg14[%c0_133, %c0_134] : memref<1x64xf32, #tpu.memory_space<vmem>>, vector<1x64xf32>
    %535 = vector.broadcast %534 : vector<1x64xf32> to vector<2x64xf32>
    %536 = arith.addf %533, %535 : vector<2x64xf32>
    %c0_135 = arith.constant 0 : index
    %c0_136 = arith.constant 0 : index
    %537 = vector.load %arg20[%c0_135, %c0_136] : memref<2x64xf32, #tpu.memory_space<vmem>>, vector<2x64xf32>
    tpu.vector_store %arg20[%c0_135, %c0_136], %536 {strides = array<i32>} : memref<2x64xf32, #tpu.memory_space<vmem>>, vector<2x64xf32>,
    %c0_137 = arith.constant 0 : index
    %c0_138 = arith.constant 0 : index
    %538 = vector.load %arg15[%c0_137, %c0_138] : memref<64x32xf32, #tpu.memory_space<vmem>>, vector<64x32xf32>
    %cst_139 = arith.constant dense<0.000000e+00> : vector<2x32xf32>
    %539 = tpu.matmul %530, %538, %cst_139 {dimension_numbers = #tpu.dot_dimension_numbers<[1], [0], [0], [1], [0, 0, 1, 1], [], []>} : vector<2x64xf32>, vector<64x32xf32>, vector<2x32xf32> -> vector<2x32xf32>
    %c0_140 = arith.constant 0 : index
    %c0_141 = arith.constant 0 : index
    %540 = vector.load %arg16[%c0_140, %c0_141] : memref<1x32xf32, #tpu.memory_space<vmem>>, vector<1x32xf32>
    %541 = vector.broadcast %540 : vector<1x32xf32> to vector<2x32xf32>
    %542 = arith.addf %539, %541 : vector<2x32xf32>
    %cst_142 = arith.constant 0.000000e+00 : f32
    %543 = vector.broadcast %cst_142 : f32 to vector<2x32xf32>
    %544 = arith.maximumf %542, %543 : vector<2x32xf32>
    %c0_143 = arith.constant 0 : index
    %c0_144 = arith.constant 0 : index
    %545 = vector.load %arg17[%c0_143, %c0_144] : memref<32x1xf32, #tpu.memory_space<vmem>>, vector<32x1xf32>
    %cst_145 = arith.constant dense<0.000000e+00> : vector<2x1xf32>
    %546 = tpu.matmul %544, %545, %cst_145 {dimension_numbers = #tpu.dot_dimension_numbers<[1], [0], [0], [1], [0, 0, 1, 1], [], []>} : vector<2x32xf32>, vector<32x1xf32>, vector<2x1xf32> -> vector<2x1xf32>
    %c0_146 = arith.constant 0 : index
    %c0_147 = arith.constant 0 : index
    %547 = vector.load %arg18[%c0_146, %c0_147] : memref<1x1xf32, #tpu.memory_space<vmem>>, vector<1x1xf32>
    %548 = vector.broadcast %547 : vector<1x1xf32> to vector<2x1xf32>
    %549 = arith.addf %546, %548 : vector<2x1xf32>
    %c0_148 = arith.constant 0 : index
    %c0_149 = arith.constant 0 : index
    %550 = vector.load %arg21[%c0_148, %c0_149] : memref<2x1xf32, #tpu.memory_space<vmem>>, vector<2x1xf32>
    tpu.vector_store %arg21[%c0_148, %c0_149], %549 {strides = array<i32>} : memref<2x1xf32, #tpu.memory_space<vmem>>, vector<2x1xf32>,
    return
  }
}

</mosaic_0001>

<llo_original>
// kernel: forward.1
$region0: #{forward.1}
  #allocation0 [shape = 'u32[]', space=smem, size = 0x4, offset = 0x4, fixed_abs, tag = 'smem constant byte address 0x4 - core index']
  #allocation1 [shape = 'u32[144,128]{1,0:T(1,128)}', space=vmem, size = 0x12000, scoped, tag = 'internal scratch']
  #allocation2 [shape = 'f32[8,2,32]{2,1,0:T(2,128)}', space=vmem, size = 0x2000, scoped, tag = 'scratch operand']
  #allocation3 [shape = 'f32[8,2,32]{2,1,0:T(2,128)}', space=vmem, size = 0x2000, scoped, tag = 'scratch operand']
  #allocation4 [shape = 'f32[1,1]{1,0:T(1,128)S(1)}', space=vmem, size = 0x200, scoped, tag = 'scoped memory for forward.1']
  %s0 = inlined_call_operand.vmem [shape: f32[8,2,16], index: 0, kind: input, shape index: {}]
  %s1 = inlined_call_operand.hbm [shape: f32[16,128], index: 1, kind: input, shape index: {}]
  %s2 = inlined_call_operand.hbm [shape: f32[32,128], index: 2, kind: input, shape index: {}]
  %s3 = inlined_call_operand.vmem [shape: f32[1,128], index: 3, kind: input, shape index: {}]
  %s4 = inlined_call_operand.hbm [shape: f32[16,128], index: 4, kind: input, shape index: {}]
  %s5 = inlined_call_operand.hbm [shape: f32[32,128], index: 5, kind: input, shape index: {}]
  %s6 = inlined_call_operand.vmem [shape: f32[1,128], index: 6, kind: input, shape index: {}]
  %s7 = inlined_call_operand.vmem [shape: f32[64,128], index: 7, kind: input, shape index: {}]
  %s8 = inlined_call_operand.vmem [shape: f32[32,128], index: 8, kind: input, shape index: {}]
  %s9 = inlined_call_operand.vmem [shape: f32[1,128], index: 9, kind: input, shape index: {}]
  %s10 = inlined_call_operand.vmem [shape: f32[64,128], index: 10, kind: input, shape index: {}]
  %s11 = inlined_call_operand.hbm [shape: f32[32,128], index: 11, kind: input, shape index: {}]
  %s12 = inlined_call_operand.hbm [shape: f32[1,128], index: 12, kind: input, shape index: {}]
  %s13 = inlined_call_operand.hbm [shape: f32[64,64], index: 13, kind: input, shape index: {}]
  %s14 = inlined_call_operand.hbm [shape: f32[1,64], index: 14, kind: input, shape index: {}]
  %s15 = inlined_call_operand.vmem [shape: f32[64,32], index: 15, kind: input, shape index: {}]
  %s16 = inlined_call_operand.vmem [shape: f32[1,32], index: 16, kind: input, shape index: {}]
  %s17 = inlined_call_operand.vmem [shape: f32[32,1], index: 17, kind: input, shape index: {}]
  %s18 = inlined_call_operand.<no memory space> [shape: f32[1,1], index: 18, kind: input, shape index: {}]
  %s19 = inlined_call_operand.hbm [shape: f32[2,64], index: 19, kind: output, shape index: {0}]
  %s20 = inlined_call_operand.hbm [shape: f32[2,64], index: 20, kind: output, shape index: {1}]
  %s21 = inlined_call_operand.vmem [shape: f32[2,1], index: 21, kind: output, shape index: {2}]
  %22 = xla_tuple %s19, %s20, %s21
  %s23 = sld [smem:[#allocation0]]
  $region134: #{forward.1} parent=0
    _
  %s25 = ssub.s32 1, %s23
  %s26 = scalar_select 0, %s25, %s23
  %v27 = vstv %s18
  %28 = vst [vmem:[#allocation4] sm:$0x1] %v27
  $region1: #{forward.1} parent=0
    #allocation5 [shape = 'u8[8192]{0}', space=vmem, size = 0x2000, scoped, tag = 'input window, operand 1, single buffered']
    #allocation6 [shape = 's32[1]{0}', space=sflag, size = 0x4, scoped, tag = 'scoped memory for forward.1']
    #allocation7 [shape = 's32[1]{0}', space=sflag, size = 0x4, scoped, tag = 'scoped memory for forward.1']
    #allocation8 [shape = 'u8[16384]{0}', space=vmem, size = 0x4000, scoped, tag = 'input window, operand 2, single buffered']
    #allocation9 [shape = 's32[1]{0}', space=sflag, size = 0x4, scoped, tag = 'scoped memory for forward.1']
    #allocation10 [shape = 'u8[8192]{0}', space=vmem, size = 0x2000, scoped, tag = 'input window, operand 4, single buffered']
    #allocation11 [shape = 'u8[16384]{0}', space=vmem, size = 0x4000, scoped, tag = 'input window, operand 5, single buffered']
    #allocation12 [shape = 's32[1]{0}', space=sflag, size = 0x4, scoped, tag = 'scoped memory for forward.1']
    #allocation13 [shape = 'u8[16384]{0}', space=vmem, size = 0x4000, scoped, tag = 'input window, operand 11, single buffered']
    #allocation14 [shape = 'u8[512]{0}', space=vmem, size = 0x400, scoped, tag = 'input window, operand 12, single buffered']
    #allocation15 [shape = 's32[1]{0}', space=sflag, size = 0x4, scoped, tag = 'scoped memory for forward.1']
    #allocation16 [shape = 'u8[32768]{0}', space=vmem, size = 0x8000, scoped, tag = 'input window, operand 13, single buffered']
    #allocation17 [shape = 'u8[512]{0}', space=vmem, size = 0x400, scoped, tag = 'input window, operand 14, single buffered']
    #allocation18 [shape = 's32[1]{0}', space=sflag, size = 0x4, scoped, tag = 'scoped memory for forward.1']
    #allocation19 [shape = 'u8[1024]{0}', space=vmem, size = 0x400, scoped, tag = 'output window, operand 0, single buffered']
    #allocation20 [shape = 'u8[1024]{0}', space=vmem, size = 0x400, scoped, tag = 'output window, operand 1, single buffered']
    #allocation21 [shape = 's32[1]{0}', space=sflag, size = 0x4, scoped, tag = 'scoped memory for forward.1']
    %29 = vsyncpa [#allocation6], 0
    %30 = vsyncpa [#allocation9], 0
    %31 = vsyncpa [#allocation12], 0
    %32 = vsyncpa [#allocation15], 0
    %33 = vsyncpa [#allocation18], 0
    %34 = vsyncpa [#allocation7], 0
    %35 = vsyncpa [#allocation21], 0
    // Predicated region
    $region2: #{forward.1} parent=1 // pred_check
      _
    $region3: #{forward.1} parent=1 // pred_check_branch
      %37 = sbr.rel (0) target = $region5
    $region4: #{forward.1} parent=1 // pred_region
      _
    $region5: #{forward.1} parent=1 // pred_fallthru
      _
    // Predicated region
    $region6: #{forward.1} parent=1 // pred_check
      _
    $region7: #{forward.1} parent=1 // pred_check_branch
      %39 = sbr.rel (0) target = $region9
    $region8: #{forward.1} parent=1 // pred_region
      %s41 = ssub.s32 256, 256
      %42 = vsyncadd [#allocation6], %s41
      %s43 = sshll.u32 [#allocation5], 4
      %s44 = int_to_ptr.vmem [resolvable:$true] %s43
      %49 = dma.hbm_to_vmem [thread:$0]  %s1, 256, %s44, [#allocation6], 128, 128, 8
    $region9: #{forward.1} parent=1 // pred_fallthru
      _
    // Predicated region
    $region10: #{forward.1} parent=1 // pred_check
      _
    $region11: #{forward.1} parent=1 // pred_check_branch
      %51 = sbr.rel (0) target = $region13
    $region12: #{forward.1} parent=1 // pred_region
      %s53 = ssub.s32 512, 512
      %54 = vsyncadd [#allocation9], %s53
      %s55 = sshll.u32 [#allocation8], 4
      %s56 = int_to_ptr.vmem [resolvable:$true] %s55
      %61 = dma.hbm_to_vmem [thread:$0]  %s2, 512, %s56, [#allocation9], 128, 128, 8
    $region13: #{forward.1} parent=1 // pred_fallthru
      _
    // Predicated region
    $region14: #{forward.1} parent=1 // pred_check
      _
    $region15: #{forward.1} parent=1 // pred_check_branch
      %63 = sbr.rel (0) target = $region17
    $region16: #{forward.1} parent=1 // pred_region
      _
    $region17: #{forward.1} parent=1 // pred_fallthru
      _
    // Predicated region
    $region18: #{forward.1} parent=1 // pred_check
      _
    $region19: #{forward.1} parent=1 // pred_check_branch
      %65 = sbr.rel (0) target = $region21
    $region20: #{forward.1} parent=1 // pred_region
      %s67 = ssub.s32 256, 256
      %68 = vsyncadd [#allocation9], %s67
      %s69 = sshll.u32 [#allocation10], 4
      %s70 = int_to_ptr.vmem [resolvable:$true] %s69
      %75 = dma.hbm_to_vmem [thread:$0]  %s4, 256, %s70, [#allocation9], 128, 128, 8
    $region21: #{forward.1} parent=1 // pred_fallthru
      _
    // Predicated region
    $region22: #{forward.1} parent=1 // pred_check
      _
    $region23: #{forward.1} parent=1 // pred_check_branch
      %77 = sbr.rel (0) target = $region25
    $region24: #{forward.1} parent=1 // pred_region
      %s79 = ssub.s32 512, 512
      %80 = vsyncadd [#allocation12], %s79
      %s81 = sshll.u32 [#allocation11], 4
      %s82 = int_to_ptr.vmem [resolvable:$true] %s81
      %87 = dma.hbm_to_vmem [thread:$0]  %s5, 512, %s82, [#allocation12], 128, 128, 8
    $region25: #{forward.1} parent=1 // pred_fallthru
      _
    // Predicated region
    $region26: #{forward.1} parent=1 // pred_check
      _
    $region27: #{forward.1} parent=1 // pred_check_branch
      %89 = sbr.rel (0) target = $region29
    $region28: #{forward.1} parent=1 // pred_region
      _
    $region29: #{forward.1} parent=1 // pred_fallthru
      _
    // Predicated region
    $region30: #{forward.1} parent=1 // pred_check
      _
    $region31: #{forward.1} parent=1 // pred_check_branch
      %91 = sbr.rel (0) target = $region33
    $region32: #{forward.1} parent=1 // pred_region
      _
    $region33: #{forward.1} parent=1 // pred_fallthru
      _
    // Predicated region
    $region34: #{forward.1} parent=1 // pred_check
      _
    $region35: #{forward.1} parent=1 // pred_check_branch
      %93 = sbr.rel (0) target = $region37
    $region36: #{forward.1} parent=1 // pred_region
      _
    $region37: #{forward.1} parent=1 // pred_fallthru
      _
    // Predicated region
    $region38: #{forward.1} parent=1 // pred_check
      _
    $region39: #{forward.1} parent=1 // pred_check_branch
      %95 = sbr.rel (0) target = $region41
    $region40: #{forward.1} parent=1 // pred_region
      _
    $region41: #{forward.1} parent=1 // pred_fallthru
      _
    // Predicated region
    $region42: #{forward.1} parent=1 // pred_check
      _
    $region43: #{forward.1} parent=1 // pred_check_branch
      %97 = sbr.rel (0) target = $region45
    $region44: #{forward.1} parent=1 // pred_region
      _
    $region45: #{forward.1} parent=1 // pred_fallthru
      _
    // Predicated region
    $region46: #{forward.1} parent=1 // pred_check
      _
    $region47: #{forward.1} parent=1 // pred_check_branch
      %99 = sbr.rel (0) target = $region49
    $region48: #{forward.1} parent=1 // pred_region
      %s101 = ssub.s32 512, 512
      %102 = vsyncadd [#allocation12], %s101
      %s103 = sshll.u32 [#allocation13], 4
      %s104 = int_to_ptr.vmem [resolvable:$true] %s103
      %109 = dma.hbm_to_vmem [thread:$0]  %s11, 512, %s104, [#allocation12], 128, 128, 8
    $region49: #{forward.1} parent=1 // pred_fallthru
      _
    // Predicated region
    $region50: #{forward.1} parent=1 // pred_check
      _
    $region51: #{forward.1} parent=1 // pred_check_branch
      %111 = sbr.rel (0) target = $region53
    $region52: #{forward.1} parent=1 // pred_region
      %s113 = ssub.s32 16, 16
      %114 = vsyncadd [#allocation15], %s113
      %s116 = sshll.u32 [#allocation14], 4
      %s117 = int_to_ptr.vmem [resolvable:$true] %s116
      %119 = dma.hbm_to_vmem [thread:$0]  %s12, 16, %s117, [#allocation15]
    $region53: #{forward.1} parent=1 // pred_fallthru
      _
    // Predicated region
    $region54: #{forward.1} parent=1 // pred_check
      _
    $region55: #{forward.1} parent=1 // pred_check_branch
      %121 = sbr.rel (0) target = $region57
    $region56: #{forward.1} parent=1 // pred_region
      %s123 = ssub.s32 1024, 1024
      %124 = vsyncadd [#allocation15], %s123
      %s125 = sshll.u32 [#allocation16], 4
      %s126 = int_to_ptr.vmem [resolvable:$true] %s125
      %131 = dma.hbm_to_vmem [thread:$0]  %s13, 1024, %s126, [#allocation15], 128, 128, 8
    $region57: #{forward.1} parent=1 // pred_fallthru
      _
    // Predicated region
    $region58: #{forward.1} parent=1 // pred_check
      _
    $region59: #{forward.1} parent=1 // pred_check_branch
      %133 = sbr.rel (0) target = $region61
    $region60: #{forward.1} parent=1 // pred_region
      %s135 = ssub.s32 16, 16
      %136 = vsyncadd [#allocation18], %s135
      %s138 = sshll.u32 [#allocation17], 4
      %s139 = int_to_ptr.vmem [resolvable:$true] %s138
      %141 = dma.hbm_to_vmem [thread:$0]  %s14, 16, %s139, [#allocation18]
    $region61: #{forward.1} parent=1 // pred_fallthru
      _
    // Predicated region
    $region62: #{forward.1} parent=1 // pred_check
      _
    $region63: #{forward.1} parent=1 // pred_check_branch
      %143 = sbr.rel (0) target = $region65
    $region64: #{forward.1} parent=1 // pred_region
      _
    $region65: #{forward.1} parent=1 // pred_fallthru
      _
    // Predicated region
    $region66: #{forward.1} parent=1 // pred_check
      _
    $region67: #{forward.1} parent=1 // pred_check_branch
      %145 = sbr.rel (0) target = $region69
    $region68: #{forward.1} parent=1 // pred_region
      _
    $region69: #{forward.1} parent=1 // pred_fallthru
      _
    // Predicated region
    $region70: #{forward.1} parent=1 // pred_check
      _
    $region71: #{forward.1} parent=1 // pred_check_branch
      %147 = sbr.rel (0) target = $region73
    $region72: #{forward.1} parent=1 // pred_region
      _
    $region73: #{forward.1} parent=1 // pred_fallthru
      _
    // Predicated region
    $region74: #{forward.1} parent=1 // pred_check
      _
    $region75: #{forward.1} parent=1 // pred_check_branch
      %149 = sbr.rel (0) target = $region77
    $region76: #{forward.1} parent=1 // pred_region
      _
    $region77: #{forward.1} parent=1 // pred_fallthru
      _
    // Predicated region
    $region78: #{forward.1} parent=1 // pred_check
      _
    $region79: #{forward.1} parent=1 // pred_check_branch
      %151 = sbr.rel (0) target = $region81
    $region80: #{forward.1} parent=1 // pred_region
      %152 = dma.done [#allocation6], 256
    $region81: #{forward.1} parent=1 // pred_fallthru
      _
    // Predicated region
    $region82: #{forward.1} parent=1 // pred_check
      _
    $region83: #{forward.1} parent=1 // pred_check_branch
      %154 = sbr.rel (0) target = $region85
    $region84: #{forward.1} parent=1 // pred_region
      %155 = dma.done [#allocation9], 512
    $region85: #{forward.1} parent=1 // pred_fallthru
      _
    // Predicated region
    $region86: #{forward.1} parent=1 // pred_check
      _
    $region87: #{forward.1} parent=1 // pred_check_branch
      %157 = sbr.rel (0) target = $region89
    $region88: #{forward.1} parent=1 // pred_region
      %158 = dma.done [#allocation9], 256
    $region89: #{forward.1} parent=1 // pred_fallthru
      _
    // Predicated region
    $region90: #{forward.1} parent=1 // pred_check
      _
    $region91: #{forward.1} parent=1 // pred_check_branch
      %160 = sbr.rel (0) target = $region93
    $region92: #{forward.1} parent=1 // pred_region
      %161 = dma.done [#allocation12], 512
    $region93: #{forward.1} parent=1 // pred_fallthru
      _
    // Predicated region
    $region94: #{forward.1} parent=1 // pred_check
      _
    $region95: #{forward.1} parent=1 // pred_check_branch
      %163 = sbr.rel (0) target = $region97
    $region96: #{forward.1} parent=1 // pred_region
      %164 = dma.done [#allocation12], 512
    $region97: #{forward.1} parent=1 // pred_fallthru
      _
    // Predicated region
    $region98: #{forward.1} parent=1 // pred_check
      _
    $region99: #{forward.1} parent=1 // pred_check_branch
      %166 = sbr.rel (0) target = $region101
    $region100: #{forward.1} parent=1 // pred_region
      %167 = dma.done [#allocation15], 16
    $region101: #{forward.1} parent=1 // pred_fallthru
      _
    // Predicated region
    $region102: #{forward.1} parent=1 // pred_check
      _
    $region103: #{forward.1} parent=1 // pred_check_branch
      %169 = sbr.rel (0) target = $region105
    $region104: #{forward.1} parent=1 // pred_region
      %170 = dma.done [#allocation15], 1024
    $region105: #{forward.1} parent=1 // pred_fallthru
      _
    // Predicated region
    $region106: #{forward.1} parent=1 // pred_check
      _
    $region107: #{forward.1} parent=1 // pred_check_branch
      %172 = sbr.rel (0) target = $region109
    $region108: #{forward.1} parent=1 // pred_region
      %173 = dma.done [#allocation18], 16
    $region109: #{forward.1} parent=1 // pred_fallthru
      _
    %v174 = vld [vmem:[%s0] sm:$0x3]
    %v175 = vld [vmem:[%s0 + $0x2] sm:$0x3]
    %v176 = vld [vmem:[%s0 + $0x4] sm:$0x3]
    %v177 = vld [vmem:[%s0 + $0x6] sm:$0x3]
    %v178 = vld [vmem:[%s0 + $0x8] sm:$0x3]
    %v179 = vld [vmem:[%s0 + $0xa] sm:$0x3]
    %v180 = vld [vmem:[%s0 + $0xc] sm:$0x3]
    %v181 = vld [vmem:[%s0 + $0xe] sm:$0x3]
    %v182 = vld [vmem:[#allocation5] sm:$0xff]
    %v183 = vld [vmem:[#allocation5 + $0x8] sm:$0xff]
    %v184 = vld [vmem:[%s3] sm:$0x1]
    %v186 = vlaneseq
    %v187 = vshrl.u32 %v186, 7
    %v188 = vsub.s32 0, %v187
    %v189 = vrot.slane %v184, %v188
    %v199 = vcombine.low %v174, %v175
    %v200 = vcombine.low %v176, %v177
    %v202 = vunpack.c.l.s4 1983009808
    %v203 = vunpack.c.0.s8 %v202
    %v204 = vlaneseq
    %v205 = vshrl.u32 %v204, 7
    %v206 = vsub.s32 %v203, %v205
    %v207 = vrot.slane %v199, %v206
    %v209 = vunpack.c.l.s4 1983009808
    %v210 = vunpack.c.0.s8 %v209
    %v211 = vlaneseq
    %v212 = vshrl.u32 %v211, 7
    %v213 = vsub.s32 %v210, %v212
    %v214 = vrot.slane %v200, %v213
    %v215 = vcombine.low %v207, %v214
    %v216 = vcombine.low %v178, %v179
    %v217 = vcombine.low %v180, %v181
    %v219 = vunpack.c.l.s4 1983009808
    %v220 = vunpack.c.0.s8 %v219
    %v221 = vlaneseq
    %v222 = vshrl.u32 %v221, 7
    %v223 = vsub.s32 %v220, %v222
    %v224 = vrot.slane %v216, %v223
    %v226 = vunpack.c.l.s4 1983009808
    %v227 = vunpack.c.0.s8 %v226
    %v228 = vlaneseq
    %v229 = vshrl.u32 %v228, 7
    %v230 = vsub.s32 %v227, %v229
    %v231 = vrot.slane %v217, %v230
    %v232 = vcombine.low %v224, %v231
    %vm233 = vcmask 130048
    %v234 = vsel %vm233, %v215, 0
    %v236 = vsel %vm233, %v232, 0
    %238 = vmatprep.subr.mxu0 0.0
    %239 = vmatpush1.msra.mxu0 %v182
    %240 = vmatprep.subr.mxu0 0.0
    %241 = vmatpush1.msra.mxu0 %v183
    %242 = vmatprep.subr.mxu0 0.0
    %243 = vmatpush1.msra.mxu0 0.0
    %244 = vmatprep.subr.mxu0 0.0
    %245 = vmatpush1.msra.mxu0 0.0
    %246 = vmatprep.subr.mxu0 0.0
    %247 = vmatpush1.msra.mxu0 0.0
    %248 = vmatprep.subr.mxu0 0.0
    %249 = vmatpush1.msra.mxu0 0.0
    %250 = vmatprep.subr.mxu0 0.0
    %251 = vmatpush1.msra.mxu0 0.0
    %252 = vmatprep.subr.mxu0 0.0
    %253 = vmatpush1.msra.mxu0 0.0
    %254 = vmatprep.subr.mxu0 0.0
    %255 = vmatpush1.msra.mxu0 0.0
    %256 = vmatprep.subr.mxu0 0.0
    %257 = vmatpush1.msra.mxu0 0.0
    %258 = vmatprep.subr.mxu0 0.0
    %259 = vmatpush1.msra.mxu0 0.0
    %260 = vmatprep.subr.mxu0 0.0
    %261 = vmatpush1.msra.mxu0 0.0
    %262 = vmatprep.subr.mxu0 0.0
    %263 = vmatpush1.msra.mxu0 0.0
    %264 = vmatprep.subr.mxu0 0.0
    %265 = vmatpush1.msra.mxu0 0.0
    %266 = vmatprep.subr.mxu0 0.0
    %267 = vmatpush1.msra.mxu0 0.0
    %268 = vmatprep.subr.mxu0 0.0
    %269 = vmatpush1.msra.mxu0 0.0
    %270 = vmatprep.subr.mxu0 0.0
    %271 = vmatpush1.msra.mxu0 0.0
    %272 = vmatprep.subr.mxu0 0.0
    %273 = vmatpush1.msra.mxu0 0.0
    %274 = vmatprep.subr.mxu0 0.0
    %275 = vmatpush1.msra.mxu0 0.0
    %276 = vmatprep.subr.mxu0 0.0
    %277 = vmatpush1.msra.mxu0 0.0
    %278 = vmatprep.subr.mxu0 0.0
    %279 = vmatpush1.msra.mxu0 0.0
    %280 = vmatprep.subr.mxu0 0.0
    %281 = vmatpush1.msra.mxu0 0.0
    %282 = vmatprep.subr.mxu0 0.0
    %283 = vmatpush1.msra.mxu0 0.0
    %284 = vmatprep.subr.mxu0 0.0
    %285 = vmatpush1.msra.mxu0 0.0
    %286 = vmatprep.subr.mxu0 0.0
    %287 = vmatpush1.msra.mxu0 0.0
    %288 = vmatprep.subr.mxu0 0.0
    %289 = vmatpush1.msra.mxu0 0.0
    %290 = vmatprep.subr.mxu0 0.0
    %291 = vmatpush1.msra.mxu0 0.0
    %292 = vmatprep.subr.mxu0 0.0
    %293 = vmatpush1.msra.mxu0 0.0
    %294 = vmatprep.subr.mxu0 0.0
    %295 = vmatpush1.msra.mxu0 0.0
    %296 = vmatprep.subr.mxu0 0.0
    %297 = vmatpush1.msra.mxu0 0.0
    %298 = vmatprep.subr.mxu0 0.0
    %299 = vmatpush1.msra.mxu0 0.0
    %300 = vmatprep.subr.mxu0 0.0
    %301 = vmatpush1.msra.mxu0 0.0
    %302 = vmatprep.mubr.f32.mxu0 0.0
    %303 = vmatmul.mubr.f32.gmra.mrb[0].mxu0 %v234
    %v304 = vpop.f32.mrb[0].mxu0
    %v305 = vadd.f32 %v189, %v304
    %v306 = vpop.f32.mrb[0].mxu0
    %307 = vmatprep.mubr.f32.mxu0 0.0
    %308 = vmatmul.mubr.f32.gmra.mrb[0].mxu0 %v236
    %v309 = vpop.f32.mrb[0].mxu0
    %v310 = vadd.f32 %v189, %v309
    %v311 = vpop.f32.mrb[0].mxu0
    %312 = vdwg.mxu0
    %v313 = vld [vmem:[#allocation10] sm:$0xff]
    %v314 = vld [vmem:[#allocation10 + $0x8] sm:$0xff]
    %v315 = vld [vmem:[%s6] sm:$0x1]
    %v317 = vlaneseq
    %v318 = vshrl.u32 %v317, 7
    %v319 = vsub.s32 0, %v318
    %v320 = vrot.slane %v315, %v319
    %322 = vmatprep.subr.mxu0 0.0
    %323 = vmatpush1.msra.mxu0 %v313
    %324 = vmatprep.subr.mxu0 0.0
    %325 = vmatpush1.msra.mxu0 %v314
    %326 = vmatprep.subr.mxu0 0.0
    %327 = vmatpush1.msra.mxu0 0.0
    %328 = vmatprep.subr.mxu0 0.0
    %329 = vmatpush1.msra.mxu0 0.0
    %330 = vmatprep.subr.mxu0 0.0
    %331 = vmatpush1.msra.mxu0 0.0
    %332 = vmatprep.subr.mxu0 0.0
    %333 = vmatpush1.msra.mxu0 0.0
    %334 = vmatprep.subr.mxu0 0.0
    %335 = vmatpush1.msra.mxu0 0.0
    %336 = vmatprep.subr.mxu0 0.0
    %337 = vmatpush1.msra.mxu0 0.0
    %338 = vmatprep.subr.mxu0 0.0
    %339 = vmatpush1.msra.mxu0 0.0
    %340 = vmatprep.subr.mxu0 0.0
    %341 = vmatpush1.msra.mxu0 0.0
    %342 = vmatprep.subr.mxu0 0.0
    %343 = vmatpush1.msra.mxu0 0.0
    %344 = vmatprep.subr.mxu0 0.0
    %345 = vmatpush1.msra.mxu0 0.0
    %346 = vmatprep.subr.mxu0 0.0
    %347 = vmatpush1.msra.mxu0 0.0
    %348 = vmatprep.subr.mxu0 0.0
    %349 = vmatpush1.msra.mxu0 0.0
    %350 = vmatprep.subr.mxu0 0.0
    %351 = vmatpush1.msra.mxu0 0.0
    %352 = vmatprep.subr.mxu0 0.0
    %353 = vmatpush1.msra.mxu0 0.0
    %354 = vmatprep.subr.mxu0 0.0
    %355 = vmatpush1.msra.mxu0 0.0
    %356 = vmatprep.subr.mxu0 0.0
    %357 = vmatpush1.msra.mxu0 0.0
    %358 = vmatprep.subr.mxu0 0.0
    %359 = vmatpush1.msra.mxu0 0.0
    %360 = vmatprep.subr.mxu0 0.0
    %361 = vmatpush1.msra.mxu0 0.0
    %362 = vmatprep.subr.mxu0 0.0
    %363 = vmatpush1.msra.mxu0 0.0
    %364 = vmatprep.subr.mxu0 0.0
    %365 = vmatpush1.msra.mxu0 0.0
    %366 = vmatprep.subr.mxu0 0.0
    %367 = vmatpush1.msra.mxu0 0.0
    %368 = vmatprep.subr.mxu0 0.0
    %369 = vmatpush1.msra.mxu0 0.0
    %370 = vmatprep.subr.mxu0 0.0
    %371 = vmatpush1.msra.mxu0 0.0
    %372 = vmatprep.subr.mxu0 0.0
    %373 = vmatpush1.msra.mxu0 0.0
    %374 = vmatprep.subr.mxu0 0.0
    %375 = vmatpush1.msra.mxu0 0.0
    %376 = vmatprep.subr.mxu0 0.0
    %377 = vmatpush1.msra.mxu0 0.0
    %378 = vmatprep.subr.mxu0 0.0
    %379 = vmatpush1.msra.mxu0 0.0
    %380 = vmatprep.subr.mxu0 0.0
    %381 = vmatpush1.msra.mxu0 0.0
    %382 = vmatprep.subr.mxu0 0.0
    %383 = vmatpush1.msra.mxu0 0.0
    %384 = vmatprep.subr.mxu0 0.0
    %385 = vmatpush1.msra.mxu0 0.0
    %386 = vmatprep.mubr.f32.mxu0 0.0
    %387 = vmatmul.mubr.f32.gmra.mrb[0].mxu0 %v234
    %v388 = vpop.f32.mrb[0].mxu0
    %v389 = vadd.f32 %v320, %v388
    %v390 = vpop.f32.mrb[0].mxu0
    %391 = vmatprep.mubr.f32.mxu0 0.0
    %392 = vmatmul.mubr.f32.gmra.mrb[0].mxu0 %v236
    %v393 = vpop.f32.mrb[0].mxu0
    %v394 = vadd.f32 %v320, %v393
    %v395 = vpop.f32.mrb[0].mxu0
    %396 = vdwg.mxu0
    %v397 = vld [vmem:[#allocation8] sm:$0xff]
    %v398 = vld [vmem:[#allocation8 + $0x8] sm:$0xff]
    %v399 = vld [vmem:[#allocation8 + $0x10] sm:$0xff]
    %v400 = vld [vmem:[#allocation8 + $0x18] sm:$0xff]
    %v401 = vld [vmem:[#allocation11] sm:$0xff]
    %v402 = vld [vmem:[#allocation11 + $0x8] sm:$0xff]
    %v403 = vld [vmem:[#allocation11 + $0x10] sm:$0xff]
    %v404 = vld [vmem:[#allocation11 + $0x18] sm:$0xff]
    %vm405 = vcmask 261120
    %v407 = vsel %vm405, 0.0, 0
    %409 = vmatprep.subr.mxu0 0.0
    %410 = vmatpush1.msra.mxu0 %v397
    %411 = vmatprep.subr.mxu0 0.0
    %412 = vmatpush1.msra.mxu0 %v398
    %413 = vmatprep.subr.mxu0 0.0
    %414 = vmatpush1.msra.mxu0 %v399
    %415 = vmatprep.subr.mxu0 0.0
    %416 = vmatpush1.msra.mxu0 %v400
    %417 = vmatprep.subr.mxu0 0.0
    %418 = vmatpush1.msra.mxu0 0.0
    %419 = vmatprep.subr.mxu0 0.0
    %420 = vmatpush1.msra.mxu0 0.0
    %421 = vmatprep.subr.mxu0 0.0
    %422 = vmatpush1.msra.mxu0 0.0
    %423 = vmatprep.subr.mxu0 0.0
    %424 = vmatpush1.msra.mxu0 0.0
    %425 = vmatprep.subr.mxu0 0.0
    %426 = vmatpush1.msra.mxu0 0.0
    %427 = vmatprep.subr.mxu0 0.0
    %428 = vmatpush1.msra.mxu0 0.0
    %429 = vmatprep.subr.mxu0 0.0
    %430 = vmatpush1.msra.mxu0 0.0
    %431 = vmatprep.subr.mxu0 0.0
    %432 = vmatpush1.msra.mxu0 0.0
    %433 = vmatprep.subr.mxu0 0.0
    %434 = vmatpush1.msra.mxu0 0.0
    %435 = vmatprep.subr.mxu0 0.0
    %436 = vmatpush1.msra.mxu0 0.0
    %437 = vmatprep.subr.mxu0 0.0
    %438 = vmatpush1.msra.mxu0 0.0
    %439 = vmatprep.subr.mxu0 0.0
    %440 = vmatpush1.msra.mxu0 0.0
    %441 = vmatprep.subr.mxu0 0.0
    %442 = vmatpush1.msra.mxu0 0.0
    %443 = vmatprep.subr.mxu0 0.0
    %444 = vmatpush1.msra.mxu0 0.0
    %445 = vmatprep.subr.mxu0 0.0
    %446 = vmatpush1.msra.mxu0 0.0
    %447 = vmatprep.subr.mxu0 0.0
    %448 = vmatpush1.msra.mxu0 0.0
    %449 = vmatprep.subr.mxu0 0.0
    %450 = vmatpush1.msra.mxu0 0.0
    %451 = vmatprep.subr.mxu0 0.0
    %452 = vmatpush1.msra.mxu0 0.0
    %453 = vmatprep.subr.mxu0 0.0
    %454 = vmatpush1.msra.mxu0 0.0
    %455 = vmatprep.subr.mxu0 0.0
    %456 = vmatpush1.msra.mxu0 0.0
    %457 = vmatprep.subr.mxu0 0.0
    %458 = vmatpush1.msra.mxu0 0.0
    %459 = vmatprep.subr.mxu0 0.0
    %460 = vmatpush1.msra.mxu0 0.0
    %461 = vmatprep.subr.mxu0 0.0
    %462 = vmatpush1.msra.mxu0 0.0
    %463 = vmatprep.subr.mxu0 0.0
    %464 = vmatpush1.msra.mxu0 0.0
    %465 = vmatprep.subr.mxu0 0.0
    %466 = vmatpush1.msra.mxu0 0.0
    %467 = vmatprep.subr.mxu0 0.0
    %468 = vmatpush1.msra.mxu0 0.0
    %469 = vmatprep.subr.mxu0 0.0
    %470 = vmatpush1.msra.mxu0 0.0
    %471 = vmatprep.subr.mxu0 0.0
    %472 = vmatpush1.msra.mxu0 0.0
    %473 = vmatprep.mubr.f32.mxu0 0.0
    %474 = vmatmul.mubr.f32.gmra.mrb[0].mxu0 %v407
    %v475 = vpop.f32.mrb[0].mxu0
    %v476 = vadd.f32 0.0, %v475
    %v477 = vpop.f32.mrb[0].mxu0
    %478 = vdwg.mxu0
    %v479 = vadd.f32 %v305, %v476
    %v480 = vxor.u32 %v479, 2147483648
    %v481 = vmul.f32 %v480, 1.442695
    %v482 = vpow.pop %v481
    %v483 = vadd.f32 %v482, 1.0
    %v484 = vrcp.pop %v483
    %v485 = vmul.f32 1.0, %v484
    %v486 = vtanh.pop %v479
    %v487 = vmul.f32 %v485, 0.0
    %489 = vrot.lane.b32.xlu0 %v486, 64
    %v490 = vpop.permute.xlu0 %489
    %v492 = vmul.f32 %v485, %v490
    %494 = vrot.lane.b32.xlu0 %v492, 32
    %v495 = vpop.permute.xlu0 %494
    %v497 = vadd.f32 %v487, %v495
    %v498 = vtanh.pop %v497
    %500 = vrot.lane.b32.xlu0 %v498, 64
    %v501 = vpop.permute.xlu0 %500
    %v503 = vmul.f32 %v485, %v501
    %504 = vmatprep.subr.mxu0 0.0
    %505 = vmatpush1.msra.mxu0 %v401
    %506 = vmatprep.subr.mxu0 0.0
    %507 = vmatpush1.msra.mxu0 %v402
    %508 = vmatprep.subr.mxu0 0.0
    %509 = vmatpush1.msra.mxu0 %v403
    %510 = vmatprep.subr.mxu0 0.0
    %511 = vmatpush1.msra.mxu0 %v404
    %512 = vmatprep.subr.mxu0 0.0
    %513 = vmatpush1.msra.mxu0 0.0
    %514 = vmatprep.subr.mxu0 0.0
    %515 = vmatpush1.msra.mxu0 0.0
    %516 = vmatprep.subr.mxu0 0.0
    %517 = vmatpush1.msra.mxu0 0.0
    %518 = vmatprep.subr.mxu0 0.0
    %519 = vmatpush1.msra.mxu0 0.0
    %520 = vmatprep.subr.mxu0 0.0
    %521 = vmatpush1.msra.mxu0 0.0
    %522 = vmatprep.subr.mxu0 0.0
    %523 = vmatpush1.msra.mxu0 0.0
    %524 = vmatprep.subr.mxu0 0.0
    %525 = vmatpush1.msra.mxu0 0.0
    %526 = vmatprep.subr.mxu0 0.0
    %527 = vmatpush1.msra.mxu0 0.0
    %528 = vmatprep.subr.mxu0 0.0
    %529 = vmatpush1.msra.mxu0 0.0
    %530 = vmatprep.subr.mxu0 0.0
    %531 = vmatpush1.msra.mxu0 0.0
    %532 = vmatprep.subr.mxu0 0.0
    %533 = vmatpush1.msra.mxu0 0.0
    %534 = vmatprep.subr.mxu0 0.0
    %535 = vmatpush1.msra.mxu0 0.0
    %536 = vmatprep.subr.mxu0 0.0
    %537 = vmatpush1.msra.mxu0 0.0
    %538 = vmatprep.subr.mxu0 0.0
    %539 = vmatpush1.msra.mxu0 0.0
    %540 = vmatprep.subr.mxu0 0.0
    %541 = vmatpush1.msra.mxu0 0.0
    %542 = vmatprep.subr.mxu0 0.0
    %543 = vmatpush1.msra.mxu0 0.0
    %544 = vmatprep.subr.mxu0 0.0
    %545 = vmatpush1.msra.mxu0 0.0
    %546 = vmatprep.subr.mxu0 0.0
    %547 = vmatpush1.msra.mxu0 0.0
    %548 = vmatprep.subr.mxu0 0.0
    %549 = vmatpush1.msra.mxu0 0.0
    %550 = vmatprep.subr.mxu0 0.0
    %551 = vmatpush1.msra.mxu0 0.0
    %552 = vmatprep.subr.mxu0 0.0
    %553 = vmatpush1.msra.mxu0 0.0
    %554 = vmatprep.subr.mxu0 0.0
    %555 = vmatpush1.msra.mxu0 0.0
    %556 = vmatprep.subr.mxu0 0.0
    %557 = vmatpush1.msra.mxu0 0.0
    %558 = vmatprep.subr.mxu0 0.0
    %559 = vmatpush1.msra.mxu0 0.0
    %560 = vmatprep.subr.mxu0 0.0
    %561 = vmatpush1.msra.mxu0 0.0
    %562 = vmatprep.subr.mxu0 0.0
    %563 = vmatpush1.msra.mxu0 0.0
    %564 = vmatprep.subr.mxu0 0.0
    %565 = vmatpush1.msra.mxu0 0.0
    %566 = vmatprep.subr.mxu0 0.0
    %567 = vmatpush1.msra.mxu0 0.0
    %568 = vmatprep.mubr.f32.mxu0 0.0
    %569 = vmatmul.mubr.f32.gmra.mrb[0].mxu0 %v407
    %v570 = vpop.f32.mrb[0].mxu0
    %v571 = vadd.f32 0.0, %v570
    %v572 = vpop.f32.mrb[0].mxu0
    %573 = vdwg.mxu0
    %v575 = vrot.slane %v571, 2
    %v577 = vadd.f32 %v394, %v575
    %v578 = vxor.u32 %v577, 2147483648
    %v579 = vmul.f32 %v578, 1.442695
    %v580 = vpow.pop %v579
    %v581 = vadd.f32 %v580, 1.0
    %v582 = vrcp.pop %v581
    %v583 = vmul.f32 1.0, %v582
    %v584 = vtanh.pop %v577
    %v585 = vmul.f32 %v583, 0.0
    %587 = vrot.lane.b32.xlu0 %v584, 64
    %v588 = vpop.permute.xlu0 %587
    %v590 = vmul.f32 %v583, %v588
    %592 = vrot.lane.b32.xlu0 %v590, 32
    %v593 = vpop.permute.xlu0 %592
    %v595 = vadd.f32 %v585, %v593
    %v596 = vtanh.pop %v595
    %598 = vrot.lane.b32.xlu0 %v596, 64
    %v599 = vpop.permute.xlu0 %598
    %v601 = vmul.f32 %v583, %v599
    %603 = vrot.lane.b32.xlu0 %v503, 32
    %v604 = vpop.permute.xlu0 %603
    %vm606 = vcmask 254976
    %607 = vst.msk [vmem:[#allocation2] sm:$0x3] %vm606, %v604
    %609 = vrot.lane.b32.xlu0 %v601, 32
    %v610 = vpop.permute.xlu0 %609
    %s612 = scalar_lea.vmem [#allocation3], 14
    %vm613 = vcmask 261126
    %614 = vst.msk [vmem:[%s612 - $0x6] sm:$0xc0] %vm613, %v610
    %v615 = vsel %vm405, %v604, 0
    %617 = vmatprep.subr.mxu0 0.0
    %618 = vmatpush1.msra.mxu0 %v397
    %619 = vmatprep.subr.mxu0 0.0
    %620 = vmatpush1.msra.mxu0 %v398
    %621 = vmatprep.subr.mxu0 0.0
    %622 = vmatpush1.msra.mxu0 %v399
    %623 = vmatprep.subr.mxu0 0.0
    %624 = vmatpush1.msra.mxu0 %v400
    %625 = vmatprep.subr.mxu0 0.0
    %626 = vmatpush1.msra.mxu0 0.0
    %627 = vmatprep.subr.mxu0 0.0
    %628 = vmatpush1.msra.mxu0 0.0
    %629 = vmatprep.subr.mxu0 0.0
    %630 = vmatpush1.msra.mxu0 0.0
    %631 = vmatprep.subr.mxu0 0.0
    %632 = vmatpush1.msra.mxu0 0.0
    %633 = vmatprep.subr.mxu0 0.0
    %634 = vmatpush1.msra.mxu0 0.0
    %635 = vmatprep.subr.mxu0 0.0
    %636 = vmatpush1.msra.mxu0 0.0
    %637 = vmatprep.subr.mxu0 0.0
    %638 = vmatpush1.msra.mxu0 0.0
    %639 = vmatprep.subr.mxu0 0.0
    %640 = vmatpush1.msra.mxu0 0.0
    %641 = vmatprep.subr.mxu0 0.0
    %642 = vmatpush1.msra.mxu0 0.0
    %643 = vmatprep.subr.mxu0 0.0
    %644 = vmatpush1.msra.mxu0 0.0
    %645 = vmatprep.subr.mxu0 0.0
    %646 = vmatpush1.msra.mxu0 0.0
    %647 = vmatprep.subr.mxu0 0.0
    %648 = vmatpush1.msra.mxu0 0.0
    %649 = vmatprep.subr.mxu0 0.0
    %650 = vmatpush1.msra.mxu0 0.0
    %651 = vmatprep.subr.mxu0 0.0
    %652 = vmatpush1.msra.mxu0 0.0
    %653 = vmatprep.subr.mxu0 0.0
    %654 = vmatpush1.msra.mxu0 0.0
    %655 = vmatprep.subr.mxu0 0.0
    %656 = vmatpush1.msra.mxu0 0.0
    %657 = vmatprep.subr.mxu0 0.0
    %658 = vmatpush1.msra.mxu0 0.0
    %659 = vmatprep.subr.mxu0 0.0
    %660 = vmatpush1.msra.mxu0 0.0
    %661 = vmatprep.subr.mxu0 0.0
    %662 = vmatpush1.msra.mxu0 0.0
    %663 = vmatprep.subr.mxu0 0.0
    %664 = vmatpush1.msra.mxu0 0.0
    %665 = vmatprep.subr.mxu0 0.0
    %666 = vmatpush1.msra.mxu0 0.0
    %667 = vmatprep.subr.mxu0 0.0
    %668 = vmatpush1.msra.mxu0 0.0
    %669 = vmatprep.subr.mxu0 0.0
    %670 = vmatpush1.msra.mxu0 0.0
    %671 = vmatprep.subr.mxu0 0.0
    %672 = vmatpush1.msra.mxu0 0.0
    %673 = vmatprep.subr.mxu0 0.0
    %674 = vmatpush1.msra.mxu0 0.0
    %675 = vmatprep.subr.mxu0 0.0
    %676 = vmatpush1.msra.mxu0 0.0
    %677 = vmatprep.subr.mxu0 0.0
    %678 = vmatpush1.msra.mxu0 0.0
    %679 = vmatprep.subr.mxu0 0.0
    %680 = vmatpush1.msra.mxu0 0.0
    %681 = vmatprep.mubr.f32.mxu0 0.0
    %682 = vmatmul.mubr.f32.gmra.mrb[0].mxu0 %v615
    %v683 = vpop.f32.mrb[0].mxu0
    %v684 = vadd.f32 0.0, %v683
    %v685 = vpop.f32.mrb[0].mxu0
    %686 = vdwg.mxu0
    %v688 = vrot.slane %v684, 6
    %v690 = vadd.f32 %v305, %v688
    %v691 = vxor.u32 %v690, 2147483648
    %v692 = vmul.f32 %v691, 1.442695
    %v693 = vpow.pop %v692
    %v694 = vadd.f32 %v693, 1.0
    %v695 = vrcp.pop %v694
    %v696 = vmul.f32 1.0, %v695
    %v697 = vtanh.pop %v690
    %v699 = vrot.slane %v497, 6
    %v701 = vmul.f32 %v696, %v699
    %703 = vrot.lane.b32.xlu0 %v697, 64
    %v704 = vpop.permute.xlu0 %703
    %v706 = vmul.f32 %v696, %v704
    %708 = vrot.lane.b32.xlu0 %v706, 32
    %v709 = vpop.permute.xlu0 %708
    %v711 = vadd.f32 %v701, %v709
    %v712 = vtanh.pop %v711
    %714 = vrot.lane.b32.xlu0 %v712, 64
    %v715 = vpop.permute.xlu0 %714
    %v717 = vmul.f32 %v696, %v715
    %v718 = vrot.slane %v601, 6
    %719 = vrot.lane.b32.xlu0 %v718, 32
    %v720 = vpop.permute.xlu0 %719
    %v721 = vsel %vm405, %v720, 0
    %723 = vmatprep.subr.mxu0 0.0
    %724 = vmatpush1.msra.mxu0 %v401
    %725 = vmatprep.subr.mxu0 0.0
    %726 = vmatpush1.msra.mxu0 %v402
    %727 = vmatprep.subr.mxu0 0.0
    %728 = vmatpush1.msra.mxu0 %v403
    %729 = vmatprep.subr.mxu0 0.0
    %730 = vmatpush1.msra.mxu0 %v404
    %731 = vmatprep.subr.mxu0 0.0
    %732 = vmatpush1.msra.mxu0 0.0
    %733 = vmatprep.subr.mxu0 0.0
    %734 = vmatpush1.msra.mxu0 0.0
    %735 = vmatprep.subr.mxu0 0.0
    %736 = vmatpush1.msra.mxu0 0.0
    %737 = vmatprep.subr.mxu0 0.0
    %738 = vmatpush1.msra.mxu0 0.0
    %739 = vmatprep.subr.mxu0 0.0
    %740 = vmatpush1.msra.mxu0 0.0
    %741 = vmatprep.subr.mxu0 0.0
    %742 = vmatpush1.msra.mxu0 0.0
    %743 = vmatprep.subr.mxu0 0.0
    %744 = vmatpush1.msra.mxu0 0.0
    %745 = vmatprep.subr.mxu0 0.0
    %746 = vmatpush1.msra.mxu0 0.0
    %747 = vmatprep.subr.mxu0 0.0
    %748 = vmatpush1.msra.mxu0 0.0
    %749 = vmatprep.subr.mxu0 0.0
    %750 = vmatpush1.msra.mxu0 0.0
    %751 = vmatprep.subr.mxu0 0.0
    %752 = vmatpush1.msra.mxu0 0.0
    %753 = vmatprep.subr.mxu0 0.0
    %754 = vmatpush1.msra.mxu0 0.0
    %755 = vmatprep.subr.mxu0 0.0
    %756 = vmatpush1.msra.mxu0 0.0
    %757 = vmatprep.subr.mxu0 0.0
    %758 = vmatpush1.msra.mxu0 0.0
    %759 = vmatprep.subr.mxu0 0.0
    %760 = vmatpush1.msra.mxu0 0.0
    %761 = vmatprep.subr.mxu0 0.0
    %762 = vmatpush1.msra.mxu0 0.0
    %763 = vmatprep.subr.mxu0 0.0
    %764 = vmatpush1.msra.mxu0 0.0
    %765 = vmatprep.subr.mxu0 0.0
    %766 = vmatpush1.msra.mxu0 0.0
    %767 = vmatprep.subr.mxu0 0.0
    %768 = vmatpush1.msra.mxu0 0.0
    %769 = vmatprep.subr.mxu0 0.0
    %770 = vmatpush1.msra.mxu0 0.0
    %771 = vmatprep.subr.mxu0 0.0
    %772 = vmatpush1.msra.mxu0 0.0
    %773 = vmatprep.subr.mxu0 0.0
    %774 = vmatpush1.msra.mxu0 0.0
    %775 = vmatprep.subr.mxu0 0.0
    %776 = vmatpush1.msra.mxu0 0.0
    %777 = vmatprep.subr.mxu0 0.0
    %778 = vmatpush1.msra.mxu0 0.0
    %779 = vmatprep.subr.mxu0 0.0
    %780 = vmatpush1.msra.mxu0 0.0
    %781 = vmatprep.subr.mxu0 0.0
    %782 = vmatpush1.msra.mxu0 0.0
    %783 = vmatprep.subr.mxu0 0.0
    %784 = vmatpush1.msra.mxu0 0.0
    %785 = vmatprep.subr.mxu0 0.0
    %786 = vmatpush1.msra.mxu0 0.0
    %787 = vmatprep.mubr.f32.mxu0 0.0
    %788 = vmatmul.mubr.f32.gmra.mrb[0].mxu0 %v721
    %v789 = vpop.f32.mrb[0].mxu0
    %v790 = vadd.f32 0.0, %v789
    %v791 = vpop.f32.mrb[0].mxu0
    %792 = vdwg.mxu0
    %v794 = vrot.slane %v790, 4
    %v796 = vadd.f32 %v394, %v794
    %v797 = vxor.u32 %v796, 2147483648
    %v798 = vmul.f32 %v797, 1.442695
    %v799 = vpow.pop %v798
    %v800 = vadd.f32 %v799, 1.0
    %v801 = vrcp.pop %v800
    %v802 = vmul.f32 1.0, %v801
    %v803 = vtanh.pop %v796
    %v805 = vrot.slane %v595, 2
    %v807 = vmul.f32 %v802, %v805
    %809 = vrot.lane.b32.xlu0 %v803, 64
    %v810 = vpop.permute.xlu0 %809
    %v812 = vmul.f32 %v802, %v810
    %814 = vrot.lane.b32.xlu0 %v812, 32
    %v815 = vpop.permute.xlu0 %814
    %v817 = vadd.f32 %v807, %v815
    %v818 = vtanh.pop %v817
    %820 = vrot.lane.b32.xlu0 %v818, 64
    %v821 = vpop.permute.xlu0 %820
    %v823 = vmul.f32 %v802, %v821
    %825 = vrot.lane.b32.xlu0 %v717, 32
    %v826 = vpop.permute.xlu0 %825
    %s828 = scalar_lea.vmem [#allocation2], 2
    %vm829 = vcmask 257026
    %830 = vst.msk [vmem:[%s828 - $0x2] sm:$0xc] %vm829, %v826
    %832 = vrot.lane.b32.xlu0 %v823, 32
    %v833 = vpop.permute.xlu0 %832
    %s835 = scalar_lea.vmem [#allocation3], 12
    %vm836 = vcmask 259076
    %837 = vst.msk [vmem:[%s835 - $0x4] sm:$0x30] %vm836, %v833
    %v838 = vrot.slane %v717, 2
    %839 = vrot.lane.b32.xlu0 %v838, 32
    %v840 = vpop.permute.xlu0 %839
    %v841 = vsel %vm405, %v840, 0
    %843 = vmatprep.subr.mxu0 0.0
    %844 = vmatpush1.msra.mxu0 %v397
    %845 = vmatprep.subr.mxu0 0.0
    %846 = vmatpush1.msra.mxu0 %v398
    %847 = vmatprep.subr.mxu0 0.0
    %848 = vmatpush1.msra.mxu0 %v399
    %849 = vmatprep.subr.mxu0 0.0
    %850 = vmatpush1.msra.mxu0 %v400
    %851 = vmatprep.subr.mxu0 0.0
    %852 = vmatpush1.msra.mxu0 0.0
    %853 = vmatprep.subr.mxu0 0.0
    %854 = vmatpush1.msra.mxu0 0.0
    %855 = vmatprep.subr.mxu0 0.0
    %856 = vmatpush1.msra.mxu0 0.0
    %857 = vmatprep.subr.mxu0 0.0
    %858 = vmatpush1.msra.mxu0 0.0
    %859 = vmatprep.subr.mxu0 0.0
    %860 = vmatpush1.msra.mxu0 0.0
    %861 = vmatprep.subr.mxu0 0.0
    %862 = vmatpush1.msra.mxu0 0.0
    %863 = vmatprep.subr.mxu0 0.0
    %864 = vmatpush1.msra.mxu0 0.0
    %865 = vmatprep.subr.mxu0 0.0
    %866 = vmatpush1.msra.mxu0 0.0
    %867 = vmatprep.subr.mxu0 0.0
    %868 = vmatpush1.msra.mxu0 0.0
    %869 = vmatprep.subr.mxu0 0.0
    %870 = vmatpush1.msra.mxu0 0.0
    %871 = vmatprep.subr.mxu0 0.0
    %872 = vmatpush1.msra.mxu0 0.0
    %873 = vmatprep.subr.mxu0 0.0
    %874 = vmatpush1.msra.mxu0 0.0
    %875 = vmatprep.subr.mxu0 0.0
    %876 = vmatpush1.msra.mxu0 0.0
    %877 = vmatprep.subr.mxu0 0.0
    %878 = vmatpush1.msra.mxu0 0.0
    %879 = vmatprep.subr.mxu0 0.0
    %880 = vmatpush1.msra.mxu0 0.0
    %881 = vmatprep.subr.mxu0 0.0
    %882 = vmatpush1.msra.mxu0 0.0
    %883 = vmatprep.subr.mxu0 0.0
    %884 = vmatpush1.msra.mxu0 0.0
    %885 = vmatprep.subr.mxu0 0.0
    %886 = vmatpush1.msra.mxu0 0.0
    %887 = vmatprep.subr.mxu0 0.0
    %888 = vmatpush1.msra.mxu0 0.0
    %889 = vmatprep.subr.mxu0 0.0
    %890 = vmatpush1.msra.mxu0 0.0
    %891 = vmatprep.subr.mxu0 0.0
    %892 = vmatpush1.msra.mxu0 0.0
    %893 = vmatprep.subr.mxu0 0.0
    %894 = vmatpush1.msra.mxu0 0.0
    %895 = vmatprep.subr.mxu0 0.0
    %896 = vmatpush1.msra.mxu0 0.0
    %897 = vmatprep.subr.mxu0 0.0
    %898 = vmatpush1.msra.mxu0 0.0
    %899 = vmatprep.subr.mxu0 0.0
    %900 = vmatpush1.msra.mxu0 0.0
    %901 = vmatprep.subr.mxu0 0.0
    %902 = vmatpush1.msra.mxu0 0.0
    %903 = vmatprep.subr.mxu0 0.0
    %904 = vmatpush1.msra.mxu0 0.0
    %905 = vmatprep.subr.mxu0 0.0
    %906 = vmatpush1.msra.mxu0 0.0
    %907 = vmatprep.mubr.f32.mxu0 0.0
    %908 = vmatmul.mubr.f32.gmra.mrb[0].mxu0 %v841
    %v909 = vpop.f32.mrb[0].mxu0
    %v910 = vadd.f32 0.0, %v909
    %v911 = vpop.f32.mrb[0].mxu0
    %912 = vdwg.mxu0
    %v914 = vrot.slane %v910, 4
    %v916 = vadd.f32 %v305, %v914
    %v917 = vxor.u32 %v916, 2147483648
    %v918 = vmul.f32 %v917, 1.442695
    %v919 = vpow.pop %v918
    %v920 = vadd.f32 %v919, 1.0
    %v921 = vrcp.pop %v920
    %v922 = vmul.f32 1.0, %v921
    %v923 = vtanh.pop %v916
    %v925 = vrot.slane %v711, 6
    %v927 = vmul.f32 %v922, %v925
    %929 = vrot.lane.b32.xlu0 %v923, 64
    %v930 = vpop.permute.xlu0 %929
    %v932 = vmul.f32 %v922, %v930
    %934 = vrot.lane.b32.xlu0 %v932, 32
    %v935 = vpop.permute.xlu0 %934
    %v937 = vadd.f32 %v927, %v935
    %v938 = vtanh.pop %v937
    %940 = vrot.lane.b32.xlu0 %v938, 64
    %v941 = vpop.permute.xlu0 %940
    %v943 = vmul.f32 %v922, %v941
    %v944 = vrot.slane %v823, 4
    %945 = vrot.lane.b32.xlu0 %v944, 32
    %v946 = vpop.permute.xlu0 %945
    %v947 = vsel %vm405, %v946, 0
    %949 = vmatprep.subr.mxu0 0.0
    %950 = vmatpush1.msra.mxu0 %v401
    %951 = vmatprep.subr.mxu0 0.0
    %952 = vmatpush1.msra.mxu0 %v402
    %953 = vmatprep.subr.mxu0 0.0
    %954 = vmatpush1.msra.mxu0 %v403
    %955 = vmatprep.subr.mxu0 0.0
    %956 = vmatpush1.msra.mxu0 %v404
    %957 = vmatprep.subr.mxu0 0.0
    %958 = vmatpush1.msra.mxu0 0.0
    %959 = vmatprep.subr.mxu0 0.0
    %960 = vmatpush1.msra.mxu0 0.0
    %961 = vmatprep.subr.mxu0 0.0
    %962 = vmatpush1.msra.mxu0 0.0
    %963 = vmatprep.subr.mxu0 0.0
    %964 = vmatpush1.msra.mxu0 0.0
    %965 = vmatprep.subr.mxu0 0.0
    %966 = vmatpush1.msra.mxu0 0.0
    %967 = vmatprep.subr.mxu0 0.0
    %968 = vmatpush1.msra.mxu0 0.0
    %969 = vmatprep.subr.mxu0 0.0
    %970 = vmatpush1.msra.mxu0 0.0
    %971 = vmatprep.subr.mxu0 0.0
    %972 = vmatpush1.msra.mxu0 0.0
    %973 = vmatprep.subr.mxu0 0.0
    %974 = vmatpush1.msra.mxu0 0.0
    %975 = vmatprep.subr.mxu0 0.0
    %976 = vmatpush1.msra.mxu0 0.0
    %977 = vmatprep.subr.mxu0 0.0
    %978 = vmatpush1.msra.mxu0 0.0
    %979 = vmatprep.subr.mxu0 0.0
    %980 = vmatpush1.msra.mxu0 0.0
    %981 = vmatprep.subr.mxu0 0.0
    %982 = vmatpush1.msra.mxu0 0.0
    %983 = vmatprep.subr.mxu0 0.0
    %984 = vmatpush1.msra.mxu0 0.0
    %985 = vmatprep.subr.mxu0 0.0
    %986 = vmatpush1.msra.mxu0 0.0
    %987 = vmatprep.subr.mxu0 0.0
    %988 = vmatpush1.msra.mxu0 0.0
    %989 = vmatprep.subr.mxu0 0.0
    %990 = vmatpush1.msra.mxu0 0.0
    %991 = vmatprep.subr.mxu0 0.0
    %992 = vmatpush1.msra.mxu0 0.0
    %993 = vmatprep.subr.mxu0 0.0
    %994 = vmatpush1.msra.mxu0 0.0
    %995 = vmatprep.subr.mxu0 0.0
    %996 = vmatpush1.msra.mxu0 0.0
    %997 = vmatprep.subr.mxu0 0.0
    %998 = vmatpush1.msra.mxu0 0.0
    %999 = vmatprep.subr.mxu0 0.0
    %1000 = vmatpush1.msra.mxu0 0.0
    %1001 = vmatprep.subr.mxu0 0.0
    %1002 = vmatpush1.msra.mxu0 0.0
    %1003 = vmatprep.subr.mxu0 0.0
    %1004 = vmatpush1.msra.mxu0 0.0
    %1005 = vmatprep.subr.mxu0 0.0
    %1006 = vmatpush1.msra.mxu0 0.0
    %1007 = vmatprep.subr.mxu0 0.0
    %1008 = vmatpush1.msra.mxu0 0.0
    %1009 = vmatprep.subr.mxu0 0.0
    %1010 = vmatpush1.msra.mxu0 0.0
    %1011 = vmatprep.subr.mxu0 0.0
    %1012 = vmatpush1.msra.mxu0 0.0
    %1013 = vmatprep.mubr.f32.mxu0 0.0
    %1014 = vmatmul.mubr.f32.gmra.mrb[0].mxu0 %v947
    %v1015 = vpop.f32.mrb[0].mxu0
    %v1016 = vadd.f32 0.0, %v1015
    %v1017 = vpop.f32.mrb[0].mxu0
    %1018 = vdwg.mxu0
    %v1020 = vrot.slane %v1016, 6
    %v1022 = vadd.f32 %v394, %v1020
    %v1023 = vxor.u32 %v1022, 2147483648
    %v1024 = vmul.f32 %v1023, 1.442695
    %v1025 = vpow.pop %v1024
    %v1026 = vadd.f32 %v1025, 1.0
    %v1027 = vrcp.pop %v1026
    %v1028 = vmul.f32 1.0, %v1027
    %v1029 = vtanh.pop %v1022
    %v1031 = vrot.slane %v817, 2
    %v1033 = vmul.f32 %v1028, %v1031
    %1035 = vrot.lane.b32.xlu0 %v1029, 64
    %v1036 = vpop.permute.xlu0 %1035
    %v1038 = vmul.f32 %v1028, %v1036
    %1040 = vrot.lane.b32.xlu0 %v1038, 32
    %v1041 = vpop.permute.xlu0 %1040
    %v1043 = vadd.f32 %v1033, %v1041
    %v1044 = vtanh.pop %v1043
    %1046 = vrot.lane.b32.xlu0 %v1044, 64
    %v1047 = vpop.permute.xlu0 %1046
    %v1049 = vmul.f32 %v1028, %v1047
    %1051 = vrot.lane.b32.xlu0 %v943, 32
    %v1052 = vpop.permute.xlu0 %1051
    %s1054 = scalar_lea.vmem [#allocation2], 4
    %1055 = vst.msk [vmem:[%s1054 - $0x4] sm:$0x30] %vm836, %v1052
    %1057 = vrot.lane.b32.xlu0 %v1049, 32
    %v1058 = vpop.permute.xlu0 %1057
    %s1060 = scalar_lea.vmem [#allocation3], 10
    %1061 = vst.msk [vmem:[%s1060 - $0x2] sm:$0xc] %vm829, %v1058
    %v1062 = vrot.slane %v943, 4
    %1063 = vrot.lane.b32.xlu0 %v1062, 32
    %v1064 = vpop.permute.xlu0 %1063
    %v1065 = vsel %vm405, %v1064, 0
    %1067 = vmatprep.subr.mxu0 0.0
    %1068 = vmatpush1.msra.mxu0 %v397
    %1069 = vmatprep.subr.mxu0 0.0
    %1070 = vmatpush1.msra.mxu0 %v398
    %1071 = vmatprep.subr.mxu0 0.0
    %1072 = vmatpush1.msra.mxu0 %v399
    %1073 = vmatprep.subr.mxu0 0.0
    %1074 = vmatpush1.msra.mxu0 %v400
    %1075 = vmatprep.subr.mxu0 0.0
    %1076 = vmatpush1.msra.mxu0 0.0
    %1077 = vmatprep.subr.mxu0 0.0
    %1078 = vmatpush1.msra.mxu0 0.0
    %1079 = vmatprep.subr.mxu0 0.0
    %1080 = vmatpush1.msra.mxu0 0.0
    %1081 = vmatprep.subr.mxu0 0.0
    %1082 = vmatpush1.msra.mxu0 0.0
    %1083 = vmatprep.subr.mxu0 0.0
    %1084 = vmatpush1.msra.mxu0 0.0
    %1085 = vmatprep.subr.mxu0 0.0
    %1086 = vmatpush1.msra.mxu0 0.0
    %1087 = vmatprep.subr.mxu0 0.0
    %1088 = vmatpush1.msra.mxu0 0.0
    %1089 = vmatprep.subr.mxu0 0.0
    %1090 = vmatpush1.msra.mxu0 0.0
    %1091 = vmatprep.subr.mxu0 0.0
    %1092 = vmatpush1.msra.mxu0 0.0
    %1093 = vmatprep.subr.mxu0 0.0
    %1094 = vmatpush1.msra.mxu0 0.0
    %1095 = vmatprep.subr.mxu0 0.0
    %1096 = vmatpush1.msra.mxu0 0.0
    %1097 = vmatprep.subr.mxu0 0.0
    %1098 = vmatpush1.msra.mxu0 0.0
    %1099 = vmatprep.subr.mxu0 0.0
    %1100 = vmatpush1.msra.mxu0 0.0
    %1101 = vmatprep.subr.mxu0 0.0
    %1102 = vmatpush1.msra.mxu0 0.0
    %1103 = vmatprep.subr.mxu0 0.0
    %1104 = vmatpush1.msra.mxu0 0.0
    %1105 = vmatprep.subr.mxu0 0.0
    %1106 = vmatpush1.msra.mxu0 0.0
    %1107 = vmatprep.subr.mxu0 0.0
    %1108 = vmatpush1.msra.mxu0 0.0
    %1109 = vmatprep.subr.mxu0 0.0
    %1110 = vmatpush1.msra.mxu0 0.0
    %1111 = vmatprep.subr.mxu0 0.0
    %1112 = vmatpush1.msra.mxu0 0.0
    %1113 = vmatprep.subr.mxu0 0.0
    %1114 = vmatpush1.msra.mxu0 0.0
    %1115 = vmatprep.subr.mxu0 0.0
    %1116 = vmatpush1.msra.mxu0 0.0
    %1117 = vmatprep.subr.mxu0 0.0
    %1118 = vmatpush1.msra.mxu0 0.0
    %1119 = vmatprep.subr.mxu0 0.0
    %1120 = vmatpush1.msra.mxu0 0.0
    %1121 = vmatprep.subr.mxu0 0.0
    %1122 = vmatpush1.msra.mxu0 0.0
    %1123 = vmatprep.subr.mxu0 0.0
    %1124 = vmatpush1.msra.mxu0 0.0
    %1125 = vmatprep.subr.mxu0 0.0
    %1126 = vmatpush1.msra.mxu0 0.0
    %1127 = vmatprep.subr.mxu0 0.0
    %1128 = vmatpush1.msra.mxu0 0.0
    %1129 = vmatprep.subr.mxu0 0.0
    %1130 = vmatpush1.msra.mxu0 0.0
    %1131 = vmatprep.mubr.f32.mxu0 0.0
    %1132 = vmatmul.mubr.f32.gmra.mrb[0].mxu0 %v1065
    %v1133 = vpop.f32.mrb[0].mxu0
    %v1134 = vadd.f32 0.0, %v1133
    %v1135 = vpop.f32.mrb[0].mxu0
    %1136 = vdwg.mxu0
    %v1138 = vrot.slane %v1134, 2
    %v1140 = vadd.f32 %v305, %v1138
    %v1141 = vxor.u32 %v1140, 2147483648
    %v1142 = vmul.f32 %v1141, 1.442695
    %v1143 = vpow.pop %v1142
    %v1144 = vadd.f32 %v1143, 1.0
    %v1145 = vrcp.pop %v1144
    %v1146 = vmul.f32 1.0, %v1145
    %v1147 = vtanh.pop %v1140
    %v1149 = vrot.slane %v937, 6
    %v1151 = vmul.f32 %v1146, %v1149
    %1153 = vrot.lane.b32.xlu0 %v1147, 64
    %v1154 = vpop.permute.xlu0 %1153
    %v1156 = vmul.f32 %v1146, %v1154
    %1158 = vrot.lane.b32.xlu0 %v1156, 32
    %v1159 = vpop.permute.xlu0 %1158
    %v1161 = vadd.f32 %v1151, %v1159
    %v1162 = vtanh.pop %v1161
    %1164 = vrot.lane.b32.xlu0 %v1162, 64
    %v1165 = vpop.permute.xlu0 %1164
    %v1167 = vmul.f32 %v1146, %v1165
    %v1168 = vrot.slane %v1049, 2
    %1169 = vrot.lane.b32.xlu0 %v1168, 32
    %v1170 = vpop.permute.xlu0 %1169
    %v1171 = vsel %vm405, %v1170, 0
    %1173 = vmatprep.subr.mxu0 0.0
    %1174 = vmatpush1.msra.mxu0 %v401
    %1175 = vmatprep.subr.mxu0 0.0
    %1176 = vmatpush1.msra.mxu0 %v402
    %1177 = vmatprep.subr.mxu0 0.0
    %1178 = vmatpush1.msra.mxu0 %v403
    %1179 = vmatprep.subr.mxu0 0.0
    %1180 = vmatpush1.msra.mxu0 %v404
    %1181 = vmatprep.subr.mxu0 0.0
    %1182 = vmatpush1.msra.mxu0 0.0
    %1183 = vmatprep.subr.mxu0 0.0
    %1184 = vmatpush1.msra.mxu0 0.0
    %1185 = vmatprep.subr.mxu0 0.0
    %1186 = vmatpush1.msra.mxu0 0.0
    %1187 = vmatprep.subr.mxu0 0.0
    %1188 = vmatpush1.msra.mxu0 0.0
    %1189 = vmatprep.subr.mxu0 0.0
    %1190 = vmatpush1.msra.mxu0 0.0
    %1191 = vmatprep.subr.mxu0 0.0
    %1192 = vmatpush1.msra.mxu0 0.0
    %1193 = vmatprep.subr.mxu0 0.0
    %1194 = vmatpush1.msra.mxu0 0.0
    %1195 = vmatprep.subr.mxu0 0.0
    %1196 = vmatpush1.msra.mxu0 0.0
    %1197 = vmatprep.subr.mxu0 0.0
    %1198 = vmatpush1.msra.mxu0 0.0
    %1199 = vmatprep.subr.mxu0 0.0
    %1200 = vmatpush1.msra.mxu0 0.0
    %1201 = vmatprep.subr.mxu0 0.0
    %1202 = vmatpush1.msra.mxu0 0.0
    %1203 = vmatprep.subr.mxu0 0.0
    %1204 = vmatpush1.msra.mxu0 0.0
    %1205 = vmatprep.subr.mxu0 0.0
    %1206 = vmatpush1.msra.mxu0 0.0
    %1207 = vmatprep.subr.mxu0 0.0
    %1208 = vmatpush1.msra.mxu0 0.0
    %1209 = vmatprep.subr.mxu0 0.0
    %1210 = vmatpush1.msra.mxu0 0.0
    %1211 = vmatprep.subr.mxu0 0.0
    %1212 = vmatpush1.msra.mxu0 0.0
    %1213 = vmatprep.subr.mxu0 0.0
    %1214 = vmatpush1.msra.mxu0 0.0
    %1215 = vmatprep.subr.mxu0 0.0
    %1216 = vmatpush1.msra.mxu0 0.0
    %1217 = vmatprep.subr.mxu0 0.0
    %1218 = vmatpush1.msra.mxu0 0.0
    %1219 = vmatprep.subr.mxu0 0.0
    %1220 = vmatpush1.msra.mxu0 0.0
    %1221 = vmatprep.subr.mxu0 0.0
    %1222 = vmatpush1.msra.mxu0 0.0
    %1223 = vmatprep.subr.mxu0 0.0
    %1224 = vmatpush1.msra.mxu0 0.0
    %1225 = vmatprep.subr.mxu0 0.0
    %1226 = vmatpush1.msra.mxu0 0.0
    %1227 = vmatprep.subr.mxu0 0.0
    %1228 = vmatpush1.msra.mxu0 0.0
    %1229 = vmatprep.subr.mxu0 0.0
    %1230 = vmatpush1.msra.mxu0 0.0
    %1231 = vmatprep.subr.mxu0 0.0
    %1232 = vmatpush1.msra.mxu0 0.0
    %1233 = vmatprep.subr.mxu0 0.0
    %1234 = vmatpush1.msra.mxu0 0.0
    %1235 = vmatprep.subr.mxu0 0.0
    %1236 = vmatpush1.msra.mxu0 0.0
    %1237 = vmatprep.mubr.f32.mxu0 0.0
    %1238 = vmatmul.mubr.f32.gmra.mrb[0].mxu0 %v1171
    %v1239 = vpop.f32.mrb[0].mxu0
    %v1240 = vadd.f32 0.0, %v1239
    %v1241 = vpop.f32.mrb[0].mxu0
    %1242 = vdwg.mxu0
    %v1243 = vadd.f32 %v394, %v1240
    %v1244 = vxor.u32 %v1243, 2147483648
    %v1245 = vmul.f32 %v1244, 1.442695
    %v1246 = vpow.pop %v1245
    %v1247 = vadd.f32 %v1246, 1.0
    %v1248 = vrcp.pop %v1247
    %v1249 = vmul.f32 1.0, %v1248
    %v1250 = vtanh.pop %v1243
    %v1252 = vrot.slane %v1043, 2
    %v1254 = vmul.f32 %v1249, %v1252
    %1256 = vrot.lane.b32.xlu0 %v1250, 64
    %v1257 = vpop.permute.xlu0 %1256
    %v1259 = vmul.f32 %v1249, %v1257
    %1261 = vrot.lane.b32.xlu0 %v1259, 32
    %v1262 = vpop.permute.xlu0 %1261
    %v1264 = vadd.f32 %v1254, %v1262
    %v1265 = vtanh.pop %v1264
    %1267 = vrot.lane.b32.xlu0 %v1265, 64
    %v1268 = vpop.permute.xlu0 %1267
    %v1270 = vmul.f32 %v1249, %v1268
    %1272 = vrot.lane.b32.xlu0 %v1167, 32
    %v1273 = vpop.permute.xlu0 %1272
    %s1275 = scalar_lea.vmem [#allocation2], 6
    %1276 = vst.msk [vmem:[%s1275 - $0x6] sm:$0xc0] %vm613, %v1273
    %1278 = vrot.lane.b32.xlu0 %v1270, 32
    %v1279 = vpop.permute.xlu0 %1278
    %s1281 = scalar_lea.vmem [#allocation3], 8
    %1282 = vst.msk [vmem:[%s1281] sm:$0x3] %vm606, %v1279
    %v1283 = vrot.slane %v1167, 6
    %1284 = vrot.lane.b32.xlu0 %v1283, 32
    %v1285 = vpop.permute.xlu0 %1284
    %v1286 = vsel %vm405, %v1285, 0
    %1288 = vmatprep.subr.mxu0 0.0
    %1289 = vmatpush1.msra.mxu0 %v397
    %1290 = vmatprep.subr.mxu0 0.0
    %1291 = vmatpush1.msra.mxu0 %v398
    %1292 = vmatprep.subr.mxu0 0.0
    %1293 = vmatpush1.msra.mxu0 %v399
    %1294 = vmatprep.subr.mxu0 0.0
    %1295 = vmatpush1.msra.mxu0 %v400
    %1296 = vmatprep.subr.mxu0 0.0
    %1297 = vmatpush1.msra.mxu0 0.0
    %1298 = vmatprep.subr.mxu0 0.0
    %1299 = vmatpush1.msra.mxu0 0.0
    %1300 = vmatprep.subr.mxu0 0.0
    %1301 = vmatpush1.msra.mxu0 0.0
    %1302 = vmatprep.subr.mxu0 0.0
    %1303 = vmatpush1.msra.mxu0 0.0
    %1304 = vmatprep.subr.mxu0 0.0
    %1305 = vmatpush1.msra.mxu0 0.0
    %1306 = vmatprep.subr.mxu0 0.0
    %1307 = vmatpush1.msra.mxu0 0.0
    %1308 = vmatprep.subr.mxu0 0.0
    %1309 = vmatpush1.msra.mxu0 0.0
    %1310 = vmatprep.subr.mxu0 0.0
    %1311 = vmatpush1.msra.mxu0 0.0
    %1312 = vmatprep.subr.mxu0 0.0
    %1313 = vmatpush1.msra.mxu0 0.0
    %1314 = vmatprep.subr.mxu0 0.0
    %1315 = vmatpush1.msra.mxu0 0.0
    %1316 = vmatprep.subr.mxu0 0.0
    %1317 = vmatpush1.msra.mxu0 0.0
    %1318 = vmatprep.subr.mxu0 0.0
    %1319 = vmatpush1.msra.mxu0 0.0
    %1320 = vmatprep.subr.mxu0 0.0
    %1321 = vmatpush1.msra.mxu0 0.0
    %1322 = vmatprep.subr.mxu0 0.0
    %1323 = vmatpush1.msra.mxu0 0.0
    %1324 = vmatprep.subr.mxu0 0.0
    %1325 = vmatpush1.msra.mxu0 0.0
    %1326 = vmatprep.subr.mxu0 0.0
    %1327 = vmatpush1.msra.mxu0 0.0
    %1328 = vmatprep.subr.mxu0 0.0
    %1329 = vmatpush1.msra.mxu0 0.0
    %1330 = vmatprep.subr.mxu0 0.0
    %1331 = vmatpush1.msra.mxu0 0.0
    %1332 = vmatprep.subr.mxu0 0.0
    %1333 = vmatpush1.msra.mxu0 0.0
    %1334 = vmatprep.subr.mxu0 0.0
    %1335 = vmatpush1.msra.mxu0 0.0
    %1336 = vmatprep.subr.mxu0 0.0
    %1337 = vmatpush1.msra.mxu0 0.0
    %1338 = vmatprep.subr.mxu0 0.0
    %1339 = vmatpush1.msra.mxu0 0.0
    %1340 = vmatprep.subr.mxu0 0.0
    %1341 = vmatpush1.msra.mxu0 0.0
    %1342 = vmatprep.subr.mxu0 0.0
    %1343 = vmatpush1.msra.mxu0 0.0
    %1344 = vmatprep.subr.mxu0 0.0
    %1345 = vmatpush1.msra.mxu0 0.0
    %1346 = vmatprep.subr.mxu0 0.0
    %1347 = vmatpush1.msra.mxu0 0.0
    %1348 = vmatprep.subr.mxu0 0.0
    %1349 = vmatpush1.msra.mxu0 0.0
    %1350 = vmatprep.subr.mxu0 0.0
    %1351 = vmatpush1.msra.mxu0 0.0
    %1352 = vmatprep.mubr.f32.mxu0 0.0
    %1353 = vmatmul.mubr.f32.gmra.mrb[0].mxu0 %v1286
    %v1354 = vpop.f32.mrb[0].mxu0
    %v1355 = vadd.f32 0.0, %v1354
    %v1356 = vpop.f32.mrb[0].mxu0
    %1357 = vdwg.mxu0
    %v1358 = vadd.f32 %v310, %v1355
    %v1359 = vxor.u32 %v1358, 2147483648
    %v1360 = vmul.f32 %v1359, 1.442695
    %v1361 = vpow.pop %v1360
    %v1362 = vadd.f32 %v1361, 1.0
    %v1363 = vrcp.pop %v1362
    %v1364 = vmul.f32 1.0, %v1363
    %v1365 = vtanh.pop %v1358
    %v1367 = vrot.slane %v1161, 6
    %v1369 = vmul.f32 %v1364, %v1367
    %1371 = vrot.lane.b32.xlu0 %v1365, 64
    %v1372 = vpop.permute.xlu0 %1371
    %v1374 = vmul.f32 %v1364, %v1372
    %1376 = vrot.lane.b32.xlu0 %v1374, 32
    %v1377 = vpop.permute.xlu0 %1376
    %v1379 = vadd.f32 %v1369, %v1377
    %v1380 = vtanh.pop %v1379
    %1382 = vrot.lane.b32.xlu0 %v1380, 64
    %v1383 = vpop.permute.xlu0 %1382
    %v1385 = vmul.f32 %v1364, %v1383
    %v1386 = vsel %vm405, %v1279, 0
    %1388 = vmatprep.subr.mxu0 0.0
    %1389 = vmatpush1.msra.mxu0 %v401
    %1390 = vmatprep.subr.mxu0 0.0
    %1391 = vmatpush1.msra.mxu0 %v402
    %1392 = vmatprep.subr.mxu0 0.0
    %1393 = vmatpush1.msra.mxu0 %v403
    %1394 = vmatprep.subr.mxu0 0.0
    %1395 = vmatpush1.msra.mxu0 %v404
    %1396 = vmatprep.subr.mxu0 0.0
    %1397 = vmatpush1.msra.mxu0 0.0
    %1398 = vmatprep.subr.mxu0 0.0
    %1399 = vmatpush1.msra.mxu0 0.0
    %1400 = vmatprep.subr.mxu0 0.0
    %1401 = vmatpush1.msra.mxu0 0.0
    %1402 = vmatprep.subr.mxu0 0.0
    %1403 = vmatpush1.msra.mxu0 0.0
    %1404 = vmatprep.subr.mxu0 0.0
    %1405 = vmatpush1.msra.mxu0 0.0
    %1406 = vmatprep.subr.mxu0 0.0
    %1407 = vmatpush1.msra.mxu0 0.0
    %1408 = vmatprep.subr.mxu0 0.0
    %1409 = vmatpush1.msra.mxu0 0.0
    %1410 = vmatprep.subr.mxu0 0.0
    %1411 = vmatpush1.msra.mxu0 0.0
    %1412 = vmatprep.subr.mxu0 0.0
    %1413 = vmatpush1.msra.mxu0 0.0
    %1414 = vmatprep.subr.mxu0 0.0
    %1415 = vmatpush1.msra.mxu0 0.0
    %1416 = vmatprep.subr.mxu0 0.0
    %1417 = vmatpush1.msra.mxu0 0.0
    %1418 = vmatprep.subr.mxu0 0.0
    %1419 = vmatpush1.msra.mxu0 0.0
    %1420 = vmatprep.subr.mxu0 0.0
    %1421 = vmatpush1.msra.mxu0 0.0
    %1422 = vmatprep.subr.mxu0 0.0
    %1423 = vmatpush1.msra.mxu0 0.0
    %1424 = vmatprep.subr.mxu0 0.0
    %1425 = vmatpush1.msra.mxu0 0.0
    %1426 = vmatprep.subr.mxu0 0.0
    %1427 = vmatpush1.msra.mxu0 0.0
    %1428 = vmatprep.subr.mxu0 0.0
    %1429 = vmatpush1.msra.mxu0 0.0
    %1430 = vmatprep.subr.mxu0 0.0
    %1431 = vmatpush1.msra.mxu0 0.0
    %1432 = vmatprep.subr.mxu0 0.0
    %1433 = vmatpush1.msra.mxu0 0.0
    %1434 = vmatprep.subr.mxu0 0.0
    %1435 = vmatpush1.msra.mxu0 0.0
    %1436 = vmatprep.subr.mxu0 0.0
    %1437 = vmatpush1.msra.mxu0 0.0
    %1438 = vmatprep.subr.mxu0 0.0
    %1439 = vmatpush1.msra.mxu0 0.0
    %1440 = vmatprep.subr.mxu0 0.0
    %1441 = vmatpush1.msra.mxu0 0.0
    %1442 = vmatprep.subr.mxu0 0.0
    %1443 = vmatpush1.msra.mxu0 0.0
    %1444 = vmatprep.subr.mxu0 0.0
    %1445 = vmatpush1.msra.mxu0 0.0
    %1446 = vmatprep.subr.mxu0 0.0
    %1447 = vmatpush1.msra.mxu0 0.0
    %1448 = vmatprep.subr.mxu0 0.0
    %1449 = vmatpush1.msra.mxu0 0.0
    %1450 = vmatprep.subr.mxu0 0.0
    %1451 = vmatpush1.msra.mxu0 0.0
    %1452 = vmatprep.mubr.f32.mxu0 0.0
    %1453 = vmatmul.mubr.f32.gmra.mrb[0].mxu0 %v1386
    %v1454 = vpop.f32.mrb[0].mxu0
    %v1455 = vadd.f32 0.0, %v1454
    %v1456 = vpop.f32.mrb[0].mxu0
    %1457 = vdwg.mxu0
    %v1459 = vrot.slane %v1455, 2
    %v1461 = vadd.f32 %v389, %v1459
    %v1462 = vxor.u32 %v1461, 2147483648
    %v1463 = vmul.f32 %v1462, 1.442695
    %v1464 = vpow.pop %v1463
    %v1465 = vadd.f32 %v1464, 1.0
    %v1466 = vrcp.pop %v1465
    %v1467 = vmul.f32 1.0, %v1466
    %v1468 = vtanh.pop %v1461
    %v1470 = vrot.slane %v1264, 2
    %v1472 = vmul.f32 %v1467, %v1470
    %1474 = vrot.lane.b32.xlu0 %v1468, 64
    %v1475 = vpop.permute.xlu0 %1474
    %v1477 = vmul.f32 %v1467, %v1475
    %1479 = vrot.lane.b32.xlu0 %v1477, 32
    %v1480 = vpop.permute.xlu0 %1479
    %v1482 = vadd.f32 %v1472, %v1480
    %v1483 = vtanh.pop %v1482
    %1485 = vrot.lane.b32.xlu0 %v1483, 64
    %v1486 = vpop.permute.xlu0 %1485
    %v1488 = vmul.f32 %v1467, %v1486
    %1490 = vrot.lane.b32.xlu0 %v1385, 32
    %v1491 = vpop.permute.xlu0 %1490
    %s1493 = scalar_lea.vmem [#allocation2], 8
    %1494 = vst.msk [vmem:[%s1493] sm:$0x3] %vm606, %v1491
    %1496 = vrot.lane.b32.xlu0 %v1488, 32
    %v1497 = vpop.permute.xlu0 %1496
    %s1499 = scalar_lea.vmem [#allocation3], 6
    %1500 = vst.msk [vmem:[%s1499 - $0x6] sm:$0xc0] %vm613, %v1497
    %v1501 = vsel %vm405, %v1491, 0
    %1503 = vmatprep.subr.mxu0 0.0
    %1504 = vmatpush1.msra.mxu0 %v397
    %1505 = vmatprep.subr.mxu0 0.0
    %1506 = vmatpush1.msra.mxu0 %v398
    %1507 = vmatprep.subr.mxu0 0.0
    %1508 = vmatpush1.msra.mxu0 %v399
    %1509 = vmatprep.subr.mxu0 0.0
    %1510 = vmatpush1.msra.mxu0 %v400
    %1511 = vmatprep.subr.mxu0 0.0
    %1512 = vmatpush1.msra.mxu0 0.0
    %1513 = vmatprep.subr.mxu0 0.0
    %1514 = vmatpush1.msra.mxu0 0.0
    %1515 = vmatprep.subr.mxu0 0.0
    %1516 = vmatpush1.msra.mxu0 0.0
    %1517 = vmatprep.subr.mxu0 0.0
    %1518 = vmatpush1.msra.mxu0 0.0
    %1519 = vmatprep.subr.mxu0 0.0
    %1520 = vmatpush1.msra.mxu0 0.0
    %1521 = vmatprep.subr.mxu0 0.0
    %1522 = vmatpush1.msra.mxu0 0.0
    %1523 = vmatprep.subr.mxu0 0.0
    %1524 = vmatpush1.msra.mxu0 0.0
    %1525 = vmatprep.subr.mxu0 0.0
    %1526 = vmatpush1.msra.mxu0 0.0
    %1527 = vmatprep.subr.mxu0 0.0
    %1528 = vmatpush1.msra.mxu0 0.0
    %1529 = vmatprep.subr.mxu0 0.0
    %1530 = vmatpush1.msra.mxu0 0.0
    %1531 = vmatprep.subr.mxu0 0.0
    %1532 = vmatpush1.msra.mxu0 0.0
    %1533 = vmatprep.subr.mxu0 0.0
    %1534 = vmatpush1.msra.mxu0 0.0
    %1535 = vmatprep.subr.mxu0 0.0
    %1536 = vmatpush1.msra.mxu0 0.0
    %1537 = vmatprep.subr.mxu0 0.0
    %1538 = vmatpush1.msra.mxu0 0.0
    %1539 = vmatprep.subr.mxu0 0.0
    %1540 = vmatpush1.msra.mxu0 0.0
    %1541 = vmatprep.subr.mxu0 0.0
    %1542 = vmatpush1.msra.mxu0 0.0
    %1543 = vmatprep.subr.mxu0 0.0
    %1544 = vmatpush1.msra.mxu0 0.0
    %1545 = vmatprep.subr.mxu0 0.0
    %1546 = vmatpush1.msra.mxu0 0.0
    %1547 = vmatprep.subr.mxu0 0.0
    %1548 = vmatpush1.msra.mxu0 0.0
    %1549 = vmatprep.subr.mxu0 0.0
    %1550 = vmatpush1.msra.mxu0 0.0
    %1551 = vmatprep.subr.mxu0 0.0
    %1552 = vmatpush1.msra.mxu0 0.0
    %1553 = vmatprep.subr.mxu0 0.0
    %1554 = vmatpush1.msra.mxu0 0.0
    %1555 = vmatprep.subr.mxu0 0.0
    %1556 = vmatpush1.msra.mxu0 0.0
    %1557 = vmatprep.subr.mxu0 0.0
    %1558 = vmatpush1.msra.mxu0 0.0
    %1559 = vmatprep.subr.mxu0 0.0
    %1560 = vmatpush1.msra.mxu0 0.0
    %1561 = vmatprep.subr.mxu0 0.0
    %1562 = vmatpush1.msra.mxu0 0.0
    %1563 = vmatprep.subr.mxu0 0.0
    %1564 = vmatpush1.msra.mxu0 0.0
    %1565 = vmatprep.subr.mxu0 0.0
    %1566 = vmatpush1.msra.mxu0 0.0
    %1567 = vmatprep.mubr.f32.mxu0 0.0
    %1568 = vmatmul.mubr.f32.gmra.mrb[0].mxu0 %v1501
    %v1569 = vpop.f32.mrb[0].mxu0
    %v1570 = vadd.f32 0.0, %v1569
    %v1571 = vpop.f32.mrb[0].mxu0
    %1572 = vdwg.mxu0
    %v1574 = vrot.slane %v1570, 6
    %v1576 = vadd.f32 %v310, %v1574
    %v1577 = vxor.u32 %v1576, 2147483648
    %v1578 = vmul.f32 %v1577, 1.442695
    %v1579 = vpow.pop %v1578
    %v1580 = vadd.f32 %v1579, 1.0
    %v1581 = vrcp.pop %v1580
    %v1582 = vmul.f32 1.0, %v1581
    %v1583 = vtanh.pop %v1576
    %v1585 = vrot.slane %v1379, 6
    %v1587 = vmul.f32 %v1582, %v1585
    %1589 = vrot.lane.b32.xlu0 %v1583, 64
    %v1590 = vpop.permute.xlu0 %1589
    %v1592 = vmul.f32 %v1582, %v1590
    %1594 = vrot.lane.b32.xlu0 %v1592, 32
    %v1595 = vpop.permute.xlu0 %1594
    %v1597 = vadd.f32 %v1587, %v1595
    %v1598 = vtanh.pop %v1597
    %1600 = vrot.lane.b32.xlu0 %v1598, 64
    %v1601 = vpop.permute.xlu0 %1600
    %v1603 = vmul.f32 %v1582, %v1601
    %v1604 = vrot.slane %v1488, 6
    %1605 = vrot.lane.b32.xlu0 %v1604, 32
    %v1606 = vpop.permute.xlu0 %1605
    %v1607 = vsel %vm405, %v1606, 0
    %1609 = vmatprep.subr.mxu0 0.0
    %1610 = vmatpush1.msra.mxu0 %v401
    %1611 = vmatprep.subr.mxu0 0.0
    %1612 = vmatpush1.msra.mxu0 %v402
    %1613 = vmatprep.subr.mxu0 0.0
    %1614 = vmatpush1.msra.mxu0 %v403
    %1615 = vmatprep.subr.mxu0 0.0
    %1616 = vmatpush1.msra.mxu0 %v404
    %1617 = vmatprep.subr.mxu0 0.0
    %1618 = vmatpush1.msra.mxu0 0.0
    %1619 = vmatprep.subr.mxu0 0.0
    %1620 = vmatpush1.msra.mxu0 0.0
    %1621 = vmatprep.subr.mxu0 0.0
    %1622 = vmatpush1.msra.mxu0 0.0
    %1623 = vmatprep.subr.mxu0 0.0
    %1624 = vmatpush1.msra.mxu0 0.0
    %1625 = vmatprep.subr.mxu0 0.0
    %1626 = vmatpush1.msra.mxu0 0.0
    %1627 = vmatprep.subr.mxu0 0.0
    %1628 = vmatpush1.msra.mxu0 0.0
    %1629 = vmatprep.subr.mxu0 0.0
    %1630 = vmatpush1.msra.mxu0 0.0
    %1631 = vmatprep.subr.mxu0 0.0
    %1632 = vmatpush1.msra.mxu0 0.0
    %1633 = vmatprep.subr.mxu0 0.0
    %1634 = vmatpush1.msra.mxu0 0.0
    %1635 = vmatprep.subr.mxu0 0.0
    %1636 = vmatpush1.msra.mxu0 0.0
    %1637 = vmatprep.subr.mxu0 0.0
    %1638 = vmatpush1.msra.mxu0 0.0
    %1639 = vmatprep.subr.mxu0 0.0
    %1640 = vmatpush1.msra.mxu0 0.0
    %1641 = vmatprep.subr.mxu0 0.0
    %1642 = vmatpush1.msra.mxu0 0.0
    %1643 = vmatprep.subr.mxu0 0.0
    %1644 = vmatpush1.msra.mxu0 0.0
    %1645 = vmatprep.subr.mxu0 0.0
    %1646 = vmatpush1.msra.mxu0 0.0
    %1647 = vmatprep.subr.mxu0 0.0
    %1648 = vmatpush1.msra.mxu0 0.0
    %1649 = vmatprep.subr.mxu0 0.0
    %1650 = vmatpush1.msra.mxu0 0.0
    %1651 = vmatprep.subr.mxu0 0.0
    %1652 = vmatpush1.msra.mxu0 0.0
    %1653 = vmatprep.subr.mxu0 0.0
    %1654 = vmatpush1.msra.mxu0 0.0
    %1655 = vmatprep.subr.mxu0 0.0
    %1656 = vmatpush1.msra.mxu0 0.0
    %1657 = vmatprep.subr.mxu0 0.0
    %1658 = vmatpush1.msra.mxu0 0.0
    %1659 = vmatprep.subr.mxu0 0.0
    %1660 = vmatpush1.msra.mxu0 0.0
    %1661 = vmatprep.subr.mxu0 0.0
    %1662 = vmatpush1.msra.mxu0 0.0
    %1663 = vmatprep.subr.mxu0 0.0
    %1664 = vmatpush1.msra.mxu0 0.0
    %1665 = vmatprep.subr.mxu0 0.0
    %1666 = vmatpush1.msra.mxu0 0.0
    %1667 = vmatprep.subr.mxu0 0.0
    %1668 = vmatpush1.msra.mxu0 0.0
    %1669 = vmatprep.subr.mxu0 0.0
    %1670 = vmatpush1.msra.mxu0 0.0
    %1671 = vmatprep.subr.mxu0 0.0
    %1672 = vmatpush1.msra.mxu0 0.0
    %1673 = vmatprep.mubr.f32.mxu0 0.0
    %1674 = vmatmul.mubr.f32.gmra.mrb[0].mxu0 %v1607
    %v1675 = vpop.f32.mrb[0].mxu0
    %v1676 = vadd.f32 0.0, %v1675
    %v1677 = vpop.f32.mrb[0].mxu0
    %1678 = vdwg.mxu0
    %v1680 = vrot.slane %v1676, 4
    %v1682 = vadd.f32 %v389, %v1680
    %v1683 = vxor.u32 %v1682, 2147483648
    %v1684 = vmul.f32 %v1683, 1.442695
    %v1685 = vpow.pop %v1684
    %v1686 = vadd.f32 %v1685, 1.0
    %v1687 = vrcp.pop %v1686
    %v1688 = vmul.f32 1.0, %v1687
    %v1689 = vtanh.pop %v1682
    %v1691 = vrot.slane %v1482, 2
    %v1693 = vmul.f32 %v1688, %v1691
    %1695 = vrot.lane.b32.xlu0 %v1689, 64
    %v1696 = vpop.permute.xlu0 %1695
    %v1698 = vmul.f32 %v1688, %v1696
    %1700 = vrot.lane.b32.xlu0 %v1698, 32
    %v1701 = vpop.permute.xlu0 %1700
    %v1703 = vadd.f32 %v1693, %v1701
    %v1704 = vtanh.pop %v1703
    %1706 = vrot.lane.b32.xlu0 %v1704, 64
    %v1707 = vpop.permute.xlu0 %1706
    %v1709 = vmul.f32 %v1688, %v1707
    %1711 = vrot.lane.b32.xlu0 %v1603, 32
    %v1712 = vpop.permute.xlu0 %1711
    %s1714 = scalar_lea.vmem [#allocation2], 10
    %1715 = vst.msk [vmem:[%s1714 - $0x2] sm:$0xc] %vm829, %v1712
    %1717 = vrot.lane.b32.xlu0 %v1709, 32
    %v1718 = vpop.permute.xlu0 %1717
    %s1720 = scalar_lea.vmem [#allocation3], 4
    %1721 = vst.msk [vmem:[%s1720 - $0x4] sm:$0x30] %vm836, %v1718
    %v1722 = vrot.slane %v1603, 2
    %1723 = vrot.lane.b32.xlu0 %v1722, 32
    %v1724 = vpop.permute.xlu0 %1723
    %v1725 = vsel %vm405, %v1724, 0
    %1727 = vmatprep.subr.mxu0 0.0
    %1728 = vmatpush1.msra.mxu0 %v397
    %1729 = vmatprep.subr.mxu0 0.0
    %1730 = vmatpush1.msra.mxu0 %v398
    %1731 = vmatprep.subr.mxu0 0.0
    %1732 = vmatpush1.msra.mxu0 %v399
    %1733 = vmatprep.subr.mxu0 0.0
    %1734 = vmatpush1.msra.mxu0 %v400
    %1735 = vmatprep.subr.mxu0 0.0
    %1736 = vmatpush1.msra.mxu0 0.0
    %1737 = vmatprep.subr.mxu0 0.0
    %1738 = vmatpush1.msra.mxu0 0.0
    %1739 = vmatprep.subr.mxu0 0.0
    %1740 = vmatpush1.msra.mxu0 0.0
    %1741 = vmatprep.subr.mxu0 0.0
    %1742 = vmatpush1.msra.mxu0 0.0
    %1743 = vmatprep.subr.mxu0 0.0
    %1744 = vmatpush1.msra.mxu0 0.0
    %1745 = vmatprep.subr.mxu0 0.0
    %1746 = vmatpush1.msra.mxu0 0.0
    %1747 = vmatprep.subr.mxu0 0.0
    %1748 = vmatpush1.msra.mxu0 0.0
    %1749 = vmatprep.subr.mxu0 0.0
    %1750 = vmatpush1.msra.mxu0 0.0
    %1751 = vmatprep.subr.mxu0 0.0
    %1752 = vmatpush1.msra.mxu0 0.0
    %1753 = vmatprep.subr.mxu0 0.0
    %1754 = vmatpush1.msra.mxu0 0.0
    %1755 = vmatprep.subr.mxu0 0.0
    %1756 = vmatpush1.msra.mxu0 0.0
    %1757 = vmatprep.subr.mxu0 0.0
    %1758 = vmatpush1.msra.mxu0 0.0
    %1759 = vmatprep.subr.mxu0 0.0
    %1760 = vmatpush1.msra.mxu0 0.0
    %1761 = vmatprep.subr.mxu0 0.0
    %1762 = vmatpush1.msra.mxu0 0.0
    %1763 = vmatprep.subr.mxu0 0.0
    %1764 = vmatpush1.msra.mxu0 0.0
    %1765 = vmatprep.subr.mxu0 0.0
    %1766 = vmatpush1.msra.mxu0 0.0
    %1767 = vmatprep.subr.mxu0 0.0
    %1768 = vmatpush1.msra.mxu0 0.0
    %1769 = vmatprep.subr.mxu0 0.0
    %1770 = vmatpush1.msra.mxu0 0.0
    %1771 = vmatprep.subr.mxu0 0.0
    %1772 = vmatpush1.msra.mxu0 0.0
    %1773 = vmatprep.subr.mxu0 0.0
    %1774 = vmatpush1.msra.mxu0 0.0
    %1775 = vmatprep.subr.mxu0 0.0
    %1776 = vmatpush1.msra.mxu0 0.0
    %1777 = vmatprep.subr.mxu0 0.0
    %1778 = vmatpush1.msra.mxu0 0.0
    %1779 = vmatprep.subr.mxu0 0.0
    %1780 = vmatpush1.msra.mxu0 0.0
    %1781 = vmatprep.subr.mxu0 0.0
    %1782 = vmatpush1.msra.mxu0 0.0
    %1783 = vmatprep.subr.mxu0 0.0
    %1784 = vmatpush1.msra.mxu0 0.0
    %1785 = vmatprep.subr.mxu0 0.0
    %1786 = vmatpush1.msra.mxu0 0.0
    %1787 = vmatprep.subr.mxu0 0.0
    %1788 = vmatpush1.msra.mxu0 0.0
    %1789 = vmatprep.subr.mxu0 0.0
    %1790 = vmatpush1.msra.mxu0 0.0
    %1791 = vmatprep.mubr.f32.mxu0 0.0
    %1792 = vmatmul.mubr.f32.gmra.mrb[0].mxu0 %v1725
    %v1793 = vpop.f32.mrb[0].mxu0
    %v1794 = vadd.f32 0.0, %v1793
    %v1795 = vpop.f32.mrb[0].mxu0
    %1796 = vdwg.mxu0
    %v1798 = vrot.slane %v1794, 4
    %v1800 = vadd.f32 %v310, %v1798
    %v1801 = vxor.u32 %v1800, 2147483648
    %v1802 = vmul.f32 %v1801, 1.442695
    %v1803 = vpow.pop %v1802
    %v1804 = vadd.f32 %v1803, 1.0
    %v1805 = vrcp.pop %v1804
    %v1806 = vmul.f32 1.0, %v1805
    %v1807 = vtanh.pop %v1800
    %v1809 = vrot.slane %v1597, 6
    %v1811 = vmul.f32 %v1806, %v1809
    %1813 = vrot.lane.b32.xlu0 %v1807, 64
    %v1814 = vpop.permute.xlu0 %1813
    %v1816 = vmul.f32 %v1806, %v1814
    %1818 = vrot.lane.b32.xlu0 %v1816, 32
    %v1819 = vpop.permute.xlu0 %1818
    %v1821 = vadd.f32 %v1811, %v1819
    %v1822 = vtanh.pop %v1821
    %1824 = vrot.lane.b32.xlu0 %v1822, 64
    %v1825 = vpop.permute.xlu0 %1824
    %v1827 = vmul.f32 %v1806, %v1825
    %v1828 = vrot.slane %v1709, 4
    %1829 = vrot.lane.b32.xlu0 %v1828, 32
    %v1830 = vpop.permute.xlu0 %1829
    %v1831 = vsel %vm405, %v1830, 0
    %1833 = vmatprep.subr.mxu0 0.0
    %1834 = vmatpush1.msra.mxu0 %v401
    %1835 = vmatprep.subr.mxu0 0.0
    %1836 = vmatpush1.msra.mxu0 %v402
    %1837 = vmatprep.subr.mxu0 0.0
    %1838 = vmatpush1.msra.mxu0 %v403
    %1839 = vmatprep.subr.mxu0 0.0
    %1840 = vmatpush1.msra.mxu0 %v404
    %1841 = vmatprep.subr.mxu0 0.0
    %1842 = vmatpush1.msra.mxu0 0.0
    %1843 = vmatprep.subr.mxu0 0.0
    %1844 = vmatpush1.msra.mxu0 0.0
    %1845 = vmatprep.subr.mxu0 0.0
    %1846 = vmatpush1.msra.mxu0 0.0
    %1847 = vmatprep.subr.mxu0 0.0
    %1848 = vmatpush1.msra.mxu0 0.0
    %1849 = vmatprep.subr.mxu0 0.0
    %1850 = vmatpush1.msra.mxu0 0.0
    %1851 = vmatprep.subr.mxu0 0.0
    %1852 = vmatpush1.msra.mxu0 0.0
    %1853 = vmatprep.subr.mxu0 0.0
    %1854 = vmatpush1.msra.mxu0 0.0
    %1855 = vmatprep.subr.mxu0 0.0
    %1856 = vmatpush1.msra.mxu0 0.0
    %1857 = vmatprep.subr.mxu0 0.0
    %1858 = vmatpush1.msra.mxu0 0.0
    %1859 = vmatprep.subr.mxu0 0.0
    %1860 = vmatpush1.msra.mxu0 0.0
    %1861 = vmatprep.subr.mxu0 0.0
    %1862 = vmatpush1.msra.mxu0 0.0
    %1863 = vmatprep.subr.mxu0 0.0
    %1864 = vmatpush1.msra.mxu0 0.0
    %1865 = vmatprep.subr.mxu0 0.0
    %1866 = vmatpush1.msra.mxu0 0.0
    %1867 = vmatprep.subr.mxu0 0.0
    %1868 = vmatpush1.msra.mxu0 0.0
    %1869 = vmatprep.subr.mxu0 0.0
    %1870 = vmatpush1.msra.mxu0 0.0
    %1871 = vmatprep.subr.mxu0 0.0
    %1872 = vmatpush1.msra.mxu0 0.0
    %1873 = vmatprep.subr.mxu0 0.0
    %1874 = vmatpush1.msra.mxu0 0.0
    %1875 = vmatprep.subr.mxu0 0.0
    %1876 = vmatpush1.msra.mxu0 0.0
    %1877 = vmatprep.subr.mxu0 0.0
    %1878 = vmatpush1.msra.mxu0 0.0
    %1879 = vmatprep.subr.mxu0 0.0
    %1880 = vmatpush1.msra.mxu0 0.0
    %1881 = vmatprep.subr.mxu0 0.0
    %1882 = vmatpush1.msra.mxu0 0.0
    %1883 = vmatprep.subr.mxu0 0.0
    %1884 = vmatpush1.msra.mxu0 0.0
    %1885 = vmatprep.subr.mxu0 0.0
    %1886 = vmatpush1.msra.mxu0 0.0
    %1887 = vmatprep.subr.mxu0 0.0
    %1888 = vmatpush1.msra.mxu0 0.0
    %1889 = vmatprep.subr.mxu0 0.0
    %1890 = vmatpush1.msra.mxu0 0.0
    %1891 = vmatprep.subr.mxu0 0.0
    %1892 = vmatpush1.msra.mxu0 0.0
    %1893 = vmatprep.subr.mxu0 0.0
    %1894 = vmatpush1.msra.mxu0 0.0
    %1895 = vmatprep.subr.mxu0 0.0
    %1896 = vmatpush1.msra.mxu0 0.0
    %1897 = vmatprep.mubr.f32.mxu0 0.0
    %1898 = vmatmul.mubr.f32.gmra.mrb[0].mxu0 %v1831
    %v1899 = vpop.f32.mrb[0].mxu0
    %v1900 = vadd.f32 0.0, %v1899
    %v1901 = vpop.f32.mrb[0].mxu0
    %1902 = vdwg.mxu0
    %v1904 = vrot.slane %v1900, 6
    %v1906 = vadd.f32 %v389, %v1904
    %v1907 = vxor.u32 %v1906, 2147483648
    %v1908 = vmul.f32 %v1907, 1.442695
    %v1909 = vpow.pop %v1908
    %v1910 = vadd.f32 %v1909, 1.0
    %v1911 = vrcp.pop %v1910
    %v1912 = vmul.f32 1.0, %v1911
    %v1913 = vtanh.pop %v1906
    %v1915 = vrot.slane %v1703, 2
    %v1917 = vmul.f32 %v1912, %v1915
    %1919 = vrot.lane.b32.xlu0 %v1913, 64
    %v1920 = vpop.permute.xlu0 %1919
    %v1922 = vmul.f32 %v1912, %v1920
    %1924 = vrot.lane.b32.xlu0 %v1922, 32
    %v1925 = vpop.permute.xlu0 %1924
    %v1927 = vadd.f32 %v1917, %v1925
    %v1928 = vtanh.pop %v1927
    %1930 = vrot.lane.b32.xlu0 %v1928, 64
    %v1931 = vpop.permute.xlu0 %1930
    %v1933 = vmul.f32 %v1912, %v1931
    %1935 = vrot.lane.b32.xlu0 %v1827, 32
    %v1936 = vpop.permute.xlu0 %1935
    %s1938 = scalar_lea.vmem [#allocation2], 12
    %1939 = vst.msk [vmem:[%s1938 - $0x4] sm:$0x30] %vm836, %v1936
    %1941 = vrot.lane.b32.xlu0 %v1933, 32
    %v1942 = vpop.permute.xlu0 %1941
    %s1944 = scalar_lea.vmem [#allocation3], 2
    %1945 = vst.msk [vmem:[%s1944 - $0x2] sm:$0xc] %vm829, %v1942
    %v1946 = vrot.slane %v1827, 4
    %1947 = vrot.lane.b32.xlu0 %v1946, 32
    %v1948 = vpop.permute.xlu0 %1947
    %v1949 = vsel %vm405, %v1948, 0
    %1951 = vmatprep.subr.mxu0 0.0
    %1952 = vmatpush1.msra.mxu0 %v397
    %1953 = vmatprep.subr.mxu0 0.0
    %1954 = vmatpush1.msra.mxu0 %v398
    %1955 = vmatprep.subr.mxu0 0.0
    %1956 = vmatpush1.msra.mxu0 %v399
    %1957 = vmatprep.subr.mxu0 0.0
    %1958 = vmatpush1.msra.mxu0 %v400
    %1959 = vmatprep.subr.mxu0 0.0
    %1960 = vmatpush1.msra.mxu0 0.0
    %1961 = vmatprep.subr.mxu0 0.0
    %1962 = vmatpush1.msra.mxu0 0.0
    %1963 = vmatprep.subr.mxu0 0.0
    %1964 = vmatpush1.msra.mxu0 0.0
    %1965 = vmatprep.subr.mxu0 0.0
    %1966 = vmatpush1.msra.mxu0 0.0
    %1967 = vmatprep.subr.mxu0 0.0
    %1968 = vmatpush1.msra.mxu0 0.0
    %1969 = vmatprep.subr.mxu0 0.0
    %1970 = vmatpush1.msra.mxu0 0.0
    %1971 = vmatprep.subr.mxu0 0.0
    %1972 = vmatpush1.msra.mxu0 0.0
    %1973 = vmatprep.subr.mxu0 0.0
    %1974 = vmatpush1.msra.mxu0 0.0
    %1975 = vmatprep.subr.mxu0 0.0
    %1976 = vmatpush1.msra.mxu0 0.0
    %1977 = vmatprep.subr.mxu0 0.0
    %1978 = vmatpush1.msra.mxu0 0.0
    %1979 = vmatprep.subr.mxu0 0.0
    %1980 = vmatpush1.msra.mxu0 0.0
    %1981 = vmatprep.subr.mxu0 0.0
    %1982 = vmatpush1.msra.mxu0 0.0
    %1983 = vmatprep.subr.mxu0 0.0
    %1984 = vmatpush1.msra.mxu0 0.0
    %1985 = vmatprep.subr.mxu0 0.0
    %1986 = vmatpush1.msra.mxu0 0.0
    %1987 = vmatprep.subr.mxu0 0.0
    %1988 = vmatpush1.msra.mxu0 0.0
    %1989 = vmatprep.subr.mxu0 0.0
    %1990 = vmatpush1.msra.mxu0 0.0
    %1991 = vmatprep.subr.mxu0 0.0
    %1992 = vmatpush1.msra.mxu0 0.0
    %1993 = vmatprep.subr.mxu0 0.0
    %1994 = vmatpush1.msra.mxu0 0.0
    %1995 = vmatprep.subr.mxu0 0.0
    %1996 = vmatpush1.msra.mxu0 0.0
    %1997 = vmatprep.subr.mxu0 0.0
    %1998 = vmatpush1.msra.mxu0 0.0
    %1999 = vmatprep.subr.mxu0 0.0
    %2000 = vmatpush1.msra.mxu0 0.0
    %2001 = vmatprep.subr.mxu0 0.0
    %2002 = vmatpush1.msra.mxu0 0.0
    %2003 = vmatprep.subr.mxu0 0.0
    %2004 = vmatpush1.msra.mxu0 0.0
    %2005 = vmatprep.subr.mxu0 0.0
    %2006 = vmatpush1.msra.mxu0 0.0
    %2007 = vmatprep.subr.mxu0 0.0
    %2008 = vmatpush1.msra.mxu0 0.0
    %2009 = vmatprep.subr.mxu0 0.0
    %2010 = vmatpush1.msra.mxu0 0.0
    %2011 = vmatprep.subr.mxu0 0.0
    %2012 = vmatpush1.msra.mxu0 0.0
    %2013 = vmatprep.subr.mxu0 0.0
    %2014 = vmatpush1.msra.mxu0 0.0
    %2015 = vmatprep.mubr.f32.mxu0 0.0
    %2016 = vmatmul.mubr.f32.gmra.mrb[0].mxu0 %v1949
    %v2017 = vpop.f32.mrb[0].mxu0
    %v2018 = vadd.f32 0.0, %v2017
    %v2019 = vpop.f32.mrb[0].mxu0
    %2020 = vdwg.mxu0
    %v2022 = vrot.slane %v2018, 2
    %v2024 = vadd.f32 %v310, %v2022
    %v2025 = vxor.u32 %v2024, 2147483648
    %v2026 = vmul.f32 %v2025, 1.442695
    %v2027 = vpow.pop %v2026
    %v2028 = vadd.f32 %v2027, 1.0
    %v2029 = vrcp.pop %v2028
    %v2030 = vmul.f32 1.0, %v2029
    %v2031 = vtanh.pop %v2024
    %v2033 = vrot.slane %v1821, 6
    %v2035 = vmul.f32 %v2030, %v2033
    %2037 = vrot.lane.b32.xlu0 %v2031, 64
    %v2038 = vpop.permute.xlu0 %2037
    %v2040 = vmul.f32 %v2030, %v2038
    %2042 = vrot.lane.b32.xlu0 %v2040, 32
    %v2043 = vpop.permute.xlu0 %2042
    %v2045 = vadd.f32 %v2035, %v2043
    %v2046 = vtanh.pop %v2045
    %2048 = vrot.lane.b32.xlu0 %v2046, 64
    %v2049 = vpop.permute.xlu0 %2048
    %v2051 = vmul.f32 %v2030, %v2049
    %v2052 = vrot.slane %v1933, 2
    %2053 = vrot.lane.b32.xlu0 %v2052, 32
    %v2054 = vpop.permute.xlu0 %2053
    %v2055 = vsel %vm405, %v2054, 0
    %2057 = vmatprep.subr.mxu0 0.0
    %2058 = vmatpush1.msra.mxu0 %v401
    %2059 = vmatprep.subr.mxu0 0.0
    %2060 = vmatpush1.msra.mxu0 %v402
    %2061 = vmatprep.subr.mxu0 0.0
    %2062 = vmatpush1.msra.mxu0 %v403
    %2063 = vmatprep.subr.mxu0 0.0
    %2064 = vmatpush1.msra.mxu0 %v404
    %2065 = vmatprep.subr.mxu0 0.0
    %2066 = vmatpush1.msra.mxu0 0.0
    %2067 = vmatprep.subr.mxu0 0.0
    %2068 = vmatpush1.msra.mxu0 0.0
    %2069 = vmatprep.subr.mxu0 0.0
    %2070 = vmatpush1.msra.mxu0 0.0
    %2071 = vmatprep.subr.mxu0 0.0
    %2072 = vmatpush1.msra.mxu0 0.0
    %2073 = vmatprep.subr.mxu0 0.0
    %2074 = vmatpush1.msra.mxu0 0.0
    %2075 = vmatprep.subr.mxu0 0.0
    %2076 = vmatpush1.msra.mxu0 0.0
    %2077 = vmatprep.subr.mxu0 0.0
    %2078 = vmatpush1.msra.mxu0 0.0
    %2079 = vmatprep.subr.mxu0 0.0
    %2080 = vmatpush1.msra.mxu0 0.0
    %2081 = vmatprep.subr.mxu0 0.0
    %2082 = vmatpush1.msra.mxu0 0.0
    %2083 = vmatprep.subr.mxu0 0.0
    %2084 = vmatpush1.msra.mxu0 0.0
    %2085 = vmatprep.subr.mxu0 0.0
    %2086 = vmatpush1.msra.mxu0 0.0
    %2087 = vmatprep.subr.mxu0 0.0
    %2088 = vmatpush1.msra.mxu0 0.0
    %2089 = vmatprep.subr.mxu0 0.0
    %2090 = vmatpush1.msra.mxu0 0.0
    %2091 = vmatprep.subr.mxu0 0.0
    %2092 = vmatpush1.msra.mxu0 0.0
    %2093 = vmatprep.subr.mxu0 0.0
    %2094 = vmatpush1.msra.mxu0 0.0
    %2095 = vmatprep.subr.mxu0 0.0
    %2096 = vmatpush1.msra.mxu0 0.0
    %2097 = vmatprep.subr.mxu0 0.0
    %2098 = vmatpush1.msra.mxu0 0.0
    %2099 = vmatprep.subr.mxu0 0.0
    %2100 = vmatpush1.msra.mxu0 0.0
    %2101 = vmatprep.subr.mxu0 0.0
    %2102 = vmatpush1.msra.mxu0 0.0
    %2103 = vmatprep.subr.mxu0 0.0
    %2104 = vmatpush1.msra.mxu0 0.0
    %2105 = vmatprep.subr.mxu0 0.0
    %2106 = vmatpush1.msra.mxu0 0.0
    %2107 = vmatprep.subr.mxu0 0.0
    %2108 = vmatpush1.msra.mxu0 0.0
    %2109 = vmatprep.subr.mxu0 0.0
    %2110 = vmatpush1.msra.mxu0 0.0
    %2111 = vmatprep.subr.mxu0 0.0
    %2112 = vmatpush1.msra.mxu0 0.0
    %2113 = vmatprep.subr.mxu0 0.0
    %2114 = vmatpush1.msra.mxu0 0.0
    %2115 = vmatprep.subr.mxu0 0.0
    %2116 = vmatpush1.msra.mxu0 0.0
    %2117 = vmatprep.subr.mxu0 0.0
    %2118 = vmatpush1.msra.mxu0 0.0
    %2119 = vmatprep.subr.mxu0 0.0
    %2120 = vmatpush1.msra.mxu0 0.0
    %2121 = vmatprep.mubr.f32.mxu0 0.0
    %2122 = vmatmul.mubr.f32.gmra.mrb[0].mxu0 %v2055
    %v2123 = vpop.f32.mrb[0].mxu0
    %v2124 = vadd.f32 0.0, %v2123
    %v2125 = vpop.f32.mrb[0].mxu0
    %2126 = vdwg.mxu0
    %v2127 = vadd.f32 %v389, %v2124
    %v2128 = vxor.u32 %v2127, 2147483648
    %v2129 = vmul.f32 %v2128, 1.442695
    %v2130 = vpow.pop %v2129
    %v2131 = vadd.f32 %v2130, 1.0
    %v2132 = vrcp.pop %v2131
    %v2133 = vmul.f32 1.0, %v2132
    %v2134 = vtanh.pop %v2127
    %v2136 = vrot.slane %v1927, 2
    %v2138 = vmul.f32 %v2133, %v2136
    %2140 = vrot.lane.b32.xlu0 %v2134, 64
    %v2141 = vpop.permute.xlu0 %2140
    %v2143 = vmul.f32 %v2133, %v2141
    %2145 = vrot.lane.b32.xlu0 %v2143, 32
    %v2146 = vpop.permute.xlu0 %2145
    %v2148 = vadd.f32 %v2138, %v2146
    %v2149 = vtanh.pop %v2148
    %2151 = vrot.lane.b32.xlu0 %v2149, 64
    %v2152 = vpop.permute.xlu0 %2151
    %v2154 = vmul.f32 %v2133, %v2152
    %2156 = vrot.lane.b32.xlu0 %v2051, 32
    %v2157 = vpop.permute.xlu0 %2156
    %s2159 = scalar_lea.vmem [#allocation2], 14
    %2160 = vst.msk [vmem:[%s2159 - $0x6] sm:$0xc0] %vm613, %v2157
    %2162 = vrot.lane.b32.xlu0 %v2154, 32
    %v2163 = vpop.permute.xlu0 %2162
    %2165 = vst.msk [vmem:[#allocation3] sm:$0x3] %vm606, %v2163
    %v2166 = vld [vmem:[#allocation2] sm:$0x3]
    %v2167 = vld [vmem:[#allocation2 + $0x2] sm:$0x3]
    %v2168 = vld [vmem:[#allocation2 + $0x4] sm:$0x3]
    %v2169 = vld [vmem:[#allocation2 + $0x6] sm:$0x3]
    %v2170 = vld [vmem:[#allocation2 + $0x8] sm:$0x3]
    %v2171 = vld [vmem:[#allocation2 + $0xa] sm:$0x3]
    %v2172 = vld [vmem:[#allocation2 + $0xc] sm:$0x3]
    %v2173 = vld [vmem:[#allocation2 + $0xe] sm:$0x3]
    %v2174 = vld [vmem:[#allocation3] sm:$0x3]
    %v2175 = vld [vmem:[#allocation3 + $0x2] sm:$0x3]
    %v2176 = vld [vmem:[#allocation3 + $0x4] sm:$0x3]
    %v2177 = vld [vmem:[#allocation3 + $0x6] sm:$0x3]
    %v2178 = vld [vmem:[#allocation3 + $0x8] sm:$0x3]
    %v2179 = vld [vmem:[#allocation3 + $0xa] sm:$0x3]
    %v2180 = vld [vmem:[#allocation3 + $0xc] sm:$0x3]
    %v2181 = vld [vmem:[#allocation3 + $0xe] sm:$0x3]
    %2190 = vrot.lane.b32.xlu0 %v2174, 32
    %v2191 = vpop.permute.xlu0 %2190
    %2192 = vrot.lane.b32.xlu0 %v2175, 32
    %v2193 = vpop.permute.xlu0 %2192
    %2194 = vrot.lane.b32.xlu0 %v2176, 32
    %v2195 = vpop.permute.xlu0 %2194
    %2196 = vrot.lane.b32.xlu0 %v2177, 32
    %v2197 = vpop.permute.xlu0 %2196
    %2198 = vrot.lane.b32.xlu0 %v2178, 32
    %v2199 = vpop.permute.xlu0 %2198
    %2200 = vrot.lane.b32.xlu0 %v2179, 32
    %v2201 = vpop.permute.xlu0 %2200
    %2202 = vrot.lane.b32.xlu0 %v2180, 32
    %v2203 = vpop.permute.xlu0 %2202
    %2204 = vrot.lane.b32.xlu0 %v2181, 32
    %v2205 = vpop.permute.xlu0 %2204
    %v2214 = vsel %vm405, %v2166, %v2191
    %v2215 = vsel %vm405, %v2167, %v2193
    %v2216 = vsel %vm405, %v2168, %v2195
    %v2217 = vsel %vm405, %v2169, %v2197
    %v2218 = vsel %vm405, %v2170, %v2199
    %v2219 = vsel %vm405, %v2171, %v2201
    %v2220 = vsel %vm405, %v2172, %v2203
    %v2221 = vsel %vm405, %v2173, %v2205
    %v2222 = vld [vmem:[%s7] sm:$0xff]
    %v2223 = vld [vmem:[%s7 + $0x8] sm:$0xff]
    %v2224 = vld [vmem:[%s7 + $0x10] sm:$0xff]
    %v2225 = vld [vmem:[%s7 + $0x18] sm:$0xff]
    %v2226 = vld [vmem:[%s7 + $0x20] sm:$0xff]
    %v2227 = vld [vmem:[%s7 + $0x28] sm:$0xff]
    %v2228 = vld [vmem:[%s7 + $0x30] sm:$0xff]
    %v2229 = vld [vmem:[%s7 + $0x38] sm:$0xff]
    %v2230 = vld [vmem:[%s9] sm:$0x1]
    %v2232 = vlaneseq
    %v2233 = vshrl.u32 %v2232, 7
    %v2234 = vsub.s32 0, %v2233
    %v2235 = vrot.slane %v2230, %v2234
    %v2245 = vcombine.low %v2214, %v2215
    %v2246 = vcombine.low %v2216, %v2217
    %v2248 = vunpack.c.l.s4 1983009808
    %v2249 = vunpack.c.0.s8 %v2248
    %v2250 = vlaneseq
    %v2251 = vshrl.u32 %v2250, 7
    %v2252 = vsub.s32 %v2249, %v2251
    %v2253 = vrot.slane %v2245, %v2252
    %v2255 = vunpack.c.l.s4 1983009808
    %v2256 = vunpack.c.0.s8 %v2255
    %v2257 = vlaneseq
    %v2258 = vshrl.u32 %v2257, 7
    %v2259 = vsub.s32 %v2256, %v2258
    %v2260 = vrot.slane %v2246, %v2259
    %v2261 = vcombine.low %v2253, %v2260
    %v2262 = vcombine.low %v2218, %v2219
    %v2263 = vcombine.low %v2220, %v2221
    %v2265 = vunpack.c.l.s4 1983009808
    %v2266 = vunpack.c.0.s8 %v2265
    %v2267 = vlaneseq
    %v2268 = vshrl.u32 %v2267, 7
    %v2269 = vsub.s32 %v2266, %v2268
    %v2270 = vrot.slane %v2262, %v2269
    %v2272 = vunpack.c.l.s4 1983009808
    %v2273 = vunpack.c.0.s8 %v2272
    %v2274 = vlaneseq
    %v2275 = vshrl.u32 %v2274, 7
    %v2276 = vsub.s32 %v2273, %v2275
    %v2277 = vrot.slane %v2263, %v2276
    %v2278 = vcombine.low %v2270, %v2277
    %vm2279 = vcmask 523264
    %v2280 = vsel %vm2279, %v2261, 0
    %v2282 = vsel %vm2279, %v2278, 0
    %2284 = vmatprep.subr.mxu0 0.0
    %2285 = vmatpush1.msra.mxu0 %v2222
    %2286 = vmatprep.subr.mxu0 0.0
    %2287 = vmatpush1.msra.mxu0 %v2223
    %2288 = vmatprep.subr.mxu0 0.0
    %2289 = vmatpush1.msra.mxu0 %v2224
    %2290 = vmatprep.subr.mxu0 0.0
    %2291 = vmatpush1.msra.mxu0 %v2225
    %2292 = vmatprep.subr.mxu0 0.0
    %2293 = vmatpush1.msra.mxu0 %v2226
    %2294 = vmatprep.subr.mxu0 0.0
    %2295 = vmatpush1.msra.mxu0 %v2227
    %2296 = vmatprep.subr.mxu0 0.0
    %2297 = vmatpush1.msra.mxu0 %v2228
    %2298 = vmatprep.subr.mxu0 0.0
    %2299 = vmatpush1.msra.mxu0 %v2229
    %2300 = vmatprep.subr.mxu0 0.0
    %2301 = vmatpush1.msra.mxu0 0.0
    %2302 = vmatprep.subr.mxu0 0.0
    %2303 = vmatpush1.msra.mxu0 0.0
    %2304 = vmatprep.subr.mxu0 0.0
    %2305 = vmatpush1.msra.mxu0 0.0
    %2306 = vmatprep.subr.mxu0 0.0
    %2307 = vmatpush1.msra.mxu0 0.0
    %2308 = vmatprep.subr.mxu0 0.0
    %2309 = vmatpush1.msra.mxu0 0.0
    %2310 = vmatprep.subr.mxu0 0.0
    %2311 = vmatpush1.msra.mxu0 0.0
    %2312 = vmatprep.subr.mxu0 0.0
    %2313 = vmatpush1.msra.mxu0 0.0
    %2314 = vmatprep.subr.mxu0 0.0
    %2315 = vmatpush1.msra.mxu0 0.0
    %2316 = vmatprep.subr.mxu0 0.0
    %2317 = vmatpush1.msra.mxu0 0.0
    %2318 = vmatprep.subr.mxu0 0.0
    %2319 = vmatpush1.msra.mxu0 0.0
    %2320 = vmatprep.subr.mxu0 0.0
    %2321 = vmatpush1.msra.mxu0 0.0
    %2322 = vmatprep.subr.mxu0 0.0
    %2323 = vmatpush1.msra.mxu0 0.0
    %2324 = vmatprep.subr.mxu0 0.0
    %2325 = vmatpush1.msra.mxu0 0.0
    %2326 = vmatprep.subr.mxu0 0.0
    %2327 = vmatpush1.msra.mxu0 0.0
    %2328 = vmatprep.subr.mxu0 0.0
    %2329 = vmatpush1.msra.mxu0 0.0
    %2330 = vmatprep.subr.mxu0 0.0
    %2331 = vmatpush1.msra.mxu0 0.0
    %2332 = vmatprep.subr.mxu0 0.0
    %2333 = vmatpush1.msra.mxu0 0.0
    %2334 = vmatprep.subr.mxu0 0.0
    %2335 = vmatpush1.msra.mxu0 0.0
    %2336 = vmatprep.subr.mxu0 0.0
    %2337 = vmatpush1.msra.mxu0 0.0
    %2338 = vmatprep.subr.mxu0 0.0
    %2339 = vmatpush1.msra.mxu0 0.0
    %2340 = vmatprep.subr.mxu0 0.0
    %2341 = vmatpush1.msra.mxu0 0.0
    %2342 = vmatprep.subr.mxu0 0.0
    %2343 = vmatpush1.msra.mxu0 0.0
    %2344 = vmatprep.subr.mxu0 0.0
    %2345 = vmatpush1.msra.mxu0 0.0
    %2346 = vmatprep.subr.mxu0 0.0
    %2347 = vmatpush1.msra.mxu0 0.0
    %2348 = vmatprep.mubr.f32.mxu0 0.0
    %2349 = vmatmul.mubr.f32.gmra.mrb[0].mxu0 %v2280
    %v2350 = vpop.f32.mrb[0].mxu0
    %v2351 = vadd.f32 %v2235, %v2350
    %v2352 = vpop.f32.mrb[0].mxu0
    %2353 = vmatprep.mubr.f32.mxu0 0.0
    %2354 = vmatmul.mubr.f32.gmra.mrb[0].mxu0 %v2282
    %v2355 = vpop.f32.mrb[0].mxu0
    %v2356 = vadd.f32 %v2235, %v2355
    %v2357 = vpop.f32.mrb[0].mxu0
    %2358 = vdwg.mxu0
    %v2359 = vld [vmem:[%s10] sm:$0xff]
    %v2360 = vld [vmem:[%s10 + $0x8] sm:$0xff]
    %v2361 = vld [vmem:[%s10 + $0x10] sm:$0xff]
    %v2362 = vld [vmem:[%s10 + $0x18] sm:$0xff]
    %v2363 = vld [vmem:[%s10 + $0x20] sm:$0xff]
    %v2364 = vld [vmem:[%s10 + $0x28] sm:$0xff]
    %v2365 = vld [vmem:[%s10 + $0x30] sm:$0xff]
    %v2366 = vld [vmem:[%s10 + $0x38] sm:$0xff]
    %v2367 = vld [vmem:[#allocation14] sm:$0x1]
    %v2369 = vlaneseq
    %v2370 = vshrl.u32 %v2369, 7
    %v2371 = vsub.s32 0, %v2370
    %v2372 = vrot.slane %v2367, %v2371
    %2374 = vmatprep.subr.mxu0 0.0
    %2375 = vmatpush1.msra.mxu0 %v2359
    %2376 = vmatprep.subr.mxu0 0.0
    %2377 = vmatpush1.msra.mxu0 %v2360
    %2378 = vmatprep.subr.mxu0 0.0
    %2379 = vmatpush1.msra.mxu0 %v2361
    %2380 = vmatprep.subr.mxu0 0.0
    %2381 = vmatpush1.msra.mxu0 %v2362
    %2382 = vmatprep.subr.mxu0 0.0
    %2383 = vmatpush1.msra.mxu0 %v2363
    %2384 = vmatprep.subr.mxu0 0.0
    %2385 = vmatpush1.msra.mxu0 %v2364
    %2386 = vmatprep.subr.mxu0 0.0
    %2387 = vmatpush1.msra.mxu0 %v2365
    %2388 = vmatprep.subr.mxu0 0.0
    %2389 = vmatpush1.msra.mxu0 %v2366
    %2390 = vmatprep.subr.mxu0 0.0
    %2391 = vmatpush1.msra.mxu0 0.0
    %2392 = vmatprep.subr.mxu0 0.0
    %2393 = vmatpush1.msra.mxu0 0.0
    %2394 = vmatprep.subr.mxu0 0.0
    %2395 = vmatpush1.msra.mxu0 0.0
    %2396 = vmatprep.subr.mxu0 0.0
    %2397 = vmatpush1.msra.mxu0 0.0
    %2398 = vmatprep.subr.mxu0 0.0
    %2399 = vmatpush1.msra.mxu0 0.0
    %2400 = vmatprep.subr.mxu0 0.0
    %2401 = vmatpush1.msra.mxu0 0.0
    %2402 = vmatprep.subr.mxu0 0.0
    %2403 = vmatpush1.msra.mxu0 0.0
    %2404 = vmatprep.subr.mxu0 0.0
    %2405 = vmatpush1.msra.mxu0 0.0
    %2406 = vmatprep.subr.mxu0 0.0
    %2407 = vmatpush1.msra.mxu0 0.0
    %2408 = vmatprep.subr.mxu0 0.0
    %2409 = vmatpush1.msra.mxu0 0.0
    %2410 = vmatprep.subr.mxu0 0.0
    %2411 = vmatpush1.msra.mxu0 0.0
    %2412 = vmatprep.subr.mxu0 0.0
    %2413 = vmatpush1.msra.mxu0 0.0
    %2414 = vmatprep.subr.mxu0 0.0
    %2415 = vmatpush1.msra.mxu0 0.0
    %2416 = vmatprep.subr.mxu0 0.0
    %2417 = vmatpush1.msra.mxu0 0.0
    %2418 = vmatprep.subr.mxu0 0.0
    %2419 = vmatpush1.msra.mxu0 0.0
    %2420 = vmatprep.subr.mxu0 0.0
    %2421 = vmatpush1.msra.mxu0 0.0
    %2422 = vmatprep.subr.mxu0 0.0
    %2423 = vmatpush1.msra.mxu0 0.0
    %2424 = vmatprep.subr.mxu0 0.0
    %2425 = vmatpush1.msra.mxu0 0.0
    %2426 = vmatprep.subr.mxu0 0.0
    %2427 = vmatpush1.msra.mxu0 0.0
    %2428 = vmatprep.subr.mxu0 0.0
    %2429 = vmatpush1.msra.mxu0 0.0
    %2430 = vmatprep.subr.mxu0 0.0
    %2431 = vmatpush1.msra.mxu0 0.0
    %2432 = vmatprep.subr.mxu0 0.0
    %2433 = vmatpush1.msra.mxu0 0.0
    %2434 = vmatprep.subr.mxu0 0.0
    %2435 = vmatpush1.msra.mxu0 0.0
    %2436 = vmatprep.subr.mxu0 0.0
    %2437 = vmatpush1.msra.mxu0 0.0
    %2438 = vmatprep.mubr.f32.mxu0 0.0
    %2439 = vmatmul.mubr.f32.gmra.mrb[0].mxu0 %v2280
    %v2440 = vpop.f32.mrb[0].mxu0
    %v2441 = vpop.f32.mrb[0].mxu0
    %2442 = vmatprep.mubr.f32.mxu0 0.0
    %2443 = vmatmul.mubr.f32.gmra.mrb[0].mxu0 %v2282
    %v2444 = vpop.f32.mrb[0].mxu0
    %v2445 = vadd.f32 %v2372, %v2444
    %v2446 = vpop.f32.mrb[0].mxu0
    %2447 = vdwg.mxu0
    %v2448 = vld [vmem:[%s8] sm:$0xff]
    %v2449 = vld [vmem:[%s8 + $0x8] sm:$0xff]
    %v2450 = vld [vmem:[%s8 + $0x10] sm:$0xff]
    %v2451 = vld [vmem:[%s8 + $0x18] sm:$0xff]
    %v2452 = vld [vmem:[#allocation13] sm:$0xff]
    %v2453 = vld [vmem:[#allocation13 + $0x8] sm:$0xff]
    %v2454 = vld [vmem:[#allocation13 + $0x10] sm:$0xff]
    %v2455 = vld [vmem:[#allocation13 + $0x18] sm:$0xff]
    %2456 = vmatprep.subr.mxu0 0.0
    %2457 = vmatpush1.msra.mxu0 %v2448
    %2458 = vmatprep.subr.mxu0 0.0
    %2459 = vmatpush1.msra.mxu0 %v2449
    %2460 = vmatprep.subr.mxu0 0.0
    %2461 = vmatpush1.msra.mxu0 %v2450
    %2462 = vmatprep.subr.mxu0 0.0
    %2463 = vmatpush1.msra.mxu0 %v2451
    %2464 = vmatprep.subr.mxu0 0.0
    %2465 = vmatpush1.msra.mxu0 0.0
    %2466 = vmatprep.subr.mxu0 0.0
    %2467 = vmatpush1.msra.mxu0 0.0
    %2468 = vmatprep.subr.mxu0 0.0
    %2469 = vmatpush1.msra.mxu0 0.0
    %2470 = vmatprep.subr.mxu0 0.0
    %2471 = vmatpush1.msra.mxu0 0.0
    %2472 = vmatprep.subr.mxu0 0.0
    %2473 = vmatpush1.msra.mxu0 0.0
    %2474 = vmatprep.subr.mxu0 0.0
    %2475 = vmatpush1.msra.mxu0 0.0
    %2476 = vmatprep.subr.mxu0 0.0
    %2477 = vmatpush1.msra.mxu0 0.0
    %2478 = vmatprep.subr.mxu0 0.0
    %2479 = vmatpush1.msra.mxu0 0.0
    %2480 = vmatprep.subr.mxu0 0.0
    %2481 = vmatpush1.msra.mxu0 0.0
    %2482 = vmatprep.subr.mxu0 0.0
    %2483 = vmatpush1.msra.mxu0 0.0
    %2484 = vmatprep.subr.mxu0 0.0
    %2485 = vmatpush1.msra.mxu0 0.0
    %2486 = vmatprep.subr.mxu0 0.0
    %2487 = vmatpush1.msra.mxu0 0.0
    %2488 = vmatprep.subr.mxu0 0.0
    %2489 = vmatpush1.msra.mxu0 0.0
    %2490 = vmatprep.subr.mxu0 0.0
    %2491 = vmatpush1.msra.mxu0 0.0
    %2492 = vmatprep.subr.mxu0 0.0
    %2493 = vmatpush1.msra.mxu0 0.0
    %2494 = vmatprep.subr.mxu0 0.0
    %2495 = vmatpush1.msra.mxu0 0.0
    %2496 = vmatprep.subr.mxu0 0.0
    %2497 = vmatpush1.msra.mxu0 0.0
    %2498 = vmatprep.subr.mxu0 0.0
    %2499 = vmatpush1.msra.mxu0 0.0
    %2500 = vmatprep.subr.mxu0 0.0
    %2501 = vmatpush1.msra.mxu0 0.0
    %2502 = vmatprep.subr.mxu0 0.0
    %2503 = vmatpush1.msra.mxu0 0.0
    %2504 = vmatprep.subr.mxu0 0.0
    %2505 = vmatpush1.msra.mxu0 0.0
    %2506 = vmatprep.subr.mxu0 0.0
    %2507 = vmatpush1.msra.mxu0 0.0
    %2508 = vmatprep.subr.mxu0 0.0
    %2509 = vmatpush1.msra.mxu0 0.0
    %2510 = vmatprep.subr.mxu0 0.0
    %2511 = vmatpush1.msra.mxu0 0.0
    %2512 = vmatprep.subr.mxu0 0.0
    %2513 = vmatpush1.msra.mxu0 0.0
    %2514 = vmatprep.subr.mxu0 0.0
    %2515 = vmatpush1.msra.mxu0 0.0
    %2516 = vmatprep.subr.mxu0 0.0
    %2517 = vmatpush1.msra.mxu0 0.0
    %2518 = vmatprep.subr.mxu0 0.0
    %2519 = vmatpush1.msra.mxu0 0.0
    %2520 = vmatprep.mubr.f32.mxu0 0.0
    %2521 = vmatmul.mubr.f32.gmra.mrb[0].mxu0 %v407
    %v2522 = vpop.f32.mrb[0].mxu0
    %v2523 = vadd.f32 0.0, %v2522
    %v2524 = vpop.f32.mrb[0].mxu0
    %2525 = vdwg.mxu0
    %v2526 = vadd.f32 %v2351, %v2523
    %v2527 = vxor.u32 %v2526, 2147483648
    %v2528 = vmul.f32 %v2527, 1.442695
    %v2529 = vpow.pop %v2528
    %v2530 = vadd.f32 %v2529, 1.0
    %v2531 = vrcp.pop %v2530
    %v2532 = vmul.f32 1.0, %v2531
    %v2533 = vtanh.pop %v2526
    %v2534 = vmul.f32 %v2532, 0.0
    %2536 = vrot.lane.b32.xlu0 %v2533, 64
    %v2537 = vpop.permute.xlu0 %2536
    %v2539 = vmul.f32 %v2532, %v2537
    %2541 = vrot.lane.b32.xlu0 %v2539, 32
    %v2542 = vpop.permute.xlu0 %2541
    %v2544 = vadd.f32 %v2534, %v2542
    %v2545 = vtanh.pop %v2544
    %2547 = vrot.lane.b32.xlu0 %v2545, 64
    %v2548 = vpop.permute.xlu0 %2547
    %v2550 = vmul.f32 %v2532, %v2548
    %2551 = vmatprep.subr.mxu0 0.0
    %2552 = vmatpush1.msra.mxu0 %v2452
    %2553 = vmatprep.subr.mxu0 0.0
    %2554 = vmatpush1.msra.mxu0 %v2453
    %2555 = vmatprep.subr.mxu0 0.0
    %2556 = vmatpush1.msra.mxu0 %v2454
    %2557 = vmatprep.subr.mxu0 0.0
    %2558 = vmatpush1.msra.mxu0 %v2455
    %2559 = vmatprep.subr.mxu0 0.0
    %2560 = vmatpush1.msra.mxu0 0.0
    %2561 = vmatprep.subr.mxu0 0.0
    %2562 = vmatpush1.msra.mxu0 0.0
    %2563 = vmatprep.subr.mxu0 0.0
    %2564 = vmatpush1.msra.mxu0 0.0
    %2565 = vmatprep.subr.mxu0 0.0
    %2566 = vmatpush1.msra.mxu0 0.0
    %2567 = vmatprep.subr.mxu0 0.0
    %2568 = vmatpush1.msra.mxu0 0.0
    %2569 = vmatprep.subr.mxu0 0.0
    %2570 = vmatpush1.msra.mxu0 0.0
    %2571 = vmatprep.subr.mxu0 0.0
    %2572 = vmatpush1.msra.mxu0 0.0
    %2573 = vmatprep.subr.mxu0 0.0
    %2574 = vmatpush1.msra.mxu0 0.0
    %2575 = vmatprep.subr.mxu0 0.0
    %2576 = vmatpush1.msra.mxu0 0.0
    %2577 = vmatprep.subr.mxu0 0.0
    %2578 = vmatpush1.msra.mxu0 0.0
    %2579 = vmatprep.subr.mxu0 0.0
    %2580 = vmatpush1.msra.mxu0 0.0
    %2581 = vmatprep.subr.mxu0 0.0
    %2582 = vmatpush1.msra.mxu0 0.0
    %2583 = vmatprep.subr.mxu0 0.0
    %2584 = vmatpush1.msra.mxu0 0.0
    %2585 = vmatprep.subr.mxu0 0.0
    %2586 = vmatpush1.msra.mxu0 0.0
    %2587 = vmatprep.subr.mxu0 0.0
    %2588 = vmatpush1.msra.mxu0 0.0
    %2589 = vmatprep.subr.mxu0 0.0
    %2590 = vmatpush1.msra.mxu0 0.0
    %2591 = vmatprep.subr.mxu0 0.0
    %2592 = vmatpush1.msra.mxu0 0.0
    %2593 = vmatprep.subr.mxu0 0.0
    %2594 = vmatpush1.msra.mxu0 0.0
    %2595 = vmatprep.subr.mxu0 0.0
    %2596 = vmatpush1.msra.mxu0 0.0
    %2597 = vmatprep.subr.mxu0 0.0
    %2598 = vmatpush1.msra.mxu0 0.0
    %2599 = vmatprep.subr.mxu0 0.0
    %2600 = vmatpush1.msra.mxu0 0.0
    %2601 = vmatprep.subr.mxu0 0.0
    %2602 = vmatpush1.msra.mxu0 0.0
    %2603 = vmatprep.subr.mxu0 0.0
    %2604 = vmatpush1.msra.mxu0 0.0
    %2605 = vmatprep.subr.mxu0 0.0
    %2606 = vmatpush1.msra.mxu0 0.0
    %2607 = vmatprep.subr.mxu0 0.0
    %2608 = vmatpush1.msra.mxu0 0.0
    %2609 = vmatprep.subr.mxu0 0.0
    %2610 = vmatpush1.msra.mxu0 0.0
    %2611 = vmatprep.subr.mxu0 0.0
    %2612 = vmatpush1.msra.mxu0 0.0
    %2613 = vmatprep.subr.mxu0 0.0
    %2614 = vmatpush1.msra.mxu0 0.0
    %2615 = vmatprep.mubr.f32.mxu0 0.0
    %2616 = vmatmul.mubr.f32.gmra.mrb[0].mxu0 %v407
    %v2617 = vpop.f32.mrb[0].mxu0
    %v2618 = vadd.f32 0.0, %v2617
    %v2619 = vpop.f32.mrb[0].mxu0
    %2620 = vdwg.mxu0
    %v2622 = vrot.slane %v2618, 2
    %v2624 = vadd.f32 %v2445, %v2622
    %v2625 = vxor.u32 %v2624, 2147483648
    %v2626 = vmul.f32 %v2625, 1.442695
    %v2627 = vpow.pop %v2626
    %v2628 = vadd.f32 %v2627, 1.0
    %v2629 = vrcp.pop %v2628
    %v2630 = vmul.f32 1.0, %v2629
    %v2631 = vtanh.pop %v2624
    %v2632 = vmul.f32 %v2630, 0.0
    %2634 = vrot.lane.b32.xlu0 %v2631, 64
    %v2635 = vpop.permute.xlu0 %2634
    %v2637 = vmul.f32 %v2630, %v2635
    %2639 = vrot.lane.b32.xlu0 %v2637, 32
    %v2640 = vpop.permute.xlu0 %2639
    %v2642 = vadd.f32 %v2632, %v2640
    %v2643 = vtanh.pop %v2642
    %2645 = vrot.lane.b32.xlu0 %v2643, 64
    %v2646 = vpop.permute.xlu0 %2645
    %v2648 = vmul.f32 %v2630, %v2646
    %2650 = vrot.lane.b32.xlu0 %v2550, 32
    %v2651 = vpop.permute.xlu0 %2650
    %v2652 = vsel %vm405, %v2651, 0
    %2654 = vmatprep.subr.mxu0 0.0
    %2655 = vmatpush1.msra.mxu0 %v2448
    %2656 = vmatprep.subr.mxu0 0.0
    %2657 = vmatpush1.msra.mxu0 %v2449
    %2658 = vmatprep.subr.mxu0 0.0
    %2659 = vmatpush1.msra.mxu0 %v2450
    %2660 = vmatprep.subr.mxu0 0.0
    %2661 = vmatpush1.msra.mxu0 %v2451
    %2662 = vmatprep.subr.mxu0 0.0
    %2663 = vmatpush1.msra.mxu0 0.0
    %2664 = vmatprep.subr.mxu0 0.0
    %2665 = vmatpush1.msra.mxu0 0.0
    %2666 = vmatprep.subr.mxu0 0.0
    %2667 = vmatpush1.msra.mxu0 0.0
    %2668 = vmatprep.subr.mxu0 0.0
    %2669 = vmatpush1.msra.mxu0 0.0
    %2670 = vmatprep.subr.mxu0 0.0
    %2671 = vmatpush1.msra.mxu0 0.0
    %2672 = vmatprep.subr.mxu0 0.0
    %2673 = vmatpush1.msra.mxu0 0.0
    %2674 = vmatprep.subr.mxu0 0.0
    %2675 = vmatpush1.msra.mxu0 0.0
    %2676 = vmatprep.subr.mxu0 0.0
    %2677 = vmatpush1.msra.mxu0 0.0
    %2678 = vmatprep.subr.mxu0 0.0
    %2679 = vmatpush1.msra.mxu0 0.0
    %2680 = vmatprep.subr.mxu0 0.0
    %2681 = vmatpush1.msra.mxu0 0.0
    %2682 = vmatprep.subr.mxu0 0.0
    %2683 = vmatpush1.msra.mxu0 0.0
    %2684 = vmatprep.subr.mxu0 0.0
    %2685 = vmatpush1.msra.mxu0 0.0
    %2686 = vmatprep.subr.mxu0 0.0
    %2687 = vmatpush1.msra.mxu0 0.0
    %2688 = vmatprep.subr.mxu0 0.0
    %2689 = vmatpush1.msra.mxu0 0.0
    %2690 = vmatprep.subr.mxu0 0.0
    %2691 = vmatpush1.msra.mxu0 0.0
    %2692 = vmatprep.subr.mxu0 0.0
    %2693 = vmatpush1.msra.mxu0 0.0
    %2694 = vmatprep.subr.mxu0 0.0
    %2695 = vmatpush1.msra.mxu0 0.0
    %2696 = vmatprep.subr.mxu0 0.0
    %2697 = vmatpush1.msra.mxu0 0.0
    %2698 = vmatprep.subr.mxu0 0.0
    %2699 = vmatpush1.msra.mxu0 0.0
    %2700 = vmatprep.subr.mxu0 0.0
    %2701 = vmatpush1.msra.mxu0 0.0
    %2702 = vmatprep.subr.mxu0 0.0
    %2703 = vmatpush1.msra.mxu0 0.0
    %2704 = vmatprep.subr.mxu0 0.0
    %2705 = vmatpush1.msra.mxu0 0.0
    %2706 = vmatprep.subr.mxu0 0.0
    %2707 = vmatpush1.msra.mxu0 0.0
    %2708 = vmatprep.subr.mxu0 0.0
    %2709 = vmatpush1.msra.mxu0 0.0
    %2710 = vmatprep.subr.mxu0 0.0
    %2711 = vmatpush1.msra.mxu0 0.0
    %2712 = vmatprep.subr.mxu0 0.0
    %2713 = vmatpush1.msra.mxu0 0.0
    %2714 = vmatprep.subr.mxu0 0.0
    %2715 = vmatpush1.msra.mxu0 0.0
    %2716 = vmatprep.subr.mxu0 0.0
    %2717 = vmatpush1.msra.mxu0 0.0
    %2718 = vmatprep.mubr.f32.mxu0 0.0
    %2719 = vmatmul.mubr.f32.gmra.mrb[0].mxu0 %v2652
    %v2720 = vpop.f32.mrb[0].mxu0
    %v2721 = vadd.f32 0.0, %v2720
    %v2722 = vpop.f32.mrb[0].mxu0
    %2723 = vdwg.mxu0
    %v2725 = vrot.slane %v2721, 6
    %v2727 = vadd.f32 %v2351, %v2725
    %v2728 = vxor.u32 %v2727, 2147483648
    %v2729 = vmul.f32 %v2728, 1.442695
    %v2730 = vpow.pop %v2729
    %v2731 = vadd.f32 %v2730, 1.0
    %v2732 = vrcp.pop %v2731
    %v2733 = vmul.f32 1.0, %v2732
    %v2734 = vtanh.pop %v2727
    %v2736 = vrot.slane %v2544, 6
    %v2738 = vmul.f32 %v2733, %v2736
    %2740 = vrot.lane.b32.xlu0 %v2734, 64
    %v2741 = vpop.permute.xlu0 %2740
    %v2743 = vmul.f32 %v2733, %v2741
    %2745 = vrot.lane.b32.xlu0 %v2743, 32
    %v2746 = vpop.permute.xlu0 %2745
    %v2748 = vadd.f32 %v2738, %v2746
    %v2749 = vtanh.pop %v2748
    %2751 = vrot.lane.b32.xlu0 %v2749, 64
    %v2752 = vpop.permute.xlu0 %2751
    %v2754 = vmul.f32 %v2733, %v2752
    %v2756 = vrot.slane %v2754, 2
    %2757 = vrot.lane.b32.xlu0 %v2756, 32
    %v2758 = vpop.permute.xlu0 %2757
    %v2759 = vsel %vm405, %v2758, 0
    %2761 = vmatprep.subr.mxu0 0.0
    %2762 = vmatpush1.msra.mxu0 %v2448
    %2763 = vmatprep.subr.mxu0 0.0
    %2764 = vmatpush1.msra.mxu0 %v2449
    %2765 = vmatprep.subr.mxu0 0.0
    %2766 = vmatpush1.msra.mxu0 %v2450
    %2767 = vmatprep.subr.mxu0 0.0
    %2768 = vmatpush1.msra.mxu0 %v2451
    %2769 = vmatprep.subr.mxu0 0.0
    %2770 = vmatpush1.msra.mxu0 0.0
    %2771 = vmatprep.subr.mxu0 0.0
    %2772 = vmatpush1.msra.mxu0 0.0
    %2773 = vmatprep.subr.mxu0 0.0
    %2774 = vmatpush1.msra.mxu0 0.0
    %2775 = vmatprep.subr.mxu0 0.0
    %2776 = vmatpush1.msra.mxu0 0.0
    %2777 = vmatprep.subr.mxu0 0.0
    %2778 = vmatpush1.msra.mxu0 0.0
    %2779 = vmatprep.subr.mxu0 0.0
    %2780 = vmatpush1.msra.mxu0 0.0
    %2781 = vmatprep.subr.mxu0 0.0
    %2782 = vmatpush1.msra.mxu0 0.0
    %2783 = vmatprep.subr.mxu0 0.0
    %2784 = vmatpush1.msra.mxu0 0.0
    %2785 = vmatprep.subr.mxu0 0.0
    %2786 = vmatpush1.msra.mxu0 0.0
    %2787 = vmatprep.subr.mxu0 0.0
    %2788 = vmatpush1.msra.mxu0 0.0
    %2789 = vmatprep.subr.mxu0 0.0
    %2790 = vmatpush1.msra.mxu0 0.0
    %2791 = vmatprep.subr.mxu0 0.0
    %2792 = vmatpush1.msra.mxu0 0.0
    %2793 = vmatprep.subr.mxu0 0.0
    %2794 = vmatpush1.msra.mxu0 0.0
    %2795 = vmatprep.subr.mxu0 0.0
    %2796 = vmatpush1.msra.mxu0 0.0
    %2797 = vmatprep.subr.mxu0 0.0
    %2798 = vmatpush1.msra.mxu0 0.0
    %2799 = vmatprep.subr.mxu0 0.0
    %2800 = vmatpush1.msra.mxu0 0.0
    %2801 = vmatprep.subr.mxu0 0.0
    %2802 = vmatpush1.msra.mxu0 0.0
    %2803 = vmatprep.subr.mxu0 0.0
    %2804 = vmatpush1.msra.mxu0 0.0
    %2805 = vmatprep.subr.mxu0 0.0
    %2806 = vmatpush1.msra.mxu0 0.0
    %2807 = vmatprep.subr.mxu0 0.0
    %2808 = vmatpush1.msra.mxu0 0.0
    %2809 = vmatprep.subr.mxu0 0.0
    %2810 = vmatpush1.msra.mxu0 0.0
    %2811 = vmatprep.subr.mxu0 0.0
    %2812 = vmatpush1.msra.mxu0 0.0
    %2813 = vmatprep.subr.mxu0 0.0
    %2814 = vmatpush1.msra.mxu0 0.0
    %2815 = vmatprep.subr.mxu0 0.0
    %2816 = vmatpush1.msra.mxu0 0.0
    %2817 = vmatprep.subr.mxu0 0.0
    %2818 = vmatpush1.msra.mxu0 0.0
    %2819 = vmatprep.subr.mxu0 0.0
    %2820 = vmatpush1.msra.mxu0 0.0
    %2821 = vmatprep.subr.mxu0 0.0
    %2822 = vmatpush1.msra.mxu0 0.0
    %2823 = vmatprep.subr.mxu0 0.0
    %2824 = vmatpush1.msra.mxu0 0.0
    %2825 = vmatprep.mubr.f32.mxu0 0.0
    %2826 = vmatmul.mubr.f32.gmra.mrb[0].mxu0 %v2759
    %v2827 = vpop.f32.mrb[0].mxu0
    %v2828 = vadd.f32 0.0, %v2827
    %v2829 = vpop.f32.mrb[0].mxu0
    %2830 = vdwg.mxu0
    %v2832 = vrot.slane %v2828, 4
    %v2834 = vadd.f32 %v2351, %v2832
    %v2835 = vxor.u32 %v2834, 2147483648
    %v2836 = vmul.f32 %v2835, 1.442695
    %v2837 = vpow.pop %v2836
    %v2838 = vadd.f32 %v2837, 1.0
    %v2839 = vrcp.pop %v2838
    %v2840 = vmul.f32 1.0, %v2839
    %v2841 = vtanh.pop %v2834
    %v2843 = vrot.slane %v2748, 6
    %v2845 = vmul.f32 %v2840, %v2843
    %2847 = vrot.lane.b32.xlu0 %v2841, 64
    %v2848 = vpop.permute.xlu0 %2847
    %v2850 = vmul.f32 %v2840, %v2848
    %2852 = vrot.lane.b32.xlu0 %v2850, 32
    %v2853 = vpop.permute.xlu0 %2852
    %v2855 = vadd.f32 %v2845, %v2853
    %v2856 = vtanh.pop %v2855
    %2858 = vrot.lane.b32.xlu0 %v2856, 64
    %v2859 = vpop.permute.xlu0 %2858
    %v2861 = vmul.f32 %v2840, %v2859
    %v2863 = vrot.slane %v2861, 4
    %2864 = vrot.lane.b32.xlu0 %v2863, 32
    %v2865 = vpop.permute.xlu0 %2864
    %v2866 = vsel %vm405, %v2865, 0
    %2868 = vmatprep.subr.mxu0 0.0
    %2869 = vmatpush1.msra.mxu0 %v2448
    %2870 = vmatprep.subr.mxu0 0.0
    %2871 = vmatpush1.msra.mxu0 %v2449
    %2872 = vmatprep.subr.mxu0 0.0
    %2873 = vmatpush1.msra.mxu0 %v2450
    %2874 = vmatprep.subr.mxu0 0.0
    %2875 = vmatpush1.msra.mxu0 %v2451
    %2876 = vmatprep.subr.mxu0 0.0
    %2877 = vmatpush1.msra.mxu0 0.0
    %2878 = vmatprep.subr.mxu0 0.0
    %2879 = vmatpush1.msra.mxu0 0.0
    %2880 = vmatprep.subr.mxu0 0.0
    %2881 = vmatpush1.msra.mxu0 0.0
    %2882 = vmatprep.subr.mxu0 0.0
    %2883 = vmatpush1.msra.mxu0 0.0
    %2884 = vmatprep.subr.mxu0 0.0
    %2885 = vmatpush1.msra.mxu0 0.0
    %2886 = vmatprep.subr.mxu0 0.0
    %2887 = vmatpush1.msra.mxu0 0.0
    %2888 = vmatprep.subr.mxu0 0.0
    %2889 = vmatpush1.msra.mxu0 0.0
    %2890 = vmatprep.subr.mxu0 0.0
    %2891 = vmatpush1.msra.mxu0 0.0
    %2892 = vmatprep.subr.mxu0 0.0
    %2893 = vmatpush1.msra.mxu0 0.0
    %2894 = vmatprep.subr.mxu0 0.0
    %2895 = vmatpush1.msra.mxu0 0.0
    %2896 = vmatprep.subr.mxu0 0.0
    %2897 = vmatpush1.msra.mxu0 0.0
    %2898 = vmatprep.subr.mxu0 0.0
    %2899 = vmatpush1.msra.mxu0 0.0
    %2900 = vmatprep.subr.mxu0 0.0
    %2901 = vmatpush1.msra.mxu0 0.0
    %2902 = vmatprep.subr.mxu0 0.0
    %2903 = vmatpush1.msra.mxu0 0.0
    %2904 = vmatprep.subr.mxu0 0.0
    %2905 = vmatpush1.msra.mxu0 0.0
    %2906 = vmatprep.subr.mxu0 0.0
    %2907 = vmatpush1.msra.mxu0 0.0
    %2908 = vmatprep.subr.mxu0 0.0
    %2909 = vmatpush1.msra.mxu0 0.0
    %2910 = vmatprep.subr.mxu0 0.0
    %2911 = vmatpush1.msra.mxu0 0.0
    %2912 = vmatprep.subr.mxu0 0.0
    %2913 = vmatpush1.msra.mxu0 0.0
    %2914 = vmatprep.subr.mxu0 0.0
    %2915 = vmatpush1.msra.mxu0 0.0
    %2916 = vmatprep.subr.mxu0 0.0
    %2917 = vmatpush1.msra.mxu0 0.0
    %2918 = vmatprep.subr.mxu0 0.0
    %2919 = vmatpush1.msra.mxu0 0.0
    %2920 = vmatprep.subr.mxu0 0.0
    %2921 = vmatpush1.msra.mxu0 0.0
    %2922 = vmatprep.subr.mxu0 0.0
    %2923 = vmatpush1.msra.mxu0 0.0
    %2924 = vmatprep.subr.mxu0 0.0
    %2925 = vmatpush1.msra.mxu0 0.0
    %2926 = vmatprep.subr.mxu0 0.0
    %2927 = vmatpush1.msra.mxu0 0.0
    %2928 = vmatprep.subr.mxu0 0.0
    %2929 = vmatpush1.msra.mxu0 0.0
    %2930 = vmatprep.subr.mxu0 0.0
    %2931 = vmatpush1.msra.mxu0 0.0
    %2932 = vmatprep.mubr.f32.mxu0 0.0
    %2933 = vmatmul.mubr.f32.gmra.mrb[0].mxu0 %v2866
    %v2934 = vpop.f32.mrb[0].mxu0
    %v2935 = vadd.f32 0.0, %v2934
    %v2936 = vpop.f32.mrb[0].mxu0
    %2937 = vdwg.mxu0
    %v2939 = vrot.slane %v2935, 2
    %v2941 = vadd.f32 %v2351, %v2939
    %v2942 = vxor.u32 %v2941, 2147483648
    %v2943 = vmul.f32 %v2942, 1.442695
    %v2944 = vpow.pop %v2943
    %v2945 = vadd.f32 %v2944, 1.0
    %v2946 = vrcp.pop %v2945
    %v2947 = vmul.f32 1.0, %v2946
    %v2948 = vtanh.pop %v2941
    %v2950 = vrot.slane %v2855, 6
    %v2952 = vmul.f32 %v2947, %v2950
    %2954 = vrot.lane.b32.xlu0 %v2948, 64
    %v2955 = vpop.permute.xlu0 %2954
    %v2957 = vmul.f32 %v2947, %v2955
    %2959 = vrot.lane.b32.xlu0 %v2957, 32
    %v2960 = vpop.permute.xlu0 %2959
    %v2962 = vadd.f32 %v2952, %v2960
    %v2963 = vtanh.pop %v2962
    %2965 = vrot.lane.b32.xlu0 %v2963, 64
    %v2966 = vpop.permute.xlu0 %2965
    %v2968 = vmul.f32 %v2947, %v2966
    %v2970 = vrot.slane %v2968, 6
    %2971 = vrot.lane.b32.xlu0 %v2970, 32
    %v2972 = vpop.permute.xlu0 %2971
    %v2973 = vsel %vm405, %v2972, 0
    %2975 = vmatprep.subr.mxu0 0.0
    %2976 = vmatpush1.msra.mxu0 %v2448
    %2977 = vmatprep.subr.mxu0 0.0
    %2978 = vmatpush1.msra.mxu0 %v2449
    %2979 = vmatprep.subr.mxu0 0.0
    %2980 = vmatpush1.msra.mxu0 %v2450
    %2981 = vmatprep.subr.mxu0 0.0
    %2982 = vmatpush1.msra.mxu0 %v2451
    %2983 = vmatprep.subr.mxu0 0.0
    %2984 = vmatpush1.msra.mxu0 0.0
    %2985 = vmatprep.subr.mxu0 0.0
    %2986 = vmatpush1.msra.mxu0 0.0
    %2987 = vmatprep.subr.mxu0 0.0
    %2988 = vmatpush1.msra.mxu0 0.0
    %2989 = vmatprep.subr.mxu0 0.0
    %2990 = vmatpush1.msra.mxu0 0.0
    %2991 = vmatprep.subr.mxu0 0.0
    %2992 = vmatpush1.msra.mxu0 0.0
    %2993 = vmatprep.subr.mxu0 0.0
    %2994 = vmatpush1.msra.mxu0 0.0
    %2995 = vmatprep.subr.mxu0 0.0
    %2996 = vmatpush1.msra.mxu0 0.0
    %2997 = vmatprep.subr.mxu0 0.0
    %2998 = vmatpush1.msra.mxu0 0.0
    %2999 = vmatprep.subr.mxu0 0.0
    %3000 = vmatpush1.msra.mxu0 0.0
    %3001 = vmatprep.subr.mxu0 0.0
    %3002 = vmatpush1.msra.mxu0 0.0
    %3003 = vmatprep.subr.mxu0 0.0
    %3004 = vmatpush1.msra.mxu0 0.0
    %3005 = vmatprep.subr.mxu0 0.0
    %3006 = vmatpush1.msra.mxu0 0.0
    %3007 = vmatprep.subr.mxu0 0.0
    %3008 = vmatpush1.msra.mxu0 0.0
    %3009 = vmatprep.subr.mxu0 0.0
    %3010 = vmatpush1.msra.mxu0 0.0
    %3011 = vmatprep.subr.mxu0 0.0
    %3012 = vmatpush1.msra.mxu0 0.0
    %3013 = vmatprep.subr.mxu0 0.0
    %3014 = vmatpush1.msra.mxu0 0.0
    %3015 = vmatprep.subr.mxu0 0.0
    %3016 = vmatpush1.msra.mxu0 0.0
    %3017 = vmatprep.subr.mxu0 0.0
    %3018 = vmatpush1.msra.mxu0 0.0
    %3019 = vmatprep.subr.mxu0 0.0
    %3020 = vmatpush1.msra.mxu0 0.0
    %3021 = vmatprep.subr.mxu0 0.0
    %3022 = vmatpush1.msra.mxu0 0.0
    %3023 = vmatprep.subr.mxu0 0.0
    %3024 = vmatpush1.msra.mxu0 0.0
    %3025 = vmatprep.subr.mxu0 0.0
    %3026 = vmatpush1.msra.mxu0 0.0
    %3027 = vmatprep.subr.mxu0 0.0
    %3028 = vmatpush1.msra.mxu0 0.0
    %3029 = vmatprep.subr.mxu0 0.0
    %3030 = vmatpush1.msra.mxu0 0.0
    %3031 = vmatprep.subr.mxu0 0.0
    %3032 = vmatpush1.msra.mxu0 0.0
    %3033 = vmatprep.subr.mxu0 0.0
    %3034 = vmatpush1.msra.mxu0 0.0
    %3035 = vmatprep.subr.mxu0 0.0
    %3036 = vmatpush1.msra.mxu0 0.0
    %3037 = vmatprep.subr.mxu0 0.0
    %3038 = vmatpush1.msra.mxu0 0.0
    %3039 = vmatprep.mubr.f32.mxu0 0.0
    %3040 = vmatmul.mubr.f32.gmra.mrb[0].mxu0 %v2973
    %v3041 = vpop.f32.mrb[0].mxu0
    %v3042 = vadd.f32 0.0, %v3041
    %v3043 = vpop.f32.mrb[0].mxu0
    %3044 = vdwg.mxu0
    %v3045 = vadd.f32 %v2356, %v3042
    %v3046 = vxor.u32 %v3045, 2147483648
    %v3047 = vmul.f32 %v3046, 1.442695
    %v3048 = vpow.pop %v3047
    %v3049 = vadd.f32 %v3048, 1.0
    %v3050 = vrcp.pop %v3049
    %v3051 = vmul.f32 1.0, %v3050
    %v3052 = vtanh.pop %v3045
    %v3054 = vrot.slane %v2962, 6
    %v3056 = vmul.f32 %v3051, %v3054
    %3058 = vrot.lane.b32.xlu0 %v3052, 64
    %v3059 = vpop.permute.xlu0 %3058
    %v3061 = vmul.f32 %v3051, %v3059
    %3063 = vrot.lane.b32.xlu0 %v3061, 32
    %v3064 = vpop.permute.xlu0 %3063
    %v3066 = vadd.f32 %v3056, %v3064
    %v3067 = vtanh.pop %v3066
    %3069 = vrot.lane.b32.xlu0 %v3067, 64
    %v3070 = vpop.permute.xlu0 %3069
    %v3072 = vmul.f32 %v3051, %v3070
    %3074 = vrot.lane.b32.xlu0 %v3072, 32
    %v3075 = vpop.permute.xlu0 %3074
    %v3076 = vsel %vm405, %v3075, 0
    %3078 = vmatprep.subr.mxu0 0.0
    %3079 = vmatpush1.msra.mxu0 %v2448
    %3080 = vmatprep.subr.mxu0 0.0
    %3081 = vmatpush1.msra.mxu0 %v2449
    %3082 = vmatprep.subr.mxu0 0.0
    %3083 = vmatpush1.msra.mxu0 %v2450
    %3084 = vmatprep.subr.mxu0 0.0
    %3085 = vmatpush1.msra.mxu0 %v2451
    %3086 = vmatprep.subr.mxu0 0.0
    %3087 = vmatpush1.msra.mxu0 0.0
    %3088 = vmatprep.subr.mxu0 0.0
    %3089 = vmatpush1.msra.mxu0 0.0
    %3090 = vmatprep.subr.mxu0 0.0
    %3091 = vmatpush1.msra.mxu0 0.0
    %3092 = vmatprep.subr.mxu0 0.0
    %3093 = vmatpush1.msra.mxu0 0.0
    %3094 = vmatprep.subr.mxu0 0.0
    %3095 = vmatpush1.msra.mxu0 0.0
    %3096 = vmatprep.subr.mxu0 0.0
    %3097 = vmatpush1.msra.mxu0 0.0
    %3098 = vmatprep.subr.mxu0 0.0
    %3099 = vmatpush1.msra.mxu0 0.0
    %3100 = vmatprep.subr.mxu0 0.0
    %3101 = vmatpush1.msra.mxu0 0.0
    %3102 = vmatprep.subr.mxu0 0.0
    %3103 = vmatpush1.msra.mxu0 0.0
    %3104 = vmatprep.subr.mxu0 0.0
    %3105 = vmatpush1.msra.mxu0 0.0
    %3106 = vmatprep.subr.mxu0 0.0
    %3107 = vmatpush1.msra.mxu0 0.0
    %3108 = vmatprep.subr.mxu0 0.0
    %3109 = vmatpush1.msra.mxu0 0.0
    %3110 = vmatprep.subr.mxu0 0.0
    %3111 = vmatpush1.msra.mxu0 0.0
    %3112 = vmatprep.subr.mxu0 0.0
    %3113 = vmatpush1.msra.mxu0 0.0
    %3114 = vmatprep.subr.mxu0 0.0
    %3115 = vmatpush1.msra.mxu0 0.0
    %3116 = vmatprep.subr.mxu0 0.0
    %3117 = vmatpush1.msra.mxu0 0.0
    %3118 = vmatprep.subr.mxu0 0.0
    %3119 = vmatpush1.msra.mxu0 0.0
    %3120 = vmatprep.subr.mxu0 0.0
    %3121 = vmatpush1.msra.mxu0 0.0
    %3122 = vmatprep.subr.mxu0 0.0
    %3123 = vmatpush1.msra.mxu0 0.0
    %3124 = vmatprep.subr.mxu0 0.0
    %3125 = vmatpush1.msra.mxu0 0.0
    %3126 = vmatprep.subr.mxu0 0.0
    %3127 = vmatpush1.msra.mxu0 0.0
    %3128 = vmatprep.subr.mxu0 0.0
    %3129 = vmatpush1.msra.mxu0 0.0
    %3130 = vmatprep.subr.mxu0 0.0
    %3131 = vmatpush1.msra.mxu0 0.0
    %3132 = vmatprep.subr.mxu0 0.0
    %3133 = vmatpush1.msra.mxu0 0.0
    %3134 = vmatprep.subr.mxu0 0.0
    %3135 = vmatpush1.msra.mxu0 0.0
    %3136 = vmatprep.subr.mxu0 0.0
    %3137 = vmatpush1.msra.mxu0 0.0
    %3138 = vmatprep.subr.mxu0 0.0
    %3139 = vmatpush1.msra.mxu0 0.0
    %3140 = vmatprep.subr.mxu0 0.0
    %3141 = vmatpush1.msra.mxu0 0.0
    %3142 = vmatprep.mubr.f32.mxu0 0.0
    %3143 = vmatmul.mubr.f32.gmra.mrb[0].mxu0 %v3076
    %v3144 = vpop.f32.mrb[0].mxu0
    %v3145 = vadd.f32 0.0, %v3144
    %v3146 = vpop.f32.mrb[0].mxu0
    %3147 = vdwg.mxu0
    %v3149 = vrot.slane %v3145, 6
    %v3151 = vadd.f32 %v2356, %v3149
    %v3152 = vxor.u32 %v3151, 2147483648
    %v3153 = vmul.f32 %v3152, 1.442695
    %v3154 = vpow.pop %v3153
    %v3155 = vadd.f32 %v3154, 1.0
    %v3156 = vrcp.pop %v3155
    %v3157 = vmul.f32 1.0, %v3156
    %v3158 = vtanh.pop %v3151
    %v3160 = vrot.slane %v3066, 6
    %v3162 = vmul.f32 %v3157, %v3160
    %3164 = vrot.lane.b32.xlu0 %v3158, 64
    %v3165 = vpop.permute.xlu0 %3164
    %v3167 = vmul.f32 %v3157, %v3165
    %3169 = vrot.lane.b32.xlu0 %v3167, 32
    %v3170 = vpop.permute.xlu0 %3169
    %v3172 = vadd.f32 %v3162, %v3170
    %v3173 = vtanh.pop %v3172
    %3175 = vrot.lane.b32.xlu0 %v3173, 64
    %v3176 = vpop.permute.xlu0 %3175
    %v3178 = vmul.f32 %v3157, %v3176
    %v3180 = vrot.slane %v3178, 2
    %3181 = vrot.lane.b32.xlu0 %v3180, 32
    %v3182 = vpop.permute.xlu0 %3181
    %v3183 = vsel %vm405, %v3182, 0
    %3185 = vmatprep.subr.mxu0 0.0
    %3186 = vmatpush1.msra.mxu0 %v2448
    %3187 = vmatprep.subr.mxu0 0.0
    %3188 = vmatpush1.msra.mxu0 %v2449
    %3189 = vmatprep.subr.mxu0 0.0
    %3190 = vmatpush1.msra.mxu0 %v2450
    %3191 = vmatprep.subr.mxu0 0.0
    %3192 = vmatpush1.msra.mxu0 %v2451
    %3193 = vmatprep.subr.mxu0 0.0
    %3194 = vmatpush1.msra.mxu0 0.0
    %3195 = vmatprep.subr.mxu0 0.0
    %3196 = vmatpush1.msra.mxu0 0.0
    %3197 = vmatprep.subr.mxu0 0.0
    %3198 = vmatpush1.msra.mxu0 0.0
    %3199 = vmatprep.subr.mxu0 0.0
    %3200 = vmatpush1.msra.mxu0 0.0
    %3201 = vmatprep.subr.mxu0 0.0
    %3202 = vmatpush1.msra.mxu0 0.0
    %3203 = vmatprep.subr.mxu0 0.0
    %3204 = vmatpush1.msra.mxu0 0.0
    %3205 = vmatprep.subr.mxu0 0.0
    %3206 = vmatpush1.msra.mxu0 0.0
    %3207 = vmatprep.subr.mxu0 0.0
    %3208 = vmatpush1.msra.mxu0 0.0
    %3209 = vmatprep.subr.mxu0 0.0
    %3210 = vmatpush1.msra.mxu0 0.0
    %3211 = vmatprep.subr.mxu0 0.0
    %3212 = vmatpush1.msra.mxu0 0.0
    %3213 = vmatprep.subr.mxu0 0.0
    %3214 = vmatpush1.msra.mxu0 0.0
    %3215 = vmatprep.subr.mxu0 0.0
    %3216 = vmatpush1.msra.mxu0 0.0
    %3217 = vmatprep.subr.mxu0 0.0
    %3218 = vmatpush1.msra.mxu0 0.0
    %3219 = vmatprep.subr.mxu0 0.0
    %3220 = vmatpush1.msra.mxu0 0.0
    %3221 = vmatprep.subr.mxu0 0.0
    %3222 = vmatpush1.msra.mxu0 0.0
    %3223 = vmatprep.subr.mxu0 0.0
    %3224 = vmatpush1.msra.mxu0 0.0
    %3225 = vmatprep.subr.mxu0 0.0
    %3226 = vmatpush1.msra.mxu0 0.0
    %3227 = vmatprep.subr.mxu0 0.0
    %3228 = vmatpush1.msra.mxu0 0.0
    %3229 = vmatprep.subr.mxu0 0.0
    %3230 = vmatpush1.msra.mxu0 0.0
    %3231 = vmatprep.subr.mxu0 0.0
    %3232 = vmatpush1.msra.mxu0 0.0
    %3233 = vmatprep.subr.mxu0 0.0
    %3234 = vmatpush1.msra.mxu0 0.0
    %3235 = vmatprep.subr.mxu0 0.0
    %3236 = vmatpush1.msra.mxu0 0.0
    %3237 = vmatprep.subr.mxu0 0.0
    %3238 = vmatpush1.msra.mxu0 0.0
    %3239 = vmatprep.subr.mxu0 0.0
    %3240 = vmatpush1.msra.mxu0 0.0
    %3241 = vmatprep.subr.mxu0 0.0
    %3242 = vmatpush1.msra.mxu0 0.0
    %3243 = vmatprep.subr.mxu0 0.0
    %3244 = vmatpush1.msra.mxu0 0.0
    %3245 = vmatprep.subr.mxu0 0.0
    %3246 = vmatpush1.msra.mxu0 0.0
    %3247 = vmatprep.subr.mxu0 0.0
    %3248 = vmatpush1.msra.mxu0 0.0
    %3249 = vmatprep.mubr.f32.mxu0 0.0
    %3250 = vmatmul.mubr.f32.gmra.mrb[0].mxu0 %v3183
    %v3251 = vpop.f32.mrb[0].mxu0
    %v3252 = vadd.f32 0.0, %v3251
    %v3253 = vpop.f32.mrb[0].mxu0
    %3254 = vdwg.mxu0
    %v3256 = vrot.slane %v3252, 4
    %v3258 = vadd.f32 %v2356, %v3256
    %v3259 = vxor.u32 %v3258, 2147483648
    %v3260 = vmul.f32 %v3259, 1.442695
    %v3261 = vpow.pop %v3260
    %v3262 = vadd.f32 %v3261, 1.0
    %v3263 = vrcp.pop %v3262
    %v3264 = vmul.f32 1.0, %v3263
    %v3265 = vtanh.pop %v3258
    %v3267 = vrot.slane %v3172, 6
    %v3269 = vmul.f32 %v3264, %v3267
    %3271 = vrot.lane.b32.xlu0 %v3265, 64
    %v3272 = vpop.permute.xlu0 %3271
    %v3274 = vmul.f32 %v3264, %v3272
    %3276 = vrot.lane.b32.xlu0 %v3274, 32
    %v3277 = vpop.permute.xlu0 %3276
    %v3279 = vadd.f32 %v3269, %v3277
    %v3280 = vtanh.pop %v3279
    %3282 = vrot.lane.b32.xlu0 %v3280, 64
    %v3283 = vpop.permute.xlu0 %3282
    %v3285 = vmul.f32 %v3264, %v3283
    %v3287 = vrot.slane %v3285, 4
    %3288 = vrot.lane.b32.xlu0 %v3287, 32
    %v3289 = vpop.permute.xlu0 %3288
    %v3290 = vsel %vm405, %v3289, 0
    %3292 = vmatprep.subr.mxu0 0.0
    %3293 = vmatpush1.msra.mxu0 %v2448
    %3294 = vmatprep.subr.mxu0 0.0
    %3295 = vmatpush1.msra.mxu0 %v2449
    %3296 = vmatprep.subr.mxu0 0.0
    %3297 = vmatpush1.msra.mxu0 %v2450
    %3298 = vmatprep.subr.mxu0 0.0
    %3299 = vmatpush1.msra.mxu0 %v2451
    %3300 = vmatprep.subr.mxu0 0.0
    %3301 = vmatpush1.msra.mxu0 0.0
    %3302 = vmatprep.subr.mxu0 0.0
    %3303 = vmatpush1.msra.mxu0 0.0
    %3304 = vmatprep.subr.mxu0 0.0
    %3305 = vmatpush1.msra.mxu0 0.0
    %3306 = vmatprep.subr.mxu0 0.0
    %3307 = vmatpush1.msra.mxu0 0.0
    %3308 = vmatprep.subr.mxu0 0.0
    %3309 = vmatpush1.msra.mxu0 0.0
    %3310 = vmatprep.subr.mxu0 0.0
    %3311 = vmatpush1.msra.mxu0 0.0
    %3312 = vmatprep.subr.mxu0 0.0
    %3313 = vmatpush1.msra.mxu0 0.0
    %3314 = vmatprep.subr.mxu0 0.0
    %3315 = vmatpush1.msra.mxu0 0.0
    %3316 = vmatprep.subr.mxu0 0.0
    %3317 = vmatpush1.msra.mxu0 0.0
    %3318 = vmatprep.subr.mxu0 0.0
    %3319 = vmatpush1.msra.mxu0 0.0
    %3320 = vmatprep.subr.mxu0 0.0
    %3321 = vmatpush1.msra.mxu0 0.0
    %3322 = vmatprep.subr.mxu0 0.0
    %3323 = vmatpush1.msra.mxu0 0.0
    %3324 = vmatprep.subr.mxu0 0.0
    %3325 = vmatpush1.msra.mxu0 0.0
    %3326 = vmatprep.subr.mxu0 0.0
    %3327 = vmatpush1.msra.mxu0 0.0
    %3328 = vmatprep.subr.mxu0 0.0
    %3329 = vmatpush1.msra.mxu0 0.0
    %3330 = vmatprep.subr.mxu0 0.0
    %3331 = vmatpush1.msra.mxu0 0.0
    %3332 = vmatprep.subr.mxu0 0.0
    %3333 = vmatpush1.msra.mxu0 0.0
    %3334 = vmatprep.subr.mxu0 0.0
    %3335 = vmatpush1.msra.mxu0 0.0
    %3336 = vmatprep.subr.mxu0 0.0
    %3337 = vmatpush1.msra.mxu0 0.0
    %3338 = vmatprep.subr.mxu0 0.0
    %3339 = vmatpush1.msra.mxu0 0.0
    %3340 = vmatprep.subr.mxu0 0.0
    %3341 = vmatpush1.msra.mxu0 0.0
    %3342 = vmatprep.subr.mxu0 0.0
    %3343 = vmatpush1.msra.mxu0 0.0
    %3344 = vmatprep.subr.mxu0 0.0
    %3345 = vmatpush1.msra.mxu0 0.0
    %3346 = vmatprep.subr.mxu0 0.0
    %3347 = vmatpush1.msra.mxu0 0.0
    %3348 = vmatprep.subr.mxu0 0.0
    %3349 = vmatpush1.msra.mxu0 0.0
    %3350 = vmatprep.subr.mxu0 0.0
    %3351 = vmatpush1.msra.mxu0 0.0
    %3352 = vmatprep.subr.mxu0 0.0
    %3353 = vmatpush1.msra.mxu0 0.0
    %3354 = vmatprep.subr.mxu0 0.0
    %3355 = vmatpush1.msra.mxu0 0.0
    %3356 = vmatprep.mubr.f32.mxu0 0.0
    %3357 = vmatmul.mubr.f32.gmra.mrb[0].mxu0 %v3290
    %v3358 = vpop.f32.mrb[0].mxu0
    %v3359 = vadd.f32 0.0, %v3358
    %v3360 = vpop.f32.mrb[0].mxu0
    %3361 = vdwg.mxu0
    %v3363 = vrot.slane %v3359, 2
    %v3365 = vadd.f32 %v2356, %v3363
    %v3366 = vxor.u32 %v3365, 2147483648
    %v3367 = vmul.f32 %v3366, 1.442695
    %v3368 = vpow.pop %v3367
    %v3369 = vadd.f32 %v3368, 1.0
    %v3370 = vrcp.pop %v3369
    %v3371 = vmul.f32 1.0, %v3370
    %v3372 = vtanh.pop %v3365
    %v3374 = vrot.slane %v3279, 6
    %v3376 = vmul.f32 %v3371, %v3374
    %3378 = vrot.lane.b32.xlu0 %v3372, 64
    %v3379 = vpop.permute.xlu0 %3378
    %v3381 = vmul.f32 %v3371, %v3379
    %3383 = vrot.lane.b32.xlu0 %v3381, 32
    %v3384 = vpop.permute.xlu0 %3383
    %v3386 = vadd.f32 %v3376, %v3384
    %v3387 = vtanh.pop %v3386
    %3389 = vrot.lane.b32.xlu0 %v3387, 64
    %v3390 = vpop.permute.xlu0 %3389
    %v3392 = vmul.f32 %v3371, %v3390
    %3394 = vrot.lane.b32.xlu0 %v3392, 32
    %v3395 = vpop.permute.xlu0 %3394
    %3398 = vrot.lane.b32.xlu0 %v2648, 64
    %v3399 = vpop.permute.xlu0 %3398
    %v3401 = vsel %vm405, %v3395, %v3399
    %vm3402 = vcmask 523270
    %3403 = vst.msk [vmem:[#allocation19 - $0x6] sm:$0xc0] %vm3402, %v3401
    %v3404 = vld [vmem:[#allocation16] sm:$0xff]
    %v3405 = vld [vmem:[#allocation16 + $0x8] sm:$0xff]
    %v3406 = vld [vmem:[#allocation16 + $0x10] sm:$0xff]
    %v3407 = vld [vmem:[#allocation16 + $0x18] sm:$0xff]
    %v3408 = vld [vmem:[#allocation16 + $0x20] sm:$0xff]
    %v3409 = vld [vmem:[#allocation16 + $0x28] sm:$0xff]
    %v3410 = vld [vmem:[#allocation16 + $0x30] sm:$0xff]
    %v3411 = vld [vmem:[#allocation16 + $0x38] sm:$0xff]
    %v3412 = vld [vmem:[#allocation17] sm:$0x1]
    %v3414 = vlaneseq
    %v3415 = vshrl.u32 %v3414, 7
    %v3416 = vsub.s32 0, %v3415
    %v3417 = vrot.slane %v3412, %v3416
    %v3420 = vrot.slane %v3401, 6
    %v3421 = vsel %vm2279, %v3420, 0
    %3423 = vmatprep.subr.mxu0 0.0
    %3424 = vmatpush1.msra.mxu0 %v3404
    %3425 = vmatprep.subr.mxu0 0.0
    %3426 = vmatpush1.msra.mxu0 %v3405
    %3427 = vmatprep.subr.mxu0 0.0
    %3428 = vmatpush1.msra.mxu0 %v3406
    %3429 = vmatprep.subr.mxu0 0.0
    %3430 = vmatpush1.msra.mxu0 %v3407
    %3431 = vmatprep.subr.mxu0 0.0
    %3432 = vmatpush1.msra.mxu0 %v3408
    %3433 = vmatprep.subr.mxu0 0.0
    %3434 = vmatpush1.msra.mxu0 %v3409
    %3435 = vmatprep.subr.mxu0 0.0
    %3436 = vmatpush1.msra.mxu0 %v3410
    %3437 = vmatprep.subr.mxu0 0.0
    %3438 = vmatpush1.msra.mxu0 %v3411
    %3439 = vmatprep.subr.mxu0 0.0
    %3440 = vmatpush1.msra.mxu0 0.0
    %3441 = vmatprep.subr.mxu0 0.0
    %3442 = vmatpush1.msra.mxu0 0.0
    %3443 = vmatprep.subr.mxu0 0.0
    %3444 = vmatpush1.msra.mxu0 0.0
    %3445 = vmatprep.subr.mxu0 0.0
    %3446 = vmatpush1.msra.mxu0 0.0
    %3447 = vmatprep.subr.mxu0 0.0
    %3448 = vmatpush1.msra.mxu0 0.0
    %3449 = vmatprep.subr.mxu0 0.0
    %3450 = vmatpush1.msra.mxu0 0.0
    %3451 = vmatprep.subr.mxu0 0.0
    %3452 = vmatpush1.msra.mxu0 0.0
    %3453 = vmatprep.subr.mxu0 0.0
    %3454 = vmatpush1.msra.mxu0 0.0
    %3455 = vmatprep.subr.mxu0 0.0
    %3456 = vmatpush1.msra.mxu0 0.0
    %3457 = vmatprep.subr.mxu0 0.0
    %3458 = vmatpush1.msra.mxu0 0.0
    %3459 = vmatprep.subr.mxu0 0.0
    %3460 = vmatpush1.msra.mxu0 0.0
    %3461 = vmatprep.subr.mxu0 0.0
    %3462 = vmatpush1.msra.mxu0 0.0
    %3463 = vmatprep.subr.mxu0 0.0
    %3464 = vmatpush1.msra.mxu0 0.0
    %3465 = vmatprep.subr.mxu0 0.0
    %3466 = vmatpush1.msra.mxu0 0.0
    %3467 = vmatprep.subr.mxu0 0.0
    %3468 = vmatpush1.msra.mxu0 0.0
    %3469 = vmatprep.subr.mxu0 0.0
    %3470 = vmatpush1.msra.mxu0 0.0
    %3471 = vmatprep.subr.mxu0 0.0
    %3472 = vmatpush1.msra.mxu0 0.0
    %3473 = vmatprep.subr.mxu0 0.0
    %3474 = vmatpush1.msra.mxu0 0.0
    %3475 = vmatprep.subr.mxu0 0.0
    %3476 = vmatpush1.msra.mxu0 0.0
    %3477 = vmatprep.subr.mxu0 0.0
    %3478 = vmatpush1.msra.mxu0 0.0
    %3479 = vmatprep.subr.mxu0 0.0
    %3480 = vmatpush1.msra.mxu0 0.0
    %3481 = vmatprep.subr.mxu0 0.0
    %3482 = vmatpush1.msra.mxu0 0.0
    %3483 = vmatprep.subr.mxu0 0.0
    %3484 = vmatpush1.msra.mxu0 0.0
    %3485 = vmatprep.subr.mxu0 0.0
    %3486 = vmatpush1.msra.mxu0 0.0
    %3487 = vmatprep.mubr.f32.mxu0 0.0
    %3488 = vmatmul.mubr.f32.gmra.mrb[0].mxu0 %v3421
    %v3489 = vpop.f32.mrb[0].mxu0
    %v3490 = vadd.f32 %v3417, %v3489
    %v3491 = vpop.f32.mrb[0].mxu0
    %3492 = vdwg.mxu0
    %vm3493 = vcmask 517120
    %3494 = vst.msk [vmem:[#allocation20] sm:$0x3] %vm3493, %v3490
    %v3495 = vld [vmem:[%s15] sm:$0xff]
    %v3496 = vld [vmem:[%s15 + $0x8] sm:$0xff]
    %v3497 = vld [vmem:[%s15 + $0x10] sm:$0xff]
    %v3498 = vld [vmem:[%s15 + $0x18] sm:$0xff]
    %v3499 = vld [vmem:[%s15 + $0x20] sm:$0xff]
    %v3500 = vld [vmem:[%s15 + $0x28] sm:$0xff]
    %v3501 = vld [vmem:[%s15 + $0x30] sm:$0xff]
    %v3502 = vld [vmem:[%s15 + $0x38] sm:$0xff]
    %v3503 = vld [vmem:[%s16] sm:$0x1]
    %v3505 = vlaneseq
    %v3506 = vshrl.u32 %v3505, 7
    %v3507 = vsub.s32 0, %v3506
    %v3508 = vrot.slane %v3503, %v3507
    %3510 = vmatprep.subr.mxu0 0.0
    %3511 = vmatpush1.msra.mxu0 %v3495
    %3512 = vmatprep.subr.mxu0 0.0
    %3513 = vmatpush1.msra.mxu0 %v3496
    %3514 = vmatprep.subr.mxu0 0.0
    %3515 = vmatpush1.msra.mxu0 %v3497
    %3516 = vmatprep.subr.mxu0 0.0
    %3517 = vmatpush1.msra.mxu0 %v3498
    %3518 = vmatprep.subr.mxu0 0.0
    %3519 = vmatpush1.msra.mxu0 %v3499
    %3520 = vmatprep.subr.mxu0 0.0
    %3521 = vmatpush1.msra.mxu0 %v3500
    %3522 = vmatprep.subr.mxu0 0.0
    %3523 = vmatpush1.msra.mxu0 %v3501
    %3524 = vmatprep.subr.mxu0 0.0
    %3525 = vmatpush1.msra.mxu0 %v3502
    %3526 = vmatprep.subr.mxu0 0.0
    %3527 = vmatpush1.msra.mxu0 0.0
    %3528 = vmatprep.subr.mxu0 0.0
    %3529 = vmatpush1.msra.mxu0 0.0
    %3530 = vmatprep.subr.mxu0 0.0
    %3531 = vmatpush1.msra.mxu0 0.0
    %3532 = vmatprep.subr.mxu0 0.0
    %3533 = vmatpush1.msra.mxu0 0.0
    %3534 = vmatprep.subr.mxu0 0.0
    %3535 = vmatpush1.msra.mxu0 0.0
    %3536 = vmatprep.subr.mxu0 0.0
    %3537 = vmatpush1.msra.mxu0 0.0
    %3538 = vmatprep.subr.mxu0 0.0
    %3539 = vmatpush1.msra.mxu0 0.0
    %3540 = vmatprep.subr.mxu0 0.0
    %3541 = vmatpush1.msra.mxu0 0.0
    %3542 = vmatprep.subr.mxu0 0.0
    %3543 = vmatpush1.msra.mxu0 0.0
    %3544 = vmatprep.subr.mxu0 0.0
    %3545 = vmatpush1.msra.mxu0 0.0
    %3546 = vmatprep.subr.mxu0 0.0
    %3547 = vmatpush1.msra.mxu0 0.0
    %3548 = vmatprep.subr.mxu0 0.0
    %3549 = vmatpush1.msra.mxu0 0.0
    %3550 = vmatprep.subr.mxu0 0.0
    %3551 = vmatpush1.msra.mxu0 0.0
    %3552 = vmatprep.subr.mxu0 0.0
    %3553 = vmatpush1.msra.mxu0 0.0
    %3554 = vmatprep.subr.mxu0 0.0
    %3555 = vmatpush1.msra.mxu0 0.0
    %3556 = vmatprep.subr.mxu0 0.0
    %3557 = vmatpush1.msra.mxu0 0.0
    %3558 = vmatprep.subr.mxu0 0.0
    %3559 = vmatpush1.msra.mxu0 0.0
    %3560 = vmatprep.subr.mxu0 0.0
    %3561 = vmatpush1.msra.mxu0 0.0
    %3562 = vmatprep.subr.mxu0 0.0
    %3563 = vmatpush1.msra.mxu0 0.0
    %3564 = vmatprep.subr.mxu0 0.0
    %3565 = vmatpush1.msra.mxu0 0.0
    %3566 = vmatprep.subr.mxu0 0.0
    %3567 = vmatpush1.msra.mxu0 0.0
    %3568 = vmatprep.subr.mxu0 0.0
    %3569 = vmatpush1.msra.mxu0 0.0
    %3570 = vmatprep.subr.mxu0 0.0
    %3571 = vmatpush1.msra.mxu0 0.0
    %3572 = vmatprep.subr.mxu0 0.0
    %3573 = vmatpush1.msra.mxu0 0.0
    %3574 = vmatprep.mubr.f32.mxu0 0.0
    %3575 = vmatmul.mubr.f32.gmra.mrb[0].mxu0 %v3421
    %v3576 = vpop.f32.mrb[0].mxu0
    %v3577 = vadd.f32 %v3508, %v3576
    %v3578 = vpop.f32.mrb[0].mxu0
    %3579 = vdwg.mxu0
    %v3580 = vmax.f32 %v3577, 0.0
    %v3581 = vld [vmem:[%s17] sm:$0xff]
    %v3582 = vld [vmem:[%s17 + $0x8] sm:$0xff]
    %v3583 = vld [vmem:[%s17 + $0x10] sm:$0xff]
    %v3584 = vld [vmem:[%s17 + $0x18] sm:$0xff]
    %v3585 = vld [vmem:[#allocation4] sm:$0x1]
    %v3587 = vlaneseq
    %v3588 = vshrl.u32 %v3587, 7
    %v3589 = vsub.s32 0, %v3588
    %v3590 = vrot.slane %v3585, %v3589
    %v3593 = vsel %vm405, %v3580, 0
    %3595 = vmatprep.subr.mxu0 0.0
    %3596 = vmatpush1.msra.mxu0 %v3581
    %3597 = vmatprep.subr.mxu0 0.0
    %3598 = vmatpush1.msra.mxu0 %v3582
    %3599 = vmatprep.subr.mxu0 0.0
    %3600 = vmatpush1.msra.mxu0 %v3583
    %3601 = vmatprep.subr.mxu0 0.0
    %3602 = vmatpush1.msra.mxu0 %v3584
    %3603 = vmatprep.subr.mxu0 0.0
    %3604 = vmatpush1.msra.mxu0 0.0
    %3605 = vmatprep.subr.mxu0 0.0
    %3606 = vmatpush1.msra.mxu0 0.0
    %3607 = vmatprep.subr.mxu0 0.0
    %3608 = vmatpush1.msra.mxu0 0.0
    %3609 = vmatprep.subr.mxu0 0.0
    %3610 = vmatpush1.msra.mxu0 0.0
    %3611 = vmatprep.subr.mxu0 0.0
    %3612 = vmatpush1.msra.mxu0 0.0
    %3613 = vmatprep.subr.mxu0 0.0
    %3614 = vmatpush1.msra.mxu0 0.0
    %3615 = vmatprep.subr.mxu0 0.0
    %3616 = vmatpush1.msra.mxu0 0.0
    %3617 = vmatprep.subr.mxu0 0.0
    %3618 = vmatpush1.msra.mxu0 0.0
    %3619 = vmatprep.subr.mxu0 0.0
    %3620 = vmatpush1.msra.mxu0 0.0
    %3621 = vmatprep.subr.mxu0 0.0
    %3622 = vmatpush1.msra.mxu0 0.0
    %3623 = vmatprep.subr.mxu0 0.0
    %3624 = vmatpush1.msra.mxu0 0.0
    %3625 = vmatprep.subr.mxu0 0.0
    %3626 = vmatpush1.msra.mxu0 0.0
    %3627 = vmatprep.subr.mxu0 0.0
    %3628 = vmatpush1.msra.mxu0 0.0
    %3629 = vmatprep.subr.mxu0 0.0
    %3630 = vmatpush1.msra.mxu0 0.0
    %3631 = vmatprep.subr.mxu0 0.0
    %3632 = vmatpush1.msra.mxu0 0.0
    %3633 = vmatprep.subr.mxu0 0.0
    %3634 = vmatpush1.msra.mxu0 0.0
    %3635 = vmatprep.subr.mxu0 0.0
    %3636 = vmatpush1.msra.mxu0 0.0
    %3637 = vmatprep.subr.mxu0 0.0
    %3638 = vmatpush1.msra.mxu0 0.0
    %3639 = vmatprep.subr.mxu0 0.0
    %3640 = vmatpush1.msra.mxu0 0.0
    %3641 = vmatprep.subr.mxu0 0.0
    %3642 = vmatpush1.msra.mxu0 0.0
    %3643 = vmatprep.subr.mxu0 0.0
    %3644 = vmatpush1.msra.mxu0 0.0
    %3645 = vmatprep.subr.mxu0 0.0
    %3646 = vmatpush1.msra.mxu0 0.0
    %3647 = vmatprep.subr.mxu0 0.0
    %3648 = vmatpush1.msra.mxu0 0.0
    %3649 = vmatprep.subr.mxu0 0.0
    %3650 = vmatpush1.msra.mxu0 0.0
    %3651 = vmatprep.subr.mxu0 0.0
    %3652 = vmatpush1.msra.mxu0 0.0
    %3653 = vmatprep.subr.mxu0 0.0
    %3654 = vmatpush1.msra.mxu0 0.0
    %3655 = vmatprep.subr.mxu0 0.0
    %3656 = vmatpush1.msra.mxu0 0.0
    %3657 = vmatprep.subr.mxu0 0.0
    %3658 = vmatpush1.msra.mxu0 0.0
    %3659 = vmatprep.mubr.f32.mxu0 0.0
    %3660 = vmatmul.mubr.f32.gmra.mrb[0].mxu0 %v3593
    %v3661 = vpop.f32.mrb[0].mxu0
    %v3662 = vadd.f32 %v3590, %v3661
    %v3663 = vpop.f32.mrb[0].mxu0
    %3664 = vdwg.mxu0
    %vm3665 = vcmask 1024
    %3666 = vst.msk [vmem:[%s21] sm:$0x3] %vm3665, %v3662
    // Predicated region
    $region110: #{forward.1} parent=1 // pred_check
      _
    $region111: #{forward.1} parent=1 // pred_check_branch
      %3668 = sbr.rel (0) target = $region113
    $region112: #{forward.1} parent=1 // pred_region
      %s3670 = ssub.s32 32, 32
      %3671 = vsyncadd [#allocation7], %s3670
      %s3673 = sshll.u32 [#allocation19], 4
      %s3674 = int_to_ptr.vmem [resolvable:$true] %s3673
      %3676 = dma.vmem_to_hbm [thread:$0]  %s3674, 32, %s19, [#allocation7]
    $region113: #{forward.1} parent=1 // pred_fallthru
      _
    // Predicated region
    $region114: #{forward.1} parent=1 // pred_check
      _
    $region115: #{forward.1} parent=1 // pred_check_branch
      %3678 = sbr.rel (0) target = $region117
    $region116: #{forward.1} parent=1 // pred_region
      %s3680 = ssub.s32 32, 32
      %3681 = vsyncadd [#allocation21], %s3680
      %s3683 = sshll.u32 [#allocation20], 4
      %s3684 = int_to_ptr.vmem [resolvable:$true] %s3683
      %3686 = dma.vmem_to_hbm [thread:$0]  %s3684, 32, %s20, [#allocation21]
    $region117: #{forward.1} parent=1 // pred_fallthru
      _
    // Predicated region
    $region118: #{forward.1} parent=1 // pred_check
      _
    $region119: #{forward.1} parent=1 // pred_check_branch
      %3688 = sbr.rel (0) target = $region121
    $region120: #{forward.1} parent=1 // pred_region
      _
    $region121: #{forward.1} parent=1 // pred_fallthru
      _
    // Predicated region
    $region122: #{forward.1} parent=1 // pred_check
      _
    $region123: #{forward.1} parent=1 // pred_check_branch
      %3690 = sbr.rel (0) target = $region125
    $region124: #{forward.1} parent=1 // pred_region
      %3691 = dma.done [#allocation7], 32
    $region125: #{forward.1} parent=1 // pred_fallthru
      _
    // Predicated region
    $region126: #{forward.1} parent=1 // pred_check
      _
    $region127: #{forward.1} parent=1 // pred_check_branch
      %3693 = sbr.rel (0) target = $region129
    $region128: #{forward.1} parent=1 // pred_region
      %3694 = dma.done [#allocation21], 32
    $region129: #{forward.1} parent=1 // pred_fallthru
      _
    // Predicated region
    $region130: #{forward.1} parent=1 // pred_check
      _
    $region131: #{forward.1} parent=1 // pred_check_branch
      %3696 = sbr.rel (0) target = $region133
    $region132: #{forward.1} parent=1 // pred_region
      _
    $region133: #{forward.1} parent=1 // pred_fallthru
      _
    %3697 = vsyncpa [#allocation6], 1
    %3698 = vsyncpa [#allocation9], 1
    %3699 = vsyncpa [#allocation12], 1
    %3700 = vsyncpa [#allocation15], 1
    %3701 = vsyncpa [#allocation18], 1
    %3702 = vsyncpa [#allocation7], 1
    %3703 = vsyncpa [#allocation21], 1

</llo_original>
